<compile_context>
chip_gen: v6e
topology: v6e:2x2x1
jax: 0.10.0
libtpu: 0.0.40
codegen_flags: <defaults>
</compile_context>

<pallas_src>
import math

import jax
import jax.numpy as jnp
from jax import lax
from jax.experimental import pallas as pl
from jax.experimental.pallas import tpu as pltpu


# Row indices of the packed bias matrix (wrapper packing must match).
(R_BLSTM, R_BQKV, R_BO, R_G1, R_BE1,
 R_BFF1, R_BFF2, R_G2, R_BE2, R_BF1) = range(10)


def _slab_layout(D, H, FF):
    """Column layout of the single packed bf16 weight slab."""
    R = max(D, H, FF)                       # common (padded) row count
    widths = (('wih', 4 * H), ('whh', 4 * H), ('wqkv', 3 * H),
              ('wo', H), ('w1', FF), ('w2', H), ('wf1', 8))
    cols, c = {}, 0
    for name, w in widths:
        cols[name] = c
        c += w
    return R, cols, c


def _make_kernel(T, Bc, H, NH, FF, R, cols):
    HD = H // NH
    scale = 1.0 / math.sqrt(HD)
    f32 = jnp.float32
    bf16 = jnp.bfloat16

    def kernel(x_ref, wslab_ref, bias_ref, h1_ref, xp_ref, hs_ref):
        # ----- single packed weight slab (bf16), static in-kernel slicing ---
        wih = wslab_ref[:, cols['wih']:cols['wih'] + 4 * H]        # (R, 4H)
        whh = wslab_ref[0:H, cols['whh']:cols['whh'] + 4 * H]      # (H, 4H)
        wqkv = wslab_ref[0:H, cols['wqkv']:cols['wqkv'] + 3 * H]   # (H, 3H)
        wo = wslab_ref[0:H, cols['wo']:cols['wo'] + H]             # (H, H)
        w1 = wslab_ref[0:H, cols['w1']:cols['w1'] + FF]            # (H, FF)
        w2 = wslab_ref[0:FF, cols['w2']:cols['w2'] + H]            # (FF, H)
        wf1 = wslab_ref[0:H, cols['wf1']:cols['wf1'] + 8]          # (H, 8)
        bias = bias_ref[...]                                       # (10, WMAX)

        # ---------------- LSTM --------------------------------------------
        # Hoisted input projection for the whole chunk (one bf16 matmul).
        x = x_ref[0]                                   # (T, Bc, R) time-major
        x2 = x.reshape(T * Bc, R).astype(bf16)
        xp = (jnp.dot(x2, wih, preferred_element_type=f32)
              + bias[R_BLSTM:R_BLSTM + 1, :4 * H])                 # (T*Bc, 4H)
        xp_ref[...] = xp.reshape(T, Bc, 4 * H)

        h0 = jnp.zeros((Bc, H), f32)
        c0 = jnp.zeros((Bc, H), f32)

        def step(t, carry):
            h, c = carry
            # ONE fused (Bc,H)@(H,4H) push per step; stationary bf16 RHS.
            gates = xp_ref[t] + jnp.dot(h.astype(bf16), whh,
                                        preferred_element_type=f32)  # (Bc,4H)
            sg = jax.nn.sigmoid(gates)
            th = jnp.tanh(gates)
            i_g = sg[:, 0 * H:1 * H]      # PyTorch gate order: i, f, g, o
            f_g = sg[:, 1 * H:2 * H]
            g_g = th[:, 2 * H:3 * H]
            o_g = sg[:, 3 * H:4 * H]
            c_new = f_g * c + i_g * g_g
            h_new = o_g * jnp.tanh(c_new)
            hs_ref[t] = h_new             # VMEM scratch (bounds vreg pressure)
            return (h_new, c_new)

        lax.fori_loop(0, T, step, (h0, c0), unroll=True)

        # Go batch-major for the rest (residual/LN/FFN/pooling are row-wise).
        lstmB = jnp.transpose(hs_ref[...], (1, 0, 2))              # (Bc, T, H)
        lstm2 = lstmB.reshape(Bc * T, H)                           # b-major

        # ---------------- Multi-head self-attention -----------------------
        # Fused QKV projection: one bf16 MXU push for the whole chunk.
        qkv = (jnp.dot(lstm2.astype(bf16), wqkv, preferred_element_type=f32)
               + bias[R_BQKV:R_BQKV + 1, :3 * H])                  # (Bc*T, 3H)
        qkv3 = qkv.reshape(Bc, T, 3 * H)

        # All heads' scores (Bc-batched einsums) -> one softmax chain.
        scores = jnp.concatenate(
            [jnp.einsum('btd,bsd->bts',
                        qkv3[:, :, hh * HD:(hh + 1) * HD],
                        qkv3[:, :, H + hh * HD:H + (hh + 1) * HD],
                        preferred_element_type=f32)
             for hh in range(NH)], axis=1) * scale                 # (Bc, NH*T, T)
        scores = scores - jnp.max(scores, axis=-1, keepdims=True)
        p = jnp.exp(scores)
        p = p * pl.reciprocal(jnp.sum(p, axis=-1, keepdims=True), approx=True)

        # Contexts (Bc-batched), heads laid back into H lanes, then a single
        # (Bc*T,H)@(H,H) output projection for the whole chunk.
        ctx = jnp.concatenate(
            [jnp.einsum('bts,bsd->btd',
                        p[:, hh * T:(hh + 1) * T, :],
                        qkv3[:, :, 2 * H + hh * HD:2 * H + (hh + 1) * HD],
                        preferred_element_type=f32)
             for hh in range(NH)], axis=-1).reshape(Bc * T, H)
        attn2 = (jnp.dot(ctx.astype(bf16), wo, preferred_element_type=f32)
                 + bias[R_BO:R_BO + 1, :H])                        # (Bc*T, H)

        # ---------------- residual + LayerNorm / FFN / LayerNorm ----------
        def layernorm(y, g, be):
            mu = jnp.mean(y, axis=-1, keepdims=True)
            var = jnp.mean((y - mu) ** 2, axis=-1, keepdims=True)
            return (y - mu) * lax.rsqrt(var + 1e-5) * g + be

        y1 = layernorm(lstm2 + attn2,
                       bias[R_G1:R_G1 + 1, :H], bias[R_BE1:R_BE1 + 1, :H])
        ff = jnp.maximum(
            jnp.dot(y1.astype(bf16), w1, preferred_element_type=f32)
            + bias[R_BFF1:R_BFF1 + 1, :FF], 0.0)
        ff = (jnp.dot(ff.astype(bf16), w2, preferred_element_type=f32)
              + bias[R_BFF2:R_BFF2 + 1, :H])
        y2 = layernorm(y1 + ff,
                       bias[R_G2:R_G2 + 1, :H], bias[R_BE2:R_BE2 + 1, :H])

        # ---------------- global average pool over time + fc1/sigmoid ------
        pooled = jnp.mean(y2.reshape(Bc, T, H), axis=1)            # (Bc, H)
        h1 = jax.nn.sigmoid(
            jnp.dot(pooled.astype(bf16), wf1, preferred_element_type=f32)
            + bias[R_BF1:R_BF1 + 1, :8])                           # (Bc, 8)
        # dropout(p=0.1) is identity at inference; the final Linear(8,1) and
        # nn.Identity() activation run in the XLA wrapper.
        h1_ref[...] = h1.reshape(1, Bc, 8)

    return kernel


def _default_max_chunk():
    # v5e MXU is 128-wide -> target T*Bc ~ 128; v6e/v7x are 256 -> ~256 rows.
    try:
        kind = jax.devices()[0].device_kind.lower()
        if "v5 lite" in kind or "v5e" in kind:
            return 16
    except Exception:
        pass
    return 32


def lstm_transformer_forward(x_comb, params, num_heads=4, max_chunk=None):
    """Full module forward. x_comb: (B, T, D_eff) post-embedding input."""
    B, T, D = x_comb.shape
    H = params['whh'].shape[0]
    FF = params['w1'].shape[1]
    NH = num_heads
    assert H % NH == 0

    if max_chunk is None:
        max_chunk = _default_max_chunk()

    # Only split the batch when it exceeds the target chunk size; a single
    # grid step for small B (no forced 2-way split on single-TC chips).
    num_chunks = max(1, -(-B // max_chunk))
    Bc = -(-B // num_chunks)
    B_pad = num_chunks * Bc

    # -------- host-side packing: one bf16 weight slab + one f32 bias pack ---
    R, cols, C = _slab_layout(D, H, FF)
    wqkv = jnp.concatenate([params['wq'], params['wk'], params['wv']], axis=1)
    slab = jnp.zeros((R, C), jnp.float32)
    for name, w, rows in (('wih', params['wih'], D),
                          ('whh', params['whh'], H),
                          ('wqkv', wqkv, H),
                          ('wo', params['wo'], H),
                          ('w1', params['w1'], H),
                          ('w2', params['w2'], FF),
                          ('wf1', params['wf1'], H)):
        slab = slab.at[:rows, cols[name]:cols[name] + w.shape[1]].set(w)
    wslab = slab.astype(jnp.bfloat16)                  # bf16 MXU operands

    bqkv = jnp.concatenate([params['bq'], params['bk'], params['bv']], axis=1)
    vecs = [params['blstm'][0], bqkv[0], params['bo'][0], params['g1'][0],
            params['be1'][0], params['bff1'][0], params['bff2'][0],
            params['g2'][0], params['be2'][0], params['bf1'][0]]
    wmax = max(v.shape[0] for v in vecs)
    bias_pack = jnp.stack(
        [jnp.pad(v, (0, wmax - v.shape[0])) for v in vecs], axis=0
    ).astype(jnp.float32)                              # (10, WMAX)

    # Pad features to the slab row count and the batch to a whole chunk grid,
    # then go time-major inside each chunk (contiguous per-step rows).
    if R != D:
        x_comb = jnp.pad(x_comb, ((0, 0), (0, 0), (0, R - D)))
    if B_pad != B:
        x_comb = jnp.pad(x_comb, ((0, B_pad - B), (0, 0), (0, 0)))
    x_chunks = jnp.transpose(
        x_comb.reshape(num_chunks, Bc, T, R), (0, 2, 1, 3))       # (nc,T,Bc,R)

    kernel = _make_kernel(T, Bc, H, NH, FF, R, cols)

    in_specs = [
        pl.BlockSpec((1, T, Bc, R), lambda i: (i, 0, 0, 0)),
        pl.BlockSpec(wslab.shape, lambda i: (0, 0)),
        pl.BlockSpec(bias_pack.shape, lambda i: (0, 0)),
    ]

    h1 = pl.pallas_call(
        kernel,
        out_shape=jax.ShapeDtypeStruct((num_chunks, Bc, 8), jnp.float32),
        grid_spec=pltpu.PrefetchScalarGridSpec(
            num_scalar_prefetch=0,
            grid=(num_chunks,),
            in_specs=in_specs,
            out_specs=pl.BlockSpec((1, Bc, 8), lambda i: (i, 0, 0)),
            scratch_shapes=[pltpu.VMEM((T, Bc, 4 * H), jnp.float32),   # xp slab
                            pltpu.VMEM((T, Bc, H), jnp.float32)],      # h states
        ),
        compiler_params=pltpu.CompilerParams(dimension_semantics=("parallel",)),
    )(x_chunks, wslab, bias_pack)

    h1 = h1.reshape(B_pad, 8)[:B]                      # drop batch padding
    # Final Linear(8, 1) head (dropout / activation are identity at inference).
    return h1 @ params['wf2'] + params['bf2'][0]


def init_params(key, D, H, NH, FF):
    ks = jax.random.split(key, 24)

    def nrm(k, shape, s=0.2):
        return (s * jax.random.normal(k, shape)).astype(jnp.float32)

    p = {}
    p['wih'] = nrm(ks[0], (D, 4 * H))
    p['whh'] = nrm(ks[1], (H, 4 * H))
    p['blstm'] = nrm(ks[2], (1, 4 * H), 0.05)          # b_ih + b_hh combined
    p['wq'] = nrm(ks[3], (H, H))
    p['wk'] = nrm(ks[4], (H, H))
    p['wv'] = nrm(ks[5], (H, H))
    p['bq'] = nrm(ks[6], (1, H), 0.05)
    p['bk'] = nrm(ks[7], (1, H), 0.05)
    p['bv'] = nrm(ks[8], (1, H), 0.05)
    p['wo'] = nrm(ks[9], (H, H))
    p['bo'] = nrm(ks[10], (1, H), 0.05)
    p['g1'] = (jnp.ones((1, H)) + nrm(ks[11], (1, H), 0.05)).astype(jnp.float32)
    p['be1'] = nrm(ks[12], (1, H), 0.05)
    p['w1'] = nrm(ks[13], (H, FF))
    p['bff1'] = nrm(ks[14], (1, FF), 0.05)
    p['w2'] = nrm(ks[15], (FF, H))
    p['bff2'] = nrm(ks[16], (1, H), 0.05)
    p['g2'] = (jnp.ones((1, H)) + nrm(ks[17], (1, H), 0.05)).astype(jnp.float32)
    p['be2'] = nrm(ks[18], (1, H), 0.05)
    p['wf1'] = nrm(ks[19], (H, 8))
    p['bf1'] = nrm(ks[20], (1, 8), 0.05)
    p['wf2'] = nrm(ks[21], (8, 1))
    p['bf2'] = nrm(ks[22], (1, 1), 0.05)
    return p


def reference_forward(x_comb, p, H, NH):
    """Pure-JAX reference mirroring the PyTorch forward (eval mode)."""
    HD = H // NH

    def one(xs):                                       # xs: (T, D)
        def step(carry, xt):
            h, c = carry
            gates = xt @ p['wih'] + h @ p['whh'] + p['blstm'][0]
            i = jax.nn.sigmoid(gates[:H])
            f = jax.nn.sigmoid(gates[H:2 * H])
            g = jnp.tanh(gates[2 * H:3 * H])
            o = jax.nn.sigmoid(gates[3 * H:])
            c = f * c + i * g
            h = o * jnp.tanh(c)
            return (h, c), h

        _, lstm_out = lax.scan(step, (jnp.zeros(H), jnp.zeros(H)), xs)
        q = lstm_out @ p['wq'] + p['bq'][0]
        k = lstm_out @ p['wk'] + p['bk'][0]
        v = lstm_out @ p['wv'] + p['bv'][0]
        ctxs = []
        for hh in range(NH):
            sl = slice(hh * HD, (hh + 1) * HD)
            sc = (q[:, sl] @ k[:, sl].T) / math.sqrt(HD)
            pr = jax.nn.softmax(sc, axis=-1)
            ctxs.append(pr @ v[:, sl])
        attn = jnp.concatenate(ctxs, -1) @ p['wo'] + p['bo'][0]

        def ln(y, g, b):
            mu = y.mean(-1, keepdims=True)
            var = ((y - mu) ** 2).mean(-1, keepdims=True)
            return (y - mu) * lax.rsqrt(var + 1e-5) * g + b

        y1 = ln(lstm_out + attn, p['g1'][0], p['be1'][0])
        ff = jnp.maximum(y1 @ p['w1'] + p['bff1'][0], 0.0) @ p['w2'] + p['bff2'][0]
        y2 = ln(y1 + ff, p['g2'][0], p['be2'][0])
        pooled = y2.mean(0)
        h1 = jax.nn.sigmoid(pooled @ p['wf1'] + p['bf1'][0])
        return h1 @ p['wf2'] + p['bf2'][0]

    return jax.vmap(one)(x_comb)


if __name__ == "__main__":
    # Module config (small shapes consistent with the PyTorch forward)
    B, T = 2, 8
    total_input_dim = 6
    cat_index = {0: 5, 3: 7}
    H, NH, FF = 16, 4, 8

    cat_indices = sorted(cat_index.keys())
    num_cats = [cat_index[i] for i in cat_indices]
    emb_dims = [math.ceil(math.sqrt(n)) for n in num_cats]
    numeric_indices = [i for i in range(total_input_dim) if i not in cat_indices]
    D_eff = len(numeric_indices) + sum(emb_dims)

    key = jax.random.PRNGKey(0)
    k_p, k_e, k_x, k_c = jax.random.split(key, 4)
    params = init_params(k_p, D_eff, H, NH, FF)

    emb_keys = jax.random.split(k_e, len(num_cats))
    emb_tables = [(0.2 * jax.random.normal(ek, (n, d))).astype(jnp.float32)
                  for ek, n, d in zip(emb_keys, num_cats, emb_dims)]

    # Raw module input x: (B, T, total_input_dim); categorical columns hold codes.
    x = jax.random.normal(k_x, (B, T, total_input_dim)).astype(jnp.float32)
    cat_keys = jax.random.split(k_c, len(cat_indices))
    for ck, idx, n in zip(cat_keys, cat_indices, num_cats):
        codes = jax.random.randint(ck, (B, T), 0, n).astype(jnp.float32)
        x = x.at[:, :, idx].set(codes)

    # Glue (plain JAX): embedding gather + concat, mirroring the PyTorch forward.
    x_num = x[:, :, jnp.array(numeric_indices)]
    embs = [tbl[x[:, :, idx].astype(jnp.int32)]
            for tbl, idx in zip(emb_tables, cat_indices)]
    x_comb = jnp.concatenate([x_num] + embs, axis=-1).astype(jnp.float32)  # (B,T,D_eff)

    out = lstm_transformer_forward(x_comb, params, num_heads=NH)
    out = jax.block_until_ready(out)

    with jax.default_matmul_precision("highest"):
        ref = reference_forward(x_comb, params, H, NH)

    assert out.shape == (B, 1)
    # Tolerance reflects bf16 MXU operands (per perf review) + approx softmax
    # reciprocal, compared against a highest-precision f32 reference.
    assert jnp.allclose(out, ref, atol=1e-2, rtol=1e-2), (out, ref)
    print("KERNEL_OK")
</pallas_src>

<mosaic_0001>
module attributes {stable_mosaic.version = 11 : i64} {
  func.func @kernel(%arg0: i32, %arg1: memref<1x8x2x16xf32, #tpu.memory_space<vmem>>, %arg2: memref<16x224xbf16, #tpu.memory_space<vmem>>, %arg3: memref<10x64xf32, #tpu.memory_space<vmem>>, %arg4: memref<1x2x8xf32, #tpu.memory_space<vmem>>, %arg5: memref<8x2x64xf32, #tpu.memory_space<vmem>>, %arg6: memref<8x2x16xf32, #tpu.memory_space<vmem>>) attributes {dimension_semantics = [#tpu.dimension_semantics<parallel>], iteration_bounds = array<i64: 1>, scalar_prefetch = 0 : i64, scratch_operands = 2 : i64, tpu.core_type = #tpu.core_type<tc>, window_params = [{transform_indices = @transform_0, window_bounds = array<i64: 1, 8, 2, 16>}, {pipeline_mode = #tpu.pipeline_mode<synchronous>, transform_indices = @transform_1, window_bounds = array<i64: 16, 224>}, {pipeline_mode = #tpu.pipeline_mode<synchronous>, transform_indices = @transform_2, window_bounds = array<i64: 10, 64>}, {transform_indices = @transform_3, window_bounds = array<i64: 1, 2, 8>}]} {
    %c0 = arith.constant 0 : index
    %c0_0 = arith.constant 0 : index
    %0 = vector.load %arg2[%c0, %c0_0] : memref<16x224xbf16, #tpu.memory_space<vmem>>, vector<16x64xbf16>
    %c0_1 = arith.constant 0 : index
    %c64 = arith.constant 64 : index
    %1 = vector.load %arg2[%c0_1, %c64] : memref<16x224xbf16, #tpu.memory_space<vmem>>, vector<16x64xbf16>
    %c0_2 = arith.constant 0 : index
    %c128 = arith.constant 128 : index
    %2 = vector.load %arg2[%c0_2, %c128] : memref<16x224xbf16, #tpu.memory_space<vmem>>, vector<16x48xbf16>
    %c0_3 = arith.constant 0 : index
    %c176 = arith.constant 176 : index
    %3 = vector.load %arg2[%c0_3, %c176] : memref<16x224xbf16, #tpu.memory_space<vmem>>, vector<16x16xbf16>
    %c0_4 = arith.constant 0 : index
    %c192 = arith.constant 192 : index
    %4 = vector.load %arg2[%c0_4, %c192] : memref<16x224xbf16, #tpu.memory_space<vmem>>, vector<16x8xbf16>
    %c0_5 = arith.constant 0 : index
    %c200 = arith.constant 200 : index
    %5 = vector.load %arg2[%c0_5, %c200] : memref<16x224xbf16, #tpu.memory_space<vmem>>, vector<8x16xbf16>
    %c0_6 = arith.constant 0 : index
    %c216 = arith.constant 216 : index
    %6 = vector.load %arg2[%c0_6, %c216] : memref<16x224xbf16, #tpu.memory_space<vmem>>, vector<16x8xbf16>
    %c0_7 = arith.constant 0 : index
    %c0_8 = arith.constant 0 : index
    %7 = vector.load %arg3[%c0_7, %c0_8] : memref<10x64xf32, #tpu.memory_space<vmem>>, vector<10x64xf32>
    %c0_9 = arith.constant 0 : index
    %c0_10 = arith.constant 0 : index
    %c0_11 = arith.constant 0 : index
    %c0_12 = arith.constant 0 : index
    %8 = vector.load %arg1[%c0_9, %c0_10, %c0_11, %c0_12] : memref<1x8x2x16xf32, #tpu.memory_space<vmem>>, vector<1x8x2x16xf32>
    %9 = vector.shape_cast %8 : vector<1x8x2x16xf32> to vector<8x2x16xf32>
    %10 = vector.shape_cast %9 : vector<8x2x16xf32> to vector<16x16xf32>
    %11 = arith.truncf %10 : vector<16x16xf32> to vector<16x16xbf16>
    %cst = arith.constant dense<0.000000e+00> : vector<16x64xf32>
    %12 = tpu.matmul %11, %0, %cst {dimension_numbers = #tpu.dot_dimension_numbers<[1], [0], [0], [1], [0, 0, 1, 1], [], []>} : vector<16x16xbf16>, vector<16x64xbf16>, vector<16x64xf32> -> vector<16x64xf32>
    %13 = vector.extract_strided_slice %7 {offsets = [0, 0], sizes = [1, 64], strides = [1, 1]} : vector<10x64xf32> to vector<1x64xf32>
    %14 = vector.broadcast %13 : vector<1x64xf32> to vector<16x64xf32>
    %15 = arith.addf %12, %14 : vector<16x64xf32>
    %16 = vector.shape_cast %15 : vector<16x64xf32> to vector<8x2x64xf32>
    %c0_13 = arith.constant 0 : index
    %c0_14 = arith.constant 0 : index
    %c0_15 = arith.constant 0 : index
    %17 = vector.load %arg5[%c0_13, %c0_14, %c0_15] : memref<8x2x64xf32, #tpu.memory_space<vmem>>, vector<8x2x64xf32>
    tpu.vector_store %arg5[%c0_13, %c0_14, %c0_15], %16 {strides = array<i32>} : memref<8x2x64xf32, #tpu.memory_space<vmem>>, vector<8x2x64xf32>,
    %cst_16 = arith.constant 0.000000e+00 : f32
    %18 = vector.broadcast %cst_16 : f32 to vector<2x16xf32>
    %cst_17 = arith.constant 0.000000e+00 : f32
    %19 = vector.broadcast %cst_17 : f32 to vector<2x16xf32>
    %c0_i32 = arith.constant 0 : i32
    %20 = arith.index_cast %c0_i32 : i32 to index
    %c0_18 = arith.constant 0 : index
    %c0_19 = arith.constant 0 : index
    %21 = vector.load %arg5[%20, %c0_18, %c0_19] : memref<8x2x64xf32, #tpu.memory_space<vmem>>, vector<1x2x64xf32>
    %22 = vector.shape_cast %21 : vector<1x2x64xf32> to vector<2x64xf32>
    %23 = arith.truncf %18 : vector<2x16xf32> to vector<2x16xbf16>
    %cst_20 = arith.constant dense<0.000000e+00> : vector<2x64xf32>
    %24 = tpu.matmul %23, %1, %cst_20 {dimension_numbers = #tpu.dot_dimension_numbers<[1], [0], [0], [1], [0, 0, 1, 1], [], []>} : vector<2x16xbf16>, vector<16x64xbf16>, vector<2x64xf32> -> vector<2x64xf32>
    %25 = arith.addf %22, %24 : vector<2x64xf32>
    %26 = arith.negf %25 : vector<2x64xf32>
    %27 = math.exp %26 : vector<2x64xf32>
    %cst_21 = arith.constant 1.000000e+00 : f32
    %28 = vector.broadcast %cst_21 : f32 to vector<2x64xf32>
    %29 = arith.addf %28, %27 : vector<2x64xf32>
    %30 = arith.divf %28, %29 : vector<2x64xf32>
    %31 = math.tanh %25 : vector<2x64xf32>
    %32 = vector.extract_strided_slice %30 {offsets = [0, 0], sizes = [2, 16], strides = [1, 1]} : vector<2x64xf32> to vector<2x16xf32>
    %33 = vector.extract_strided_slice %30 {offsets = [0, 16], sizes = [2, 16], strides = [1, 1]} : vector<2x64xf32> to vector<2x16xf32>
    %34 = vector.extract_strided_slice %31 {offsets = [0, 32], sizes = [2, 16], strides = [1, 1]} : vector<2x64xf32> to vector<2x16xf32>
    %35 = vector.extract_strided_slice %30 {offsets = [0, 48], sizes = [2, 16], strides = [1, 1]} : vector<2x64xf32> to vector<2x16xf32>
    %36 = arith.mulf %33, %19 : vector<2x16xf32>
    %37 = arith.mulf %32, %34 : vector<2x16xf32>
    %38 = arith.addf %36, %37 : vector<2x16xf32>
    %39 = math.tanh %38 : vector<2x16xf32>
    %40 = arith.mulf %35, %39 : vector<2x16xf32>
    %41 = arith.index_cast %c0_i32 : i32 to index
    %c0_22 = arith.constant 0 : index
    %c0_23 = arith.constant 0 : index
    %42 = vector.load %arg6[%41, %c0_22, %c0_23] : memref<8x2x16xf32, #tpu.memory_space<vmem>>, vector<1x2x16xf32>
    %43 = vector.shape_cast %42 : vector<1x2x16xf32> to vector<2x16xf32>
    %44 = vector.shape_cast %40 : vector<2x16xf32> to vector<1x2x16xf32>
    tpu.vector_store %arg6[%41, %c0_22, %c0_23], %44 {strides = array<i32>} : memref<8x2x16xf32, #tpu.memory_space<vmem>>, vector<1x2x16xf32>,
    %c1_i32 = arith.constant 1 : i32
    %45 = arith.index_cast %c1_i32 : i32 to index
    %c0_24 = arith.constant 0 : index
    %c0_25 = arith.constant 0 : index
    %46 = vector.load %arg5[%45, %c0_24, %c0_25] : memref<8x2x64xf32, #tpu.memory_space<vmem>>, vector<1x2x64xf32>
    %47 = vector.shape_cast %46 : vector<1x2x64xf32> to vector<2x64xf32>
    %48 = arith.truncf %40 : vector<2x16xf32> to vector<2x16xbf16>
    %cst_26 = arith.constant dense<0.000000e+00> : vector<2x64xf32>
    %49 = tpu.matmul %48, %1, %cst_26 {dimension_numbers = #tpu.dot_dimension_numbers<[1], [0], [0], [1], [0, 0, 1, 1], [], []>} : vector<2x16xbf16>, vector<16x64xbf16>, vector<2x64xf32> -> vector<2x64xf32>
    %50 = arith.addf %47, %49 : vector<2x64xf32>
    %51 = arith.negf %50 : vector<2x64xf32>
    %52 = math.exp %51 : vector<2x64xf32>
    %cst_27 = arith.constant 1.000000e+00 : f32
    %53 = vector.broadcast %cst_27 : f32 to vector<2x64xf32>
    %54 = arith.addf %53, %52 : vector<2x64xf32>
    %55 = arith.divf %53, %54 : vector<2x64xf32>
    %56 = math.tanh %50 : vector<2x64xf32>
    %57 = vector.extract_strided_slice %55 {offsets = [0, 0], sizes = [2, 16], strides = [1, 1]} : vector<2x64xf32> to vector<2x16xf32>
    %58 = vector.extract_strided_slice %55 {offsets = [0, 16], sizes = [2, 16], strides = [1, 1]} : vector<2x64xf32> to vector<2x16xf32>
    %59 = vector.extract_strided_slice %56 {offsets = [0, 32], sizes = [2, 16], strides = [1, 1]} : vector<2x64xf32> to vector<2x16xf32>
    %60 = vector.extract_strided_slice %55 {offsets = [0, 48], sizes = [2, 16], strides = [1, 1]} : vector<2x64xf32> to vector<2x16xf32>
    %61 = arith.mulf %58, %38 : vector<2x16xf32>
    %62 = arith.mulf %57, %59 : vector<2x16xf32>
    %63 = arith.addf %61, %62 : vector<2x16xf32>
    %64 = math.tanh %63 : vector<2x16xf32>
    %65 = arith.mulf %60, %64 : vector<2x16xf32>
    %66 = arith.index_cast %c1_i32 : i32 to index
    %c0_28 = arith.constant 0 : index
    %c0_29 = arith.constant 0 : index
    %67 = vector.load %arg6[%66, %c0_28, %c0_29] : memref<8x2x16xf32, #tpu.memory_space<vmem>>, vector<1x2x16xf32>
    %68 = vector.shape_cast %67 : vector<1x2x16xf32> to vector<2x16xf32>
    %69 = vector.shape_cast %65 : vector<2x16xf32> to vector<1x2x16xf32>
    tpu.vector_store %arg6[%66, %c0_28, %c0_29], %69 {strides = array<i32>} : memref<8x2x16xf32, #tpu.memory_space<vmem>>, vector<1x2x16xf32>,
    %c2_i32 = arith.constant 2 : i32
    %70 = arith.index_cast %c2_i32 : i32 to index
    %c0_30 = arith.constant 0 : index
    %c0_31 = arith.constant 0 : index
    %71 = vector.load %arg5[%70, %c0_30, %c0_31] : memref<8x2x64xf32, #tpu.memory_space<vmem>>, vector<1x2x64xf32>
    %72 = vector.shape_cast %71 : vector<1x2x64xf32> to vector<2x64xf32>
    %73 = arith.truncf %65 : vector<2x16xf32> to vector<2x16xbf16>
    %cst_32 = arith.constant dense<0.000000e+00> : vector<2x64xf32>
    %74 = tpu.matmul %73, %1, %cst_32 {dimension_numbers = #tpu.dot_dimension_numbers<[1], [0], [0], [1], [0, 0, 1, 1], [], []>} : vector<2x16xbf16>, vector<16x64xbf16>, vector<2x64xf32> -> vector<2x64xf32>
    %75 = arith.addf %72, %74 : vector<2x64xf32>
    %76 = arith.negf %75 : vector<2x64xf32>
    %77 = math.exp %76 : vector<2x64xf32>
    %cst_33 = arith.constant 1.000000e+00 : f32
    %78 = vector.broadcast %cst_33 : f32 to vector<2x64xf32>
    %79 = arith.addf %78, %77 : vector<2x64xf32>
    %80 = arith.divf %78, %79 : vector<2x64xf32>
    %81 = math.tanh %75 : vector<2x64xf32>
    %82 = vector.extract_strided_slice %80 {offsets = [0, 0], sizes = [2, 16], strides = [1, 1]} : vector<2x64xf32> to vector<2x16xf32>
    %83 = vector.extract_strided_slice %80 {offsets = [0, 16], sizes = [2, 16], strides = [1, 1]} : vector<2x64xf32> to vector<2x16xf32>
    %84 = vector.extract_strided_slice %81 {offsets = [0, 32], sizes = [2, 16], strides = [1, 1]} : vector<2x64xf32> to vector<2x16xf32>
    %85 = vector.extract_strided_slice %80 {offsets = [0, 48], sizes = [2, 16], strides = [1, 1]} : vector<2x64xf32> to vector<2x16xf32>
    %86 = arith.mulf %83, %63 : vector<2x16xf32>
    %87 = arith.mulf %82, %84 : vector<2x16xf32>
    %88 = arith.addf %86, %87 : vector<2x16xf32>
    %89 = math.tanh %88 : vector<2x16xf32>
    %90 = arith.mulf %85, %89 : vector<2x16xf32>
    %91 = arith.index_cast %c2_i32 : i32 to index
    %c0_34 = arith.constant 0 : index
    %c0_35 = arith.constant 0 : index
    %92 = vector.load %arg6[%91, %c0_34, %c0_35] : memref<8x2x16xf32, #tpu.memory_space<vmem>>, vector<1x2x16xf32>
    %93 = vector.shape_cast %92 : vector<1x2x16xf32> to vector<2x16xf32>
    %94 = vector.shape_cast %90 : vector<2x16xf32> to vector<1x2x16xf32>
    tpu.vector_store %arg6[%91, %c0_34, %c0_35], %94 {strides = array<i32>} : memref<8x2x16xf32, #tpu.memory_space<vmem>>, vector<1x2x16xf32>,
    %c3_i32 = arith.constant 3 : i32
    %95 = arith.index_cast %c3_i32 : i32 to index
    %c0_36 = arith.constant 0 : index
    %c0_37 = arith.constant 0 : index
    %96 = vector.load %arg5[%95, %c0_36, %c0_37] : memref<8x2x64xf32, #tpu.memory_space<vmem>>, vector<1x2x64xf32>
    %97 = vector.shape_cast %96 : vector<1x2x64xf32> to vector<2x64xf32>
    %98 = arith.truncf %90 : vector<2x16xf32> to vector<2x16xbf16>
    %cst_38 = arith.constant dense<0.000000e+00> : vector<2x64xf32>
    %99 = tpu.matmul %98, %1, %cst_38 {dimension_numbers = #tpu.dot_dimension_numbers<[1], [0], [0], [1], [0, 0, 1, 1], [], []>} : vector<2x16xbf16>, vector<16x64xbf16>, vector<2x64xf32> -> vector<2x64xf32>
    %100 = arith.addf %97, %99 : vector<2x64xf32>
    %101 = arith.negf %100 : vector<2x64xf32>
    %102 = math.exp %101 : vector<2x64xf32>
    %cst_39 = arith.constant 1.000000e+00 : f32
    %103 = vector.broadcast %cst_39 : f32 to vector<2x64xf32>
    %104 = arith.addf %103, %102 : vector<2x64xf32>
    %105 = arith.divf %103, %104 : vector<2x64xf32>
    %106 = math.tanh %100 : vector<2x64xf32>
    %107 = vector.extract_strided_slice %105 {offsets = [0, 0], sizes = [2, 16], strides = [1, 1]} : vector<2x64xf32> to vector<2x16xf32>
    %108 = vector.extract_strided_slice %105 {offsets = [0, 16], sizes = [2, 16], strides = [1, 1]} : vector<2x64xf32> to vector<2x16xf32>
    %109 = vector.extract_strided_slice %106 {offsets = [0, 32], sizes = [2, 16], strides = [1, 1]} : vector<2x64xf32> to vector<2x16xf32>
    %110 = vector.extract_strided_slice %105 {offsets = [0, 48], sizes = [2, 16], strides = [1, 1]} : vector<2x64xf32> to vector<2x16xf32>
    %111 = arith.mulf %108, %88 : vector<2x16xf32>
    %112 = arith.mulf %107, %109 : vector<2x16xf32>
    %113 = arith.addf %111, %112 : vector<2x16xf32>
    %114 = math.tanh %113 : vector<2x16xf32>
    %115 = arith.mulf %110, %114 : vector<2x16xf32>
    %116 = arith.index_cast %c3_i32 : i32 to index
    %c0_40 = arith.constant 0 : index
    %c0_41 = arith.constant 0 : index
    %117 = vector.load %arg6[%116, %c0_40, %c0_41] : memref<8x2x16xf32, #tpu.memory_space<vmem>>, vector<1x2x16xf32>
    %118 = vector.shape_cast %117 : vector<1x2x16xf32> to vector<2x16xf32>
    %119 = vector.shape_cast %115 : vector<2x16xf32> to vector<1x2x16xf32>
    tpu.vector_store %arg6[%116, %c0_40, %c0_41], %119 {strides = array<i32>} : memref<8x2x16xf32, #tpu.memory_space<vmem>>, vector<1x2x16xf32>,
    %c4_i32 = arith.constant 4 : i32
    %120 = arith.index_cast %c4_i32 : i32 to index
    %c0_42 = arith.constant 0 : index
    %c0_43 = arith.constant 0 : index
    %121 = vector.load %arg5[%120, %c0_42, %c0_43] : memref<8x2x64xf32, #tpu.memory_space<vmem>>, vector<1x2x64xf32>
    %122 = vector.shape_cast %121 : vector<1x2x64xf32> to vector<2x64xf32>
    %123 = arith.truncf %115 : vector<2x16xf32> to vector<2x16xbf16>
    %cst_44 = arith.constant dense<0.000000e+00> : vector<2x64xf32>
    %124 = tpu.matmul %123, %1, %cst_44 {dimension_numbers = #tpu.dot_dimension_numbers<[1], [0], [0], [1], [0, 0, 1, 1], [], []>} : vector<2x16xbf16>, vector<16x64xbf16>, vector<2x64xf32> -> vector<2x64xf32>
    %125 = arith.addf %122, %124 : vector<2x64xf32>
    %126 = arith.negf %125 : vector<2x64xf32>
    %127 = math.exp %126 : vector<2x64xf32>
    %cst_45 = arith.constant 1.000000e+00 : f32
    %128 = vector.broadcast %cst_45 : f32 to vector<2x64xf32>
    %129 = arith.addf %128, %127 : vector<2x64xf32>
    %130 = arith.divf %128, %129 : vector<2x64xf32>
    %131 = math.tanh %125 : vector<2x64xf32>
    %132 = vector.extract_strided_slice %130 {offsets = [0, 0], sizes = [2, 16], strides = [1, 1]} : vector<2x64xf32> to vector<2x16xf32>
    %133 = vector.extract_strided_slice %130 {offsets = [0, 16], sizes = [2, 16], strides = [1, 1]} : vector<2x64xf32> to vector<2x16xf32>
    %134 = vector.extract_strided_slice %131 {offsets = [0, 32], sizes = [2, 16], strides = [1, 1]} : vector<2x64xf32> to vector<2x16xf32>
    %135 = vector.extract_strided_slice %130 {offsets = [0, 48], sizes = [2, 16], strides = [1, 1]} : vector<2x64xf32> to vector<2x16xf32>
    %136 = arith.mulf %133, %113 : vector<2x16xf32>
    %137 = arith.mulf %132, %134 : vector<2x16xf32>
    %138 = arith.addf %136, %137 : vector<2x16xf32>
    %139 = math.tanh %138 : vector<2x16xf32>
    %140 = arith.mulf %135, %139 : vector<2x16xf32>
    %141 = arith.index_cast %c4_i32 : i32 to index
    %c0_46 = arith.constant 0 : index
    %c0_47 = arith.constant 0 : index
    %142 = vector.load %arg6[%141, %c0_46, %c0_47] : memref<8x2x16xf32, #tpu.memory_space<vmem>>, vector<1x2x16xf32>
    %143 = vector.shape_cast %142 : vector<1x2x16xf32> to vector<2x16xf32>
    %144 = vector.shape_cast %140 : vector<2x16xf32> to vector<1x2x16xf32>
    tpu.vector_store %arg6[%141, %c0_46, %c0_47], %144 {strides = array<i32>} : memref<8x2x16xf32, #tpu.memory_space<vmem>>, vector<1x2x16xf32>,
    %c5_i32 = arith.constant 5 : i32
    %145 = arith.index_cast %c5_i32 : i32 to index
    %c0_48 = arith.constant 0 : index
    %c0_49 = arith.constant 0 : index
    %146 = vector.load %arg5[%145, %c0_48, %c0_49] : memref<8x2x64xf32, #tpu.memory_space<vmem>>, vector<1x2x64xf32>
    %147 = vector.shape_cast %146 : vector<1x2x64xf32> to vector<2x64xf32>
    %148 = arith.truncf %140 : vector<2x16xf32> to vector<2x16xbf16>
    %cst_50 = arith.constant dense<0.000000e+00> : vector<2x64xf32>
    %149 = tpu.matmul %148, %1, %cst_50 {dimension_numbers = #tpu.dot_dimension_numbers<[1], [0], [0], [1], [0, 0, 1, 1], [], []>} : vector<2x16xbf16>, vector<16x64xbf16>, vector<2x64xf32> -> vector<2x64xf32>
    %150 = arith.addf %147, %149 : vector<2x64xf32>
    %151 = arith.negf %150 : vector<2x64xf32>
    %152 = math.exp %151 : vector<2x64xf32>
    %cst_51 = arith.constant 1.000000e+00 : f32
    %153 = vector.broadcast %cst_51 : f32 to vector<2x64xf32>
    %154 = arith.addf %153, %152 : vector<2x64xf32>
    %155 = arith.divf %153, %154 : vector<2x64xf32>
    %156 = math.tanh %150 : vector<2x64xf32>
    %157 = vector.extract_strided_slice %155 {offsets = [0, 0], sizes = [2, 16], strides = [1, 1]} : vector<2x64xf32> to vector<2x16xf32>
    %158 = vector.extract_strided_slice %155 {offsets = [0, 16], sizes = [2, 16], strides = [1, 1]} : vector<2x64xf32> to vector<2x16xf32>
    %159 = vector.extract_strided_slice %156 {offsets = [0, 32], sizes = [2, 16], strides = [1, 1]} : vector<2x64xf32> to vector<2x16xf32>
    %160 = vector.extract_strided_slice %155 {offsets = [0, 48], sizes = [2, 16], strides = [1, 1]} : vector<2x64xf32> to vector<2x16xf32>
    %161 = arith.mulf %158, %138 : vector<2x16xf32>
    %162 = arith.mulf %157, %159 : vector<2x16xf32>
    %163 = arith.addf %161, %162 : vector<2x16xf32>
    %164 = math.tanh %163 : vector<2x16xf32>
    %165 = arith.mulf %160, %164 : vector<2x16xf32>
    %166 = arith.index_cast %c5_i32 : i32 to index
    %c0_52 = arith.constant 0 : index
    %c0_53 = arith.constant 0 : index
    %167 = vector.load %arg6[%166, %c0_52, %c0_53] : memref<8x2x16xf32, #tpu.memory_space<vmem>>, vector<1x2x16xf32>
    %168 = vector.shape_cast %167 : vector<1x2x16xf32> to vector<2x16xf32>
    %169 = vector.shape_cast %165 : vector<2x16xf32> to vector<1x2x16xf32>
    tpu.vector_store %arg6[%166, %c0_52, %c0_53], %169 {strides = array<i32>} : memref<8x2x16xf32, #tpu.memory_space<vmem>>, vector<1x2x16xf32>,
    %c6_i32 = arith.constant 6 : i32
    %170 = arith.index_cast %c6_i32 : i32 to index
    %c0_54 = arith.constant 0 : index
    %c0_55 = arith.constant 0 : index
    %171 = vector.load %arg5[%170, %c0_54, %c0_55] : memref<8x2x64xf32, #tpu.memory_space<vmem>>, vector<1x2x64xf32>
    %172 = vector.shape_cast %171 : vector<1x2x64xf32> to vector<2x64xf32>
    %173 = arith.truncf %165 : vector<2x16xf32> to vector<2x16xbf16>
    %cst_56 = arith.constant dense<0.000000e+00> : vector<2x64xf32>
    %174 = tpu.matmul %173, %1, %cst_56 {dimension_numbers = #tpu.dot_dimension_numbers<[1], [0], [0], [1], [0, 0, 1, 1], [], []>} : vector<2x16xbf16>, vector<16x64xbf16>, vector<2x64xf32> -> vector<2x64xf32>
    %175 = arith.addf %172, %174 : vector<2x64xf32>
    %176 = arith.negf %175 : vector<2x64xf32>
    %177 = math.exp %176 : vector<2x64xf32>
    %cst_57 = arith.constant 1.000000e+00 : f32
    %178 = vector.broadcast %cst_57 : f32 to vector<2x64xf32>
    %179 = arith.addf %178, %177 : vector<2x64xf32>
    %180 = arith.divf %178, %179 : vector<2x64xf32>
    %181 = math.tanh %175 : vector<2x64xf32>
    %182 = vector.extract_strided_slice %180 {offsets = [0, 0], sizes = [2, 16], strides = [1, 1]} : vector<2x64xf32> to vector<2x16xf32>
    %183 = vector.extract_strided_slice %180 {offsets = [0, 16], sizes = [2, 16], strides = [1, 1]} : vector<2x64xf32> to vector<2x16xf32>
    %184 = vector.extract_strided_slice %181 {offsets = [0, 32], sizes = [2, 16], strides = [1, 1]} : vector<2x64xf32> to vector<2x16xf32>
    %185 = vector.extract_strided_slice %180 {offsets = [0, 48], sizes = [2, 16], strides = [1, 1]} : vector<2x64xf32> to vector<2x16xf32>
    %186 = arith.mulf %183, %163 : vector<2x16xf32>
    %187 = arith.mulf %182, %184 : vector<2x16xf32>
    %188 = arith.addf %186, %187 : vector<2x16xf32>
    %189 = math.tanh %188 : vector<2x16xf32>
    %190 = arith.mulf %185, %189 : vector<2x16xf32>
    %191 = arith.index_cast %c6_i32 : i32 to index
    %c0_58 = arith.constant 0 : index
    %c0_59 = arith.constant 0 : index
    %192 = vector.load %arg6[%191, %c0_58, %c0_59] : memref<8x2x16xf32, #tpu.memory_space<vmem>>, vector<1x2x16xf32>
    %193 = vector.shape_cast %192 : vector<1x2x16xf32> to vector<2x16xf32>
    %194 = vector.shape_cast %190 : vector<2x16xf32> to vector<1x2x16xf32>
    tpu.vector_store %arg6[%191, %c0_58, %c0_59], %194 {strides = array<i32>} : memref<8x2x16xf32, #tpu.memory_space<vmem>>, vector<1x2x16xf32>,
    %c7_i32 = arith.constant 7 : i32
    %195 = arith.index_cast %c7_i32 : i32 to index
    %c0_60 = arith.constant 0 : index
    %c0_61 = arith.constant 0 : index
    %196 = vector.load %arg5[%195, %c0_60, %c0_61] : memref<8x2x64xf32, #tpu.memory_space<vmem>>, vector<1x2x64xf32>
    %197 = vector.shape_cast %196 : vector<1x2x64xf32> to vector<2x64xf32>
    %198 = arith.truncf %190 : vector<2x16xf32> to vector<2x16xbf16>
    %cst_62 = arith.constant dense<0.000000e+00> : vector<2x64xf32>
    %199 = tpu.matmul %198, %1, %cst_62 {dimension_numbers = #tpu.dot_dimension_numbers<[1], [0], [0], [1], [0, 0, 1, 1], [], []>} : vector<2x16xbf16>, vector<16x64xbf16>, vector<2x64xf32> -> vector<2x64xf32>
    %200 = arith.addf %197, %199 : vector<2x64xf32>
    %201 = arith.negf %200 : vector<2x64xf32>
    %202 = math.exp %201 : vector<2x64xf32>
    %cst_63 = arith.constant 1.000000e+00 : f32
    %203 = vector.broadcast %cst_63 : f32 to vector<2x64xf32>
    %204 = arith.addf %203, %202 : vector<2x64xf32>
    %205 = arith.divf %203, %204 : vector<2x64xf32>
    %206 = math.tanh %200 : vector<2x64xf32>
    %207 = vector.extract_strided_slice %205 {offsets = [0, 0], sizes = [2, 16], strides = [1, 1]} : vector<2x64xf32> to vector<2x16xf32>
    %208 = vector.extract_strided_slice %205 {offsets = [0, 16], sizes = [2, 16], strides = [1, 1]} : vector<2x64xf32> to vector<2x16xf32>
    %209 = vector.extract_strided_slice %206 {offsets = [0, 32], sizes = [2, 16], strides = [1, 1]} : vector<2x64xf32> to vector<2x16xf32>
    %210 = vector.extract_strided_slice %205 {offsets = [0, 48], sizes = [2, 16], strides = [1, 1]} : vector<2x64xf32> to vector<2x16xf32>
    %211 = arith.mulf %208, %188 : vector<2x16xf32>
    %212 = arith.mulf %207, %209 : vector<2x16xf32>
    %213 = arith.addf %211, %212 : vector<2x16xf32>
    %214 = math.tanh %213 : vector<2x16xf32>
    %215 = arith.mulf %210, %214 : vector<2x16xf32>
    %216 = arith.index_cast %c7_i32 : i32 to index
    %c0_64 = arith.constant 0 : index
    %c0_65 = arith.constant 0 : index
    %217 = vector.load %arg6[%216, %c0_64, %c0_65] : memref<8x2x16xf32, #tpu.memory_space<vmem>>, vector<1x2x16xf32>
    %218 = vector.shape_cast %217 : vector<1x2x16xf32> to vector<2x16xf32>
    %219 = vector.shape_cast %215 : vector<2x16xf32> to vector<1x2x16xf32>
    tpu.vector_store %arg6[%216, %c0_64, %c0_65], %219 {strides = array<i32>} : memref<8x2x16xf32, #tpu.memory_space<vmem>>, vector<1x2x16xf32>,
    %c8_i32 = arith.constant 8 : i32
    %c0_66 = arith.constant 0 : index
    %c0_67 = arith.constant 0 : index
    %c0_68 = arith.constant 0 : index
    %220 = vector.load %arg6[%c0_66, %c0_67, %c0_68] : memref<8x2x16xf32, #tpu.memory_space<vmem>>, vector<8x2x16xf32>
    %221 = tpu.transpose %220, [1, 0, 2] : vector<8x2x16xf32> -> vector<2x8x16xf32>
    %222 = vector.shape_cast %221 : vector<2x8x16xf32> to vector<16x16xf32>
    %223 = arith.truncf %222 : vector<16x16xf32> to vector<16x16xbf16>
    %cst_69 = arith.constant dense<0.000000e+00> : vector<16x48xf32>
    %224 = tpu.matmul %223, %2, %cst_69 {dimension_numbers = #tpu.dot_dimension_numbers<[1], [0], [0], [1], [0, 0, 1, 1], [], []>} : vector<16x16xbf16>, vector<16x48xbf16>, vector<16x48xf32> -> vector<16x48xf32>
    %225 = vector.extract_strided_slice %7 {offsets = [1, 0], sizes = [1, 48], strides = [1, 1]} : vector<10x64xf32> to vector<1x48xf32>
    %226 = vector.broadcast %225 : vector<1x48xf32> to vector<16x48xf32>
    %227 = arith.addf %224, %226 : vector<16x48xf32>
    %228 = vector.shape_cast %227 : vector<16x48xf32> to vector<2x8x48xf32>
    %229 = vector.extract_strided_slice %228 {offsets = [0, 0, 0], sizes = [2, 8, 4], strides = [1, 1, 1]} : vector<2x8x48xf32> to vector<2x8x4xf32>
    %230 = vector.extract_strided_slice %228 {offsets = [0, 0, 16], sizes = [2, 8, 4], strides = [1, 1, 1]} : vector<2x8x48xf32> to vector<2x8x4xf32>
    "tpu.trace_start"() <{level = 10 : i32, message = "btd,bsd->bts"}> : () -> ()
    %cst_70 = arith.constant dense<0.000000e+00> : vector<2x8x8xf32>
    %231 = tpu.matmul %229, %230, %cst_70 {dimension_numbers = #tpu.dot_dimension_numbers<[2], [2], [1], [1], [0, 0, 0, 1, 1, 1], [0], [0]>} : vector<2x8x4xf32>, vector<2x8x4xf32>, vector<2x8x8xf32> -> vector<2x8x8xf32>
    "tpu.trace_stop"() : () -> ()
    %232 = vector.extract_strided_slice %228 {offsets = [0, 0, 4], sizes = [2, 8, 4], strides = [1, 1, 1]} : vector<2x8x48xf32> to vector<2x8x4xf32>
    %233 = vector.extract_strided_slice %228 {offsets = [0, 0, 20], sizes = [2, 8, 4], strides = [1, 1, 1]} : vector<2x8x48xf32> to vector<2x8x4xf32>
    "tpu.trace_start"() <{level = 10 : i32, message = "btd,bsd->bts"}> : () -> ()
    %cst_71 = arith.constant dense<0.000000e+00> : vector<2x8x8xf32>
    %234 = tpu.matmul %232, %233, %cst_71 {dimension_numbers = #tpu.dot_dimension_numbers<[2], [2], [1], [1], [0, 0, 0, 1, 1, 1], [0], [0]>} : vector<2x8x4xf32>, vector<2x8x4xf32>, vector<2x8x8xf32> -> vector<2x8x8xf32>
    "tpu.trace_stop"() : () -> ()
    %235 = vector.extract_strided_slice %228 {offsets = [0, 0, 8], sizes = [2, 8, 4], strides = [1, 1, 1]} : vector<2x8x48xf32> to vector<2x8x4xf32>
    %236 = vector.extract_strided_slice %228 {offsets = [0, 0, 24], sizes = [2, 8, 4], strides = [1, 1, 1]} : vector<2x8x48xf32> to vector<2x8x4xf32>
    "tpu.trace_start"() <{level = 10 : i32, message = "btd,bsd->bts"}> : () -> ()
    %cst_72 = arith.constant dense<0.000000e+00> : vector<2x8x8xf32>
    %237 = tpu.matmul %235, %236, %cst_72 {dimension_numbers = #tpu.dot_dimension_numbers<[2], [2], [1], [1], [0, 0, 0, 1, 1, 1], [0], [0]>} : vector<2x8x4xf32>, vector<2x8x4xf32>, vector<2x8x8xf32> -> vector<2x8x8xf32>
    "tpu.trace_stop"() : () -> ()
    %238 = vector.extract_strided_slice %228 {offsets = [0, 0, 12], sizes = [2, 8, 4], strides = [1, 1, 1]} : vector<2x8x48xf32> to vector<2x8x4xf32>
    %239 = vector.extract_strided_slice %228 {offsets = [0, 0, 28], sizes = [2, 8, 4], strides = [1, 1, 1]} : vector<2x8x48xf32> to vector<2x8x4xf32>
    "tpu.trace_start"() <{level = 10 : i32, message = "btd,bsd->bts"}> : () -> ()
    %cst_73 = arith.constant dense<0.000000e+00> : vector<2x8x8xf32>
    %240 = tpu.matmul %238, %239, %cst_73 {dimension_numbers = #tpu.dot_dimension_numbers<[2], [2], [1], [1], [0, 0, 0, 1, 1, 1], [0], [0]>} : vector<2x8x4xf32>, vector<2x8x4xf32>, vector<2x8x8xf32> -> vector<2x8x8xf32>
    "tpu.trace_stop"() : () -> ()
    %241 = tpu.concatenate %231, %234, %237, %240 in 1 : vector<2x8x8xf32>, vector<2x8x8xf32>, vector<2x8x8xf32>, vector<2x8x8xf32> -> vector<2x32x8xf32>
    %cst_74 = arith.constant 5.000000e-01 : f32
    %242 = vector.broadcast %cst_74 : f32 to vector<2x32x8xf32>
    %243 = arith.mulf %241, %242 : vector<2x32x8xf32>
    %cst_75 = arith.constant dense<0xFF800000> : vector<2x32xf32>
    %244 = vector.multi_reduction <maximumf>, %243, %cst_75 [2] : vector<2x32x8xf32> to vector<2x32xf32>
    %245 = vector.shape_cast %244 : vector<2x32xf32> to vector<2x32x1xf32>
    %246 = vector.broadcast %245 : vector<2x32x1xf32> to vector<2x32x8xf32>
    %247 = arith.subf %243, %246 : vector<2x32x8xf32>
    %248 = math.exp %247 : vector<2x32x8xf32>
    %cst_76 = arith.constant dense<0.000000e+00> : vector<2x32xf32>
    %249 = vector.multi_reduction <add>, %248, %cst_76 [2] : vector<2x32x8xf32> to vector<2x32xf32>
    %250 = vector.shape_cast %249 : vector<2x32xf32> to vector<2x32x1xf32>
    %251 = tpu.reciprocal %250 {approx = true} : vector<2x32x1xf32> -> vector<2x32x1xf32>
    %252 = vector.broadcast %251 : vector<2x32x1xf32> to vector<2x32x8xf32>
    %253 = arith.mulf %248, %252 : vector<2x32x8xf32>
    %254 = vector.extract_strided_slice %253 {offsets = [0, 0, 0], sizes = [2, 8, 8], strides = [1, 1, 1]} : vector<2x32x8xf32> to vector<2x8x8xf32>
    %255 = vector.extract_strided_slice %228 {offsets = [0, 0, 32], sizes = [2, 8, 4], strides = [1, 1, 1]} : vector<2x8x48xf32> to vector<2x8x4xf32>
    "tpu.trace_start"() <{level = 10 : i32, message = "bts,bsd->btd"}> : () -> ()
    %cst_77 = arith.constant dense<0.000000e+00> : vector<2x8x4xf32>
    %256 = tpu.matmul %254, %255, %cst_77 {dimension_numbers = #tpu.dot_dimension_numbers<[2], [1], [1], [2], [0, 0, 0, 1, 1, 2], [0], [0]>} : vector<2x8x8xf32>, vector<2x8x4xf32>, vector<2x8x4xf32> -> vector<2x8x4xf32>
    "tpu.trace_stop"() : () -> ()
    %257 = vector.extract_strided_slice %253 {offsets = [0, 8, 0], sizes = [2, 8, 8], strides = [1, 1, 1]} : vector<2x32x8xf32> to vector<2x8x8xf32>
    %258 = vector.extract_strided_slice %228 {offsets = [0, 0, 36], sizes = [2, 8, 4], strides = [1, 1, 1]} : vector<2x8x48xf32> to vector<2x8x4xf32>
    "tpu.trace_start"() <{level = 10 : i32, message = "bts,bsd->btd"}> : () -> ()
    %cst_78 = arith.constant dense<0.000000e+00> : vector<2x8x4xf32>
    %259 = tpu.matmul %257, %258, %cst_78 {dimension_numbers = #tpu.dot_dimension_numbers<[2], [1], [1], [2], [0, 0, 0, 1, 1, 2], [0], [0]>} : vector<2x8x8xf32>, vector<2x8x4xf32>, vector<2x8x4xf32> -> vector<2x8x4xf32>
    "tpu.trace_stop"() : () -> ()
    %260 = vector.extract_strided_slice %253 {offsets = [0, 16, 0], sizes = [2, 8, 8], strides = [1, 1, 1]} : vector<2x32x8xf32> to vector<2x8x8xf32>
    %261 = vector.extract_strided_slice %228 {offsets = [0, 0, 40], sizes = [2, 8, 4], strides = [1, 1, 1]} : vector<2x8x48xf32> to vector<2x8x4xf32>
    "tpu.trace_start"() <{level = 10 : i32, message = "bts,bsd->btd"}> : () -> ()
    %cst_79 = arith.constant dense<0.000000e+00> : vector<2x8x4xf32>
    %262 = tpu.matmul %260, %261, %cst_79 {dimension_numbers = #tpu.dot_dimension_numbers<[2], [1], [1], [2], [0, 0, 0, 1, 1, 2], [0], [0]>} : vector<2x8x8xf32>, vector<2x8x4xf32>, vector<2x8x4xf32> -> vector<2x8x4xf32>
    "tpu.trace_stop"() : () -> ()
    %263 = vector.extract_strided_slice %253 {offsets = [0, 24, 0], sizes = [2, 8, 8], strides = [1, 1, 1]} : vector<2x32x8xf32> to vector<2x8x8xf32>
    %264 = vector.extract_strided_slice %228 {offsets = [0, 0, 44], sizes = [2, 8, 4], strides = [1, 1, 1]} : vector<2x8x48xf32> to vector<2x8x4xf32>
    "tpu.trace_start"() <{level = 10 : i32, message = "bts,bsd->btd"}> : () -> ()
    %cst_80 = arith.constant dense<0.000000e+00> : vector<2x8x4xf32>
    %265 = tpu.matmul %263, %264, %cst_80 {dimension_numbers = #tpu.dot_dimension_numbers<[2], [1], [1], [2], [0, 0, 0, 1, 1, 2], [0], [0]>} : vector<2x8x8xf32>, vector<2x8x4xf32>, vector<2x8x4xf32> -> vector<2x8x4xf32>
    "tpu.trace_stop"() : () -> ()
    %266 = tpu.concatenate %256, %259, %262, %265 in 2 : vector<2x8x4xf32>, vector<2x8x4xf32>, vector<2x8x4xf32>, vector<2x8x4xf32> -> vector<2x8x16xf32>
    %267 = vector.shape_cast %266 : vector<2x8x16xf32> to vector<16x16xf32>
    %268 = arith.truncf %267 : vector<16x16xf32> to vector<16x16xbf16>
    %cst_81 = arith.constant dense<0.000000e+00> : vector<16x16xf32>
    %269 = tpu.matmul %268, %3, %cst_81 {dimension_numbers = #tpu.dot_dimension_numbers<[1], [0], [0], [1], [0, 0, 1, 1], [], []>} : vector<16x16xbf16>, vector<16x16xbf16>, vector<16x16xf32> -> vector<16x16xf32>
    %270 = vector.extract_strided_slice %7 {offsets = [2, 0], sizes = [1, 16], strides = [1, 1]} : vector<10x64xf32> to vector<1x16xf32>
    %271 = vector.broadcast %270 : vector<1x16xf32> to vector<16x16xf32>
    %272 = arith.addf %269, %271 : vector<16x16xf32>
    %273 = arith.addf %222, %272 : vector<16x16xf32>
    %274 = vector.extract_strided_slice %7 {offsets = [3, 0], sizes = [1, 16], strides = [1, 1]} : vector<10x64xf32> to vector<1x16xf32>
    %275 = vector.extract_strided_slice %7 {offsets = [4, 0], sizes = [1, 16], strides = [1, 1]} : vector<10x64xf32> to vector<1x16xf32>
    %cst_82 = arith.constant dense<0.000000e+00> : vector<16xf32>
    %276 = vector.multi_reduction <add>, %273, %cst_82 [1] : vector<16x16xf32> to vector<16xf32>
    %277 = vector.shape_cast %276 : vector<16xf32> to vector<16x1xf32>
    %cst_83 = arith.constant 1.600000e+01 : f32
    %278 = vector.broadcast %cst_83 : f32 to vector<16x1xf32>
    %279 = arith.divf %277, %278 : vector<16x1xf32>
    %280 = vector.broadcast %279 : vector<16x1xf32> to vector<16x16xf32>
    %281 = arith.subf %273, %280 : vector<16x16xf32>
    %282 = arith.mulf %281, %281 : vector<16x16xf32>
    %cst_84 = arith.constant dense<0.000000e+00> : vector<16xf32>
    %283 = vector.multi_reduction <add>, %282, %cst_84 [1] : vector<16x16xf32> to vector<16xf32>
    %284 = vector.shape_cast %283 : vector<16xf32> to vector<16x1xf32>
    %cst_85 = arith.constant 1.600000e+01 : f32
    %285 = vector.broadcast %cst_85 : f32 to vector<16x1xf32>
    %286 = arith.divf %284, %285 : vector<16x1xf32>
    %287 = vector.broadcast %279 : vector<16x1xf32> to vector<16x16xf32>
    %288 = arith.subf %273, %287 : vector<16x16xf32>
    %cst_86 = arith.constant 9.99999974E-6 : f32
    %289 = vector.broadcast %cst_86 : f32 to vector<16x1xf32>
    %290 = arith.addf %286, %289 : vector<16x1xf32>
    %291 = math.rsqrt %290 : vector<16x1xf32>
    %292 = vector.broadcast %291 : vector<16x1xf32> to vector<16x16xf32>
    %293 = arith.mulf %288, %292 : vector<16x16xf32>
    %294 = vector.broadcast %274 : vector<1x16xf32> to vector<16x16xf32>
    %295 = arith.mulf %293, %294 : vector<16x16xf32>
    %296 = vector.broadcast %275 : vector<1x16xf32> to vector<16x16xf32>
    %297 = arith.addf %295, %296 : vector<16x16xf32>
    %298 = arith.truncf %297 : vector<16x16xf32> to vector<16x16xbf16>
    %cst_87 = arith.constant dense<0.000000e+00> : vector<16x8xf32>
    %299 = tpu.matmul %298, %4, %cst_87 {dimension_numbers = #tpu.dot_dimension_numbers<[1], [0], [0], [1], [0, 0, 1, 1], [], []>} : vector<16x16xbf16>, vector<16x8xbf16>, vector<16x8xf32> -> vector<16x8xf32>
    %300 = vector.extract_strided_slice %7 {offsets = [5, 0], sizes = [1, 8], strides = [1, 1]} : vector<10x64xf32> to vector<1x8xf32>
    %301 = vector.broadcast %300 : vector<1x8xf32> to vector<16x8xf32>
    %302 = arith.addf %299, %301 : vector<16x8xf32>
    %cst_88 = arith.constant 0.000000e+00 : f32
    %303 = vector.broadcast %cst_88 : f32 to vector<16x8xf32>
    %304 = arith.maximumf %302, %303 : vector<16x8xf32>
    %305 = arith.truncf %304 : vector<16x8xf32> to vector<16x8xbf16>
    %cst_89 = arith.constant dense<0.000000e+00> : vector<16x16xf32>
    %306 = tpu.matmul %305, %5, %cst_89 {dimension_numbers = #tpu.dot_dimension_numbers<[1], [0], [0], [1], [0, 0, 1, 1], [], []>} : vector<16x8xbf16>, vector<8x16xbf16>, vector<16x16xf32> -> vector<16x16xf32>
    %307 = vector.extract_strided_slice %7 {offsets = [6, 0], sizes = [1, 16], strides = [1, 1]} : vector<10x64xf32> to vector<1x16xf32>
    %308 = vector.broadcast %307 : vector<1x16xf32> to vector<16x16xf32>
    %309 = arith.addf %306, %308 : vector<16x16xf32>
    %310 = arith.addf %297, %309 : vector<16x16xf32>
    %311 = vector.extract_strided_slice %7 {offsets = [7, 0], sizes = [1, 16], strides = [1, 1]} : vector<10x64xf32> to vector<1x16xf32>
    %312 = vector.extract_strided_slice %7 {offsets = [8, 0], sizes = [1, 16], strides = [1, 1]} : vector<10x64xf32> to vector<1x16xf32>
    %cst_90 = arith.constant dense<0.000000e+00> : vector<16xf32>
    %313 = vector.multi_reduction <add>, %310, %cst_90 [1] : vector<16x16xf32> to vector<16xf32>
    %314 = vector.shape_cast %313 : vector<16xf32> to vector<16x1xf32>
    %cst_91 = arith.constant 1.600000e+01 : f32
    %315 = vector.broadcast %cst_91 : f32 to vector<16x1xf32>
    %316 = arith.divf %314, %315 : vector<16x1xf32>
    %317 = vector.broadcast %316 : vector<16x1xf32> to vector<16x16xf32>
    %318 = arith.subf %310, %317 : vector<16x16xf32>
    %319 = arith.mulf %318, %318 : vector<16x16xf32>
    %cst_92 = arith.constant dense<0.000000e+00> : vector<16xf32>
    %320 = vector.multi_reduction <add>, %319, %cst_92 [1] : vector<16x16xf32> to vector<16xf32>
    %321 = vector.shape_cast %320 : vector<16xf32> to vector<16x1xf32>
    %cst_93 = arith.constant 1.600000e+01 : f32
    %322 = vector.broadcast %cst_93 : f32 to vector<16x1xf32>
    %323 = arith.divf %321, %322 : vector<16x1xf32>
    %324 = vector.broadcast %316 : vector<16x1xf32> to vector<16x16xf32>
    %325 = arith.subf %310, %324 : vector<16x16xf32>
    %cst_94 = arith.constant 9.99999974E-6 : f32
    %326 = vector.broadcast %cst_94 : f32 to vector<16x1xf32>
    %327 = arith.addf %323, %326 : vector<16x1xf32>
    %328 = math.rsqrt %327 : vector<16x1xf32>
    %329 = vector.broadcast %328 : vector<16x1xf32> to vector<16x16xf32>
    %330 = arith.mulf %325, %329 : vector<16x16xf32>
    %331 = vector.broadcast %311 : vector<1x16xf32> to vector<16x16xf32>
    %332 = arith.mulf %330, %331 : vector<16x16xf32>
    %333 = vector.broadcast %312 : vector<1x16xf32> to vector<16x16xf32>
    %334 = arith.addf %332, %333 : vector<16x16xf32>
    %335 = vector.shape_cast %334 : vector<16x16xf32> to vector<2x8x16xf32>
    %cst_95 = arith.constant dense<0.000000e+00> : vector<2x16xf32>
    %336 = vector.multi_reduction <add>, %335, %cst_95 [1] : vector<2x8x16xf32> to vector<2x16xf32>
    %cst_96 = arith.constant 8.000000e+00 : f32
    %337 = vector.broadcast %cst_96 : f32 to vector<2x16xf32>
    %338 = arith.divf %336, %337 : vector<2x16xf32>
    %339 = arith.truncf %338 : vector<2x16xf32> to vector<2x16xbf16>
    %cst_97 = arith.constant dense<0.000000e+00> : vector<2x8xf32>
    %340 = tpu.matmul %339, %6, %cst_97 {dimension_numbers = #tpu.dot_dimension_numbers<[1], [0], [0], [1], [0, 0, 1, 1], [], []>} : vector<2x16xbf16>, vector<16x8xbf16>, vector<2x8xf32> -> vector<2x8xf32>
    %341 = vector.extract_strided_slice %7 {offsets = [9, 0], sizes = [1, 8], strides = [1, 1]} : vector<10x64xf32> to vector<1x8xf32>
    %342 = vector.broadcast %341 : vector<1x8xf32> to vector<2x8xf32>
    %343 = arith.addf %340, %342 : vector<2x8xf32>
    %344 = arith.negf %343 : vector<2x8xf32>
    %345 = math.exp %344 : vector<2x8xf32>
    %cst_98 = arith.constant 1.000000e+00 : f32
    %346 = vector.broadcast %cst_98 : f32 to vector<2x8xf32>
    %347 = arith.addf %346, %345 : vector<2x8xf32>
    %348 = arith.divf %346, %347 : vector<2x8xf32>
    %349 = vector.shape_cast %348 : vector<2x8xf32> to vector<1x2x8xf32>
    %c0_99 = arith.constant 0 : index
    %c0_100 = arith.constant 0 : index
    %c0_101 = arith.constant 0 : index
    %350 = vector.load %arg4[%c0_99, %c0_100, %c0_101] : memref<1x2x8xf32, #tpu.memory_space<vmem>>, vector<1x2x8xf32>
    tpu.vector_store %arg4[%c0_99, %c0_100, %c0_101], %349 {strides = array<i32>} : memref<1x2x8xf32, #tpu.memory_space<vmem>>, vector<1x2x8xf32>,
    return
  }
  func.func @transform_0(%arg0: i32) -> (i32, i32, i32, i32) {
    %c0_i32 = arith.constant 0 : i32
    %c0_i32_0 = arith.constant 0 : i32
    %c0_i32_1 = arith.constant 0 : i32
    %c0_i32_2 = arith.constant 0 : i32
    return %arg0, %c0_i32, %c0_i32_0, %c0_i32_1 : i32, i32, i32, i32
  }
  func.func @transform_1(%arg0: i32) -> (i32, i32) {
    %c0_i32 = arith.constant 0 : i32
    %c0_i32_0 = arith.constant 0 : i32
    %c0_i32_1 = arith.constant 0 : i32
    return %c0_i32, %c0_i32_0 : i32, i32
  }
  func.func @transform_2(%arg0: i32) -> (i32, i32) {
    %c0_i32 = arith.constant 0 : i32
    %c0_i32_0 = arith.constant 0 : i32
    %c0_i32_1 = arith.constant 0 : i32
    return %c0_i32, %c0_i32_0 : i32, i32
  }
  func.func @transform_3(%arg0: i32) -> (i32, i32, i32) {
    %c0_i32 = arith.constant 0 : i32
    %c0_i32_0 = arith.constant 0 : i32
    %c0_i32_1 = arith.constant 0 : i32
    return %arg0, %c0_i32, %c0_i32_0 : i32, i32, i32
  }
}

</mosaic_0001>

<llo_original>
// kernel: tpu_custom_call.1
$region0: #{tpu_custom_call.1}
  #allocation0 [shape = 'u32[]', space=smem, size = 0x4, offset = 0x4, fixed_abs, tag = 'smem constant byte address 0x4 - core index']
  #allocation1 [shape = 'u32[144,128]{1,0:T(1,128)}', space=vmem, size = 0x12000, scoped, tag = 'internal scratch']
  #allocation2 [shape = 'f32[8,2,64]{2,1,0:T(2,128)}', space=vmem, size = 0x2000, scoped, tag = 'scratch operand']
  #allocation3 [shape = 'f32[8,2,16]{2,1,0:T(2,128)}', space=vmem, size = 0x2000, scoped, tag = 'scratch operand']
  %s0 = inlined_call_operand.hbm [shape: f32[1,8,2,16], index: 0, kind: input, shape index: {}]
  %s1 = inlined_call_operand.hbm [shape: bf16[16,224], index: 1, kind: input, shape index: {}]
  %s2 = inlined_call_operand.hbm [shape: f32[10,64], index: 2, kind: input, shape index: {}]
  %s3 = inlined_call_operand.hbm [shape: f32[1,2,8], index: 3, kind: output, shape index: {}]
  %s4 = sld [smem:[#allocation0]]
  $region34: #{tpu_custom_call.1} parent=0
    _
  %s6 = ssub.s32 1, %s4
  %s7 = scalar_select 0, %s6, %s4
  $region1: #{tpu_custom_call.1} parent=0
    #allocation4 [shape = 'u8[8192]{0}', space=vmem, size = 0x2000, scoped, tag = 'input window, operand 0, single buffered']
    #allocation5 [shape = 's32[1]{0}', space=sflag, size = 0x4, scoped, tag = 'scoped memory for tpu_custom_call.1']
    #allocation6 [shape = 's32[1]{0}', space=sflag, size = 0x4, scoped, tag = 'scoped memory for tpu_custom_call.1']
    #allocation7 [shape = 'u8[8192]{0}', space=vmem, size = 0x2000, scoped, tag = 'input window, operand 1, single buffered']
    #allocation8 [shape = 's32[1]{0}', space=sflag, size = 0x4, scoped, tag = 'scoped memory for tpu_custom_call.1']
    #allocation9 [shape = 'u8[8192]{0}', space=vmem, size = 0x2000, scoped, tag = 'input window, operand 2, single buffered']
    #allocation10 [shape = 'u8[1024]{0}', space=vmem, size = 0x400, scoped, tag = 'output window, operand 0, single buffered']
    %8 = vsyncpa [#allocation5], 0
    %9 = vsyncpa [#allocation8], 0
    %10 = vsyncpa [#allocation6], 0
    // Predicated region
    $region2: #{tpu_custom_call.1} parent=1 // pred_check
      _
    $region3: #{tpu_custom_call.1} parent=1 // pred_check_branch
      %12 = sbr.rel (0) target = $region5
    $region4: #{tpu_custom_call.1} parent=1 // pred_region
      %s14 = ssub.s32 256, 256
      %15 = vsyncadd [#allocation5], %s14
      %s16 = sshll.u32 [#allocation4], 4
      %s17 = int_to_ptr.vmem [resolvable:$true] %s16
      %22 = dma.hbm_to_vmem [thread:$0]  %s0, 256, %s17, [#allocation5], 32, 32, 2
    $region5: #{tpu_custom_call.1} parent=1 // pred_fallthru
      _
    // Predicated region
    $region6: #{tpu_custom_call.1} parent=1 // pred_check
      _
    $region7: #{tpu_custom_call.1} parent=1 // pred_check_branch
      %24 = sbr.rel (0) target = $region9
    $region8: #{tpu_custom_call.1} parent=1 // pred_region
      %s26 = ssub.s32 256, 256
      %27 = vsyncadd [#allocation8], %s26
      %s28 = sshll.u32 [#allocation7], 4
      %s29 = int_to_ptr.vmem [resolvable:$true] %s28
      %34 = dma.hbm_to_vmem [thread:$0]  %s1, 256, %s29, [#allocation8], 128, 128, 8
    $region9: #{tpu_custom_call.1} parent=1 // pred_fallthru
      _
    // Predicated region
    $region10: #{tpu_custom_call.1} parent=1 // pred_check
      _
    $region11: #{tpu_custom_call.1} parent=1 // pred_check_branch
      %36 = sbr.rel (0) target = $region13
    $region12: #{tpu_custom_call.1} parent=1 // pred_region
      %s38 = ssub.s32 256, 256
      %39 = vsyncadd [#allocation8], %s38
      %s40 = sshll.u32 [#allocation9], 4
      %s41 = int_to_ptr.vmem [resolvable:$true] %s40
      %46 = dma.hbm_to_vmem [thread:$0]  %s2, 256, %s41, [#allocation8], 128, 128, 8
    $region13: #{tpu_custom_call.1} parent=1 // pred_fallthru
      _
    // Predicated region
    $region14: #{tpu_custom_call.1} parent=1 // pred_check
      _
    $region15: #{tpu_custom_call.1} parent=1 // pred_check_branch
      %48 = sbr.rel (0) target = $region17
    $region16: #{tpu_custom_call.1} parent=1 // pred_region
      %49 = dma.done [#allocation5], 256
    $region17: #{tpu_custom_call.1} parent=1 // pred_fallthru
      _
    // Predicated region
    $region18: #{tpu_custom_call.1} parent=1 // pred_check
      _
    $region19: #{tpu_custom_call.1} parent=1 // pred_check_branch
      %51 = sbr.rel (0) target = $region21
    $region20: #{tpu_custom_call.1} parent=1 // pred_region
      %52 = dma.done [#allocation8], 256
    $region21: #{tpu_custom_call.1} parent=1 // pred_fallthru
      _
    // Predicated region
    $region22: #{tpu_custom_call.1} parent=1 // pred_check
      _
    $region23: #{tpu_custom_call.1} parent=1 // pred_check_branch
      %54 = sbr.rel (0) target = $region25
    $region24: #{tpu_custom_call.1} parent=1 // pred_region
      %55 = dma.done [#allocation8], 256
    $region25: #{tpu_custom_call.1} parent=1 // pred_fallthru
      _
    %v57 = vld [vmem:[#allocation7] sm:$0xf]
    %v58 = vld [vmem:[#allocation7 + $0x8] sm:$0xf]
    %v59 = vld [vmem:[#allocation7 + $0x4] sm:$0xf]
    %v60 = vld [vmem:[#allocation7 + $0xc] sm:$0xf]
    %v61 = vld [vmem:[#allocation9] sm:$0xff]
    %v62 = vld [vmem:[#allocation9 + $0x8] sm:$0x3]
    %v63 = vld [vmem:[#allocation4] sm:$0x3]
    %v64 = vld [vmem:[#allocation4 + $0x2] sm:$0x3]
    %v65 = vld [vmem:[#allocation4 + $0x4] sm:$0x3]
    %v66 = vld [vmem:[#allocation4 + $0x6] sm:$0x3]
    %v67 = vld [vmem:[#allocation4 + $0x8] sm:$0x3]
    %v68 = vld [vmem:[#allocation4 + $0xa] sm:$0x3]
    %v69 = vld [vmem:[#allocation4 + $0xc] sm:$0x3]
    %v70 = vld [vmem:[#allocation4 + $0xe] sm:$0x3]
    %v79 = vcombine.low %v63, %v64
    %v80 = vcombine.low %v65, %v66
    %v82 = vunpack.c.l.s4 1983009808
    %v83 = vunpack.c.0.s8 %v82
    %v84 = vlaneseq
    %v85 = vshrl.u32 %v84, 7
    %v86 = vsub.s32 %v83, %v85
    %v87 = vrot.slane %v79, %v86
    %v89 = vunpack.c.l.s4 1983009808
    %v90 = vunpack.c.0.s8 %v89
    %v91 = vlaneseq
    %v92 = vshrl.u32 %v91, 7
    %v93 = vsub.s32 %v90, %v92
    %v94 = vrot.slane %v80, %v93
    %v95 = vcombine.low %v87, %v94
    %v96 = vcombine.low %v67, %v68
    %v97 = vcombine.low %v69, %v70
    %v99 = vunpack.c.l.s4 1983009808
    %v100 = vunpack.c.0.s8 %v99
    %v101 = vlaneseq
    %v102 = vshrl.u32 %v101, 7
    %v103 = vsub.s32 %v100, %v102
    %v104 = vrot.slane %v96, %v103
    %v106 = vunpack.c.l.s4 1983009808
    %v107 = vunpack.c.0.s8 %v106
    %v108 = vlaneseq
    %v109 = vshrl.u32 %v108, 7
    %v110 = vsub.s32 %v107, %v109
    %v111 = vrot.slane %v97, %v110
    %v112 = vcombine.low %v104, %v111
    %v115 = vpack.c.bf16 %v112, %v95
    %v116 = vlaneseq
    %v117 = vshrl.u32 %v116, 7
    %v118 = vsub.s32 0, %v117
    %v119 = vrot.slane %v61, %v118
    %v122 = vunpack.c.l.b16 %v57
    %v123 = vunpack.c.l.b16 %v58
    %v124 = vpack.c.b16 %v123, %v122
    %vm126 = vcmask 130048
    %v128 = vsel %vm126, %v115, 0
    %130 = vmatprep.subr.bf16.mxu0 0
    %131 = vmatpush1.bf16.msra.mxu0 0
    %132 = vmatprep.subr.bf16.mxu0 0
    %133 = vmatpush1.bf16.msra.mxu0 0
    %134 = vmatprep.subr.bf16.mxu0 0
    %135 = vmatpush1.bf16.msra.mxu0 0
    %136 = vmatprep.subr.bf16.mxu0 0
    %137 = vmatpush1.bf16.msra.mxu0 0
    %138 = vmatprep.subr.bf16.mxu0 0
    %139 = vmatpush1.bf16.msra.mxu0 0
    %140 = vmatprep.subr.bf16.mxu0 0
    %141 = vmatpush1.bf16.msra.mxu0 0
    %142 = vmatprep.subr.bf16.mxu0 0
    %143 = vmatpush1.bf16.msra.mxu0 0
    %144 = vmatprep.subr.bf16.mxu0 0
    %145 = vmatpush1.bf16.msra.mxu0 %v124
    %146 = vmatprep.subr.bf16.mxu0 0
    %147 = vmatpush2.bf16.msra.mxu0 0
    %148 = vmatprep.subr.bf16.mxu0 0
    %149 = vmatpush2.bf16.msra.mxu0 0
    %150 = vmatprep.subr.bf16.mxu0 0
    %151 = vmatpush2.bf16.msra.mxu0 0
    %152 = vmatprep.subr.bf16.mxu0 0
    %153 = vmatpush2.bf16.msra.mxu0 0
    %154 = vmatprep.subr.bf16.mxu0 0
    %155 = vmatpush2.bf16.msra.mxu0 0
    %156 = vmatprep.subr.bf16.mxu0 0
    %157 = vmatpush2.bf16.msra.mxu0 0
    %158 = vmatprep.subr.bf16.mxu0 0
    %159 = vmatpush2.bf16.msra.mxu0 0
    %160 = vmatprep.subr.bf16.mxu0 0
    %161 = vmatpush2.bf16.msra.mxu0 0
    %162 = vmatprep.mubr.bf16.mxu0 0
    %163 = vmatmul.mubr.bf16.gmra.mxu0 %v128
    %v164 = vpop.f32.mrf.mxu0
    %v165 = vadd.f32 %v119, %v164
    %v166 = vpop.f32.mrf.mxu0
    %v167 = vpop.f32.mrf.mxu0
    %v168 = vadd.f32 %v119, %v167
    %v169 = vpop.f32.mrf.mxu0
    %170 = vdwg.mxu0
    %v173 = vcombine.high %v165, %v165
    %v175 = vunpack.c.l.s4 1983009808
    %v176 = vunpack.c.0.s8 %v175
    %v177 = vlaneseq
    %v178 = vshrl.u32 %v177, 7
    %v179 = vsub.s32 %v176, %v178
    %v180 = vrot.slane %v165, %v179
    %v182 = vunpack.c.l.s4 1983009808
    %v183 = vunpack.c.0.s8 %v182
    %v184 = vlaneseq
    %v185 = vshrl.u32 %v184, 7
    %v186 = vsub.s32 %v183, %v185
    %v187 = vrot.slane %v173, %v186
    %v188 = vcombine.high %v180, %v180
    %v189 = vcombine.high %v187, %v187
    %v190 = vcombine.high %v168, %v168
    %v192 = vunpack.c.l.s4 1983009808
    %v193 = vunpack.c.0.s8 %v192
    %v194 = vlaneseq
    %v195 = vshrl.u32 %v194, 7
    %v196 = vsub.s32 %v193, %v195
    %v197 = vrot.slane %v168, %v196
    %v199 = vunpack.c.l.s4 1983009808
    %v200 = vunpack.c.0.s8 %v199
    %v201 = vlaneseq
    %v202 = vshrl.u32 %v201, 7
    %v203 = vsub.s32 %v200, %v202
    %v204 = vrot.slane %v190, %v203
    %v205 = vcombine.high %v197, %v197
    %v206 = vcombine.high %v204, %v204
    %vm215 = vcmask 517120
    %216 = vst.msk [vmem:[#allocation2] sm:$0x3] %vm215, %v180
    %217 = vst.msk [vmem:[#allocation2 + $0x2] sm:$0x3] %vm215, %v188
    %218 = vst.msk [vmem:[#allocation2 + $0x4] sm:$0x3] %vm215, %v187
    %219 = vst.msk [vmem:[#allocation2 + $0x6] sm:$0x3] %vm215, %v189
    %220 = vst.msk [vmem:[#allocation2 + $0x8] sm:$0x3] %vm215, %v197
    %221 = vst.msk [vmem:[#allocation2 + $0xa] sm:$0x3] %vm215, %v205
    %222 = vst.msk [vmem:[#allocation2 + $0xc] sm:$0x3] %vm215, %v204
    %223 = vst.msk [vmem:[#allocation2 + $0xe] sm:$0x3] %vm215, %v206
    %v224 = vld [vmem:[#allocation2] sm:$0x3]
    %225 = vrot.lane.b32.xlu0 %v124, 64
    %v226 = vpop.permute.xlu0 %225
    %v229 = vsel %vm126, 0, 0
    %231 = vmatprep.subr.bf16.mxu0 0
    %232 = vmatpush1.bf16.msra.mxu0 0
    %233 = vmatprep.subr.bf16.mxu0 0
    %234 = vmatpush1.bf16.msra.mxu0 0
    %235 = vmatprep.subr.bf16.mxu0 0
    %236 = vmatpush1.bf16.msra.mxu0 0
    %237 = vmatprep.subr.bf16.mxu0 0
    %238 = vmatpush1.bf16.msra.mxu0 0
    %239 = vmatprep.subr.bf16.mxu0 0
    %240 = vmatpush1.bf16.msra.mxu0 0
    %241 = vmatprep.subr.bf16.mxu0 0
    %242 = vmatpush1.bf16.msra.mxu0 0
    %243 = vmatprep.subr.bf16.mxu0 0
    %244 = vmatpush1.bf16.msra.mxu0 0
    %245 = vmatprep.subr.bf16.mxu0 0
    %246 = vmatpush1.bf16.msra.mxu0 %v226
    %247 = vmatprep.subr.bf16.mxu0 0
    %248 = vmatpush2.bf16.msra.mxu0 0
    %249 = vmatprep.subr.bf16.mxu0 0
    %250 = vmatpush2.bf16.msra.mxu0 0
    %251 = vmatprep.subr.bf16.mxu0 0
    %252 = vmatpush2.bf16.msra.mxu0 0
    %253 = vmatprep.subr.bf16.mxu0 0
    %254 = vmatpush2.bf16.msra.mxu0 0
    %255 = vmatprep.subr.bf16.mxu0 0
    %256 = vmatpush2.bf16.msra.mxu0 0
    %257 = vmatprep.subr.bf16.mxu0 0
    %258 = vmatpush2.bf16.msra.mxu0 0
    %259 = vmatprep.subr.bf16.mxu0 0
    %260 = vmatpush2.bf16.msra.mxu0 0
    %261 = vmatprep.subr.bf16.mxu0 0
    %262 = vmatpush2.bf16.msra.mxu0 0
    %263 = vmatprep.mubr.bf16.mxu0 0
    %264 = vmatmul.mubr.bf16.gmra.mxu0 %v229
    %v265 = vpop.f32.mrf.mxu0
    %v266 = vadd.f32 0.0, %v265
    %v267 = vpop.f32.mrf.mxu0
    %v268 = vpop.f32.mrf.mxu0
    %v269 = vpop.f32.mrf.mxu0
    %270 = vdwg.mxu0
    %v271 = vadd.f32 %v224, %v266
    %v272 = vxor.u32 %v271, 2147483648
    %v273 = vmul.f32 %v272, 1.442695
    %v274 = vpow.pop %v273
    %v275 = vadd.f32 %v274, 1.0
    %v276 = vrcp.pop %v275
    %v277 = vmul.f32 1.0, %v276
    %v278 = vtanh.pop %v271
    %v279 = vmul.f32 %v277, 0.0
    %281 = vrot.lane.b32.xlu0 %v278, 96
    %v282 = vpop.permute.xlu0 %281
    %v284 = vmul.f32 %v277, %v282
    %286 = vrot.lane.b32.xlu0 %v284, 16
    %v287 = vpop.permute.xlu0 %286
    %v289 = vadd.f32 %v279, %v287
    %v290 = vtanh.pop %v289
    %292 = vrot.lane.b32.xlu0 %v290, 32
    %v293 = vpop.permute.xlu0 %292
    %v295 = vmul.f32 %v277, %v293
    %297 = vrot.lane.b32.xlu0 %v295, 80
    %v298 = vpop.permute.xlu0 %297
    %vm300 = vcmask 123904
    %301 = vst.msk [vmem:[#allocation3] sm:$0x3] %vm300, %v298
    %s302 = scalar_lea.vmem [#allocation2], 2
    %v303 = vld [vmem:[%s302] sm:$0x3]
    %v304 = vpack.c.bf16 %v295, %v295
    %306 = vrot.lane.b32.xlu0 %v304, 80
    %v307 = vpop.permute.xlu0 %306
    %v309 = vsel %vm126, %v307, 0
    %311 = vmatprep.subr.bf16.mxu0 0
    %312 = vmatpush1.bf16.msra.mxu0 0
    %313 = vmatprep.subr.bf16.mxu0 0
    %314 = vmatpush1.bf16.msra.mxu0 0
    %315 = vmatprep.subr.bf16.mxu0 0
    %316 = vmatpush1.bf16.msra.mxu0 0
    %317 = vmatprep.subr.bf16.mxu0 0
    %318 = vmatpush1.bf16.msra.mxu0 0
    %319 = vmatprep.subr.bf16.mxu0 0
    %320 = vmatpush1.bf16.msra.mxu0 0
    %321 = vmatprep.subr.bf16.mxu0 0
    %322 = vmatpush1.bf16.msra.mxu0 0
    %323 = vmatprep.subr.bf16.mxu0 0
    %324 = vmatpush1.bf16.msra.mxu0 0
    %325 = vmatprep.subr.bf16.mxu0 0
    %326 = vmatpush1.bf16.msra.mxu0 %v226
    %327 = vmatprep.subr.bf16.mxu0 0
    %328 = vmatpush2.bf16.msra.mxu0 0
    %329 = vmatprep.subr.bf16.mxu0 0
    %330 = vmatpush2.bf16.msra.mxu0 0
    %331 = vmatprep.subr.bf16.mxu0 0
    %332 = vmatpush2.bf16.msra.mxu0 0
    %333 = vmatprep.subr.bf16.mxu0 0
    %334 = vmatpush2.bf16.msra.mxu0 0
    %335 = vmatprep.subr.bf16.mxu0 0
    %336 = vmatpush2.bf16.msra.mxu0 0
    %337 = vmatprep.subr.bf16.mxu0 0
    %338 = vmatpush2.bf16.msra.mxu0 0
    %339 = vmatprep.subr.bf16.mxu0 0
    %340 = vmatpush2.bf16.msra.mxu0 0
    %341 = vmatprep.subr.bf16.mxu0 0
    %342 = vmatpush2.bf16.msra.mxu0 0
    %343 = vmatprep.mubr.bf16.mxu0 0
    %344 = vmatmul.mubr.bf16.gmra.mxu0 %v309
    %v345 = vpop.f32.mrf.mxu0
    %v346 = vadd.f32 0.0, %v345
    %v347 = vpop.f32.mrf.mxu0
    %v348 = vpop.f32.mrf.mxu0
    %v349 = vpop.f32.mrf.mxu0
    %350 = vdwg.mxu0
    %v351 = vadd.f32 %v303, %v346
    %v352 = vxor.u32 %v351, 2147483648
    %v353 = vmul.f32 %v352, 1.442695
    %v354 = vpow.pop %v353
    %v355 = vadd.f32 %v354, 1.0
    %v356 = vrcp.pop %v355
    %v357 = vmul.f32 1.0, %v356
    %v358 = vtanh.pop %v351
    %v359 = vmul.f32 %v357, %v289
    %361 = vrot.lane.b32.xlu0 %v358, 96
    %v362 = vpop.permute.xlu0 %361
    %v364 = vmul.f32 %v357, %v362
    %366 = vrot.lane.b32.xlu0 %v364, 16
    %v367 = vpop.permute.xlu0 %366
    %v369 = vadd.f32 %v359, %v367
    %v370 = vtanh.pop %v369
    %372 = vrot.lane.b32.xlu0 %v370, 32
    %v373 = vpop.permute.xlu0 %372
    %v375 = vmul.f32 %v357, %v373
    %377 = vrot.lane.b32.xlu0 %v375, 80
    %v378 = vpop.permute.xlu0 %377
    %s380 = scalar_lea.vmem [#allocation3], 2
    %381 = vst.msk [vmem:[%s380] sm:$0x3] %vm300, %v378
    %s382 = scalar_lea.vmem [#allocation2], 4
    %v383 = vld [vmem:[%s382] sm:$0x3]
    %v384 = vpack.c.bf16 %v375, %v375
    %386 = vrot.lane.b32.xlu0 %v384, 80
    %v387 = vpop.permute.xlu0 %386
    %v389 = vsel %vm126, %v387, 0
    %391 = vmatprep.subr.bf16.mxu0 0
    %392 = vmatpush1.bf16.msra.mxu0 0
    %393 = vmatprep.subr.bf16.mxu0 0
    %394 = vmatpush1.bf16.msra.mxu0 0
    %395 = vmatprep.subr.bf16.mxu0 0
    %396 = vmatpush1.bf16.msra.mxu0 0
    %397 = vmatprep.subr.bf16.mxu0 0
    %398 = vmatpush1.bf16.msra.mxu0 0
    %399 = vmatprep.subr.bf16.mxu0 0
    %400 = vmatpush1.bf16.msra.mxu0 0
    %401 = vmatprep.subr.bf16.mxu0 0
    %402 = vmatpush1.bf16.msra.mxu0 0
    %403 = vmatprep.subr.bf16.mxu0 0
    %404 = vmatpush1.bf16.msra.mxu0 0
    %405 = vmatprep.subr.bf16.mxu0 0
    %406 = vmatpush1.bf16.msra.mxu0 %v226
    %407 = vmatprep.subr.bf16.mxu0 0
    %408 = vmatpush2.bf16.msra.mxu0 0
    %409 = vmatprep.subr.bf16.mxu0 0
    %410 = vmatpush2.bf16.msra.mxu0 0
    %411 = vmatprep.subr.bf16.mxu0 0
    %412 = vmatpush2.bf16.msra.mxu0 0
    %413 = vmatprep.subr.bf16.mxu0 0
    %414 = vmatpush2.bf16.msra.mxu0 0
    %415 = vmatprep.subr.bf16.mxu0 0
    %416 = vmatpush2.bf16.msra.mxu0 0
    %417 = vmatprep.subr.bf16.mxu0 0
    %418 = vmatpush2.bf16.msra.mxu0 0
    %419 = vmatprep.subr.bf16.mxu0 0
    %420 = vmatpush2.bf16.msra.mxu0 0
    %421 = vmatprep.subr.bf16.mxu0 0
    %422 = vmatpush2.bf16.msra.mxu0 0
    %423 = vmatprep.mubr.bf16.mxu0 0
    %424 = vmatmul.mubr.bf16.gmra.mxu0 %v389
    %v425 = vpop.f32.mrf.mxu0
    %v426 = vadd.f32 0.0, %v425
    %v427 = vpop.f32.mrf.mxu0
    %v428 = vpop.f32.mrf.mxu0
    %v429 = vpop.f32.mrf.mxu0
    %430 = vdwg.mxu0
    %v431 = vadd.f32 %v383, %v426
    %v432 = vxor.u32 %v431, 2147483648
    %v433 = vmul.f32 %v432, 1.442695
    %v434 = vpow.pop %v433
    %v435 = vadd.f32 %v434, 1.0
    %v436 = vrcp.pop %v435
    %v437 = vmul.f32 1.0, %v436
    %v438 = vtanh.pop %v431
    %v439 = vmul.f32 %v437, %v369
    %441 = vrot.lane.b32.xlu0 %v438, 96
    %v442 = vpop.permute.xlu0 %441
    %v444 = vmul.f32 %v437, %v442
    %446 = vrot.lane.b32.xlu0 %v444, 16
    %v447 = vpop.permute.xlu0 %446
    %v449 = vadd.f32 %v439, %v447
    %v450 = vtanh.pop %v449
    %452 = vrot.lane.b32.xlu0 %v450, 32
    %v453 = vpop.permute.xlu0 %452
    %v455 = vmul.f32 %v437, %v453
    %457 = vrot.lane.b32.xlu0 %v455, 80
    %v458 = vpop.permute.xlu0 %457
    %s460 = scalar_lea.vmem [#allocation3], 4
    %461 = vst.msk [vmem:[%s460] sm:$0x3] %vm300, %v458
    %s462 = scalar_lea.vmem [#allocation2], 6
    %v463 = vld [vmem:[%s462] sm:$0x3]
    %v464 = vpack.c.bf16 %v455, %v455
    %466 = vrot.lane.b32.xlu0 %v464, 80
    %v467 = vpop.permute.xlu0 %466
    %v469 = vsel %vm126, %v467, 0
    %471 = vmatprep.subr.bf16.mxu0 0
    %472 = vmatpush1.bf16.msra.mxu0 0
    %473 = vmatprep.subr.bf16.mxu0 0
    %474 = vmatpush1.bf16.msra.mxu0 0
    %475 = vmatprep.subr.bf16.mxu0 0
    %476 = vmatpush1.bf16.msra.mxu0 0
    %477 = vmatprep.subr.bf16.mxu0 0
    %478 = vmatpush1.bf16.msra.mxu0 0
    %479 = vmatprep.subr.bf16.mxu0 0
    %480 = vmatpush1.bf16.msra.mxu0 0
    %481 = vmatprep.subr.bf16.mxu0 0
    %482 = vmatpush1.bf16.msra.mxu0 0
    %483 = vmatprep.subr.bf16.mxu0 0
    %484 = vmatpush1.bf16.msra.mxu0 0
    %485 = vmatprep.subr.bf16.mxu0 0
    %486 = vmatpush1.bf16.msra.mxu0 %v226
    %487 = vmatprep.subr.bf16.mxu0 0
    %488 = vmatpush2.bf16.msra.mxu0 0
    %489 = vmatprep.subr.bf16.mxu0 0
    %490 = vmatpush2.bf16.msra.mxu0 0
    %491 = vmatprep.subr.bf16.mxu0 0
    %492 = vmatpush2.bf16.msra.mxu0 0
    %493 = vmatprep.subr.bf16.mxu0 0
    %494 = vmatpush2.bf16.msra.mxu0 0
    %495 = vmatprep.subr.bf16.mxu0 0
    %496 = vmatpush2.bf16.msra.mxu0 0
    %497 = vmatprep.subr.bf16.mxu0 0
    %498 = vmatpush2.bf16.msra.mxu0 0
    %499 = vmatprep.subr.bf16.mxu0 0
    %500 = vmatpush2.bf16.msra.mxu0 0
    %501 = vmatprep.subr.bf16.mxu0 0
    %502 = vmatpush2.bf16.msra.mxu0 0
    %503 = vmatprep.mubr.bf16.mxu0 0
    %504 = vmatmul.mubr.bf16.gmra.mxu0 %v469
    %v505 = vpop.f32.mrf.mxu0
    %v506 = vadd.f32 0.0, %v505
    %v507 = vpop.f32.mrf.mxu0
    %v508 = vpop.f32.mrf.mxu0
    %v509 = vpop.f32.mrf.mxu0
    %510 = vdwg.mxu0
    %v511 = vadd.f32 %v463, %v506
    %v512 = vxor.u32 %v511, 2147483648
    %v513 = vmul.f32 %v512, 1.442695
    %v514 = vpow.pop %v513
    %v515 = vadd.f32 %v514, 1.0
    %v516 = vrcp.pop %v515
    %v517 = vmul.f32 1.0, %v516
    %v518 = vtanh.pop %v511
    %v519 = vmul.f32 %v517, %v449
    %521 = vrot.lane.b32.xlu0 %v518, 96
    %v522 = vpop.permute.xlu0 %521
    %v524 = vmul.f32 %v517, %v522
    %526 = vrot.lane.b32.xlu0 %v524, 16
    %v527 = vpop.permute.xlu0 %526
    %v529 = vadd.f32 %v519, %v527
    %v530 = vtanh.pop %v529
    %532 = vrot.lane.b32.xlu0 %v530, 32
    %v533 = vpop.permute.xlu0 %532
    %v535 = vmul.f32 %v517, %v533
    %537 = vrot.lane.b32.xlu0 %v535, 80
    %v538 = vpop.permute.xlu0 %537
    %s540 = scalar_lea.vmem [#allocation3], 6
    %541 = vst.msk [vmem:[%s540] sm:$0x3] %vm300, %v538
    %s542 = scalar_lea.vmem [#allocation2], 8
    %v543 = vld [vmem:[%s542] sm:$0x3]
    %v544 = vpack.c.bf16 %v535, %v535
    %546 = vrot.lane.b32.xlu0 %v544, 80
    %v547 = vpop.permute.xlu0 %546
    %v549 = vsel %vm126, %v547, 0
    %551 = vmatprep.subr.bf16.mxu0 0
    %552 = vmatpush1.bf16.msra.mxu0 0
    %553 = vmatprep.subr.bf16.mxu0 0
    %554 = vmatpush1.bf16.msra.mxu0 0
    %555 = vmatprep.subr.bf16.mxu0 0
    %556 = vmatpush1.bf16.msra.mxu0 0
    %557 = vmatprep.subr.bf16.mxu0 0
    %558 = vmatpush1.bf16.msra.mxu0 0
    %559 = vmatprep.subr.bf16.mxu0 0
    %560 = vmatpush1.bf16.msra.mxu0 0
    %561 = vmatprep.subr.bf16.mxu0 0
    %562 = vmatpush1.bf16.msra.mxu0 0
    %563 = vmatprep.subr.bf16.mxu0 0
    %564 = vmatpush1.bf16.msra.mxu0 0
    %565 = vmatprep.subr.bf16.mxu0 0
    %566 = vmatpush1.bf16.msra.mxu0 %v226
    %567 = vmatprep.subr.bf16.mxu0 0
    %568 = vmatpush2.bf16.msra.mxu0 0
    %569 = vmatprep.subr.bf16.mxu0 0
    %570 = vmatpush2.bf16.msra.mxu0 0
    %571 = vmatprep.subr.bf16.mxu0 0
    %572 = vmatpush2.bf16.msra.mxu0 0
    %573 = vmatprep.subr.bf16.mxu0 0
    %574 = vmatpush2.bf16.msra.mxu0 0
    %575 = vmatprep.subr.bf16.mxu0 0
    %576 = vmatpush2.bf16.msra.mxu0 0
    %577 = vmatprep.subr.bf16.mxu0 0
    %578 = vmatpush2.bf16.msra.mxu0 0
    %579 = vmatprep.subr.bf16.mxu0 0
    %580 = vmatpush2.bf16.msra.mxu0 0
    %581 = vmatprep.subr.bf16.mxu0 0
    %582 = vmatpush2.bf16.msra.mxu0 0
    %583 = vmatprep.mubr.bf16.mxu0 0
    %584 = vmatmul.mubr.bf16.gmra.mxu0 %v549
    %v585 = vpop.f32.mrf.mxu0
    %v586 = vadd.f32 0.0, %v585
    %v587 = vpop.f32.mrf.mxu0
    %v588 = vpop.f32.mrf.mxu0
    %v589 = vpop.f32.mrf.mxu0
    %590 = vdwg.mxu0
    %v591 = vadd.f32 %v543, %v586
    %v592 = vxor.u32 %v591, 2147483648
    %v593 = vmul.f32 %v592, 1.442695
    %v594 = vpow.pop %v593
    %v595 = vadd.f32 %v594, 1.0
    %v596 = vrcp.pop %v595
    %v597 = vmul.f32 1.0, %v596
    %v598 = vtanh.pop %v591
    %v599 = vmul.f32 %v597, %v529
    %601 = vrot.lane.b32.xlu0 %v598, 96
    %v602 = vpop.permute.xlu0 %601
    %v604 = vmul.f32 %v597, %v602
    %606 = vrot.lane.b32.xlu0 %v604, 16
    %v607 = vpop.permute.xlu0 %606
    %v609 = vadd.f32 %v599, %v607
    %v610 = vtanh.pop %v609
    %612 = vrot.lane.b32.xlu0 %v610, 32
    %v613 = vpop.permute.xlu0 %612
    %v615 = vmul.f32 %v597, %v613
    %617 = vrot.lane.b32.xlu0 %v615, 80
    %v618 = vpop.permute.xlu0 %617
    %s620 = scalar_lea.vmem [#allocation3], 8
    %621 = vst.msk [vmem:[%s620] sm:$0x3] %vm300, %v618
    %s622 = scalar_lea.vmem [#allocation2], 10
    %v623 = vld [vmem:[%s622] sm:$0x3]
    %v624 = vpack.c.bf16 %v615, %v615
    %626 = vrot.lane.b32.xlu0 %v624, 80
    %v627 = vpop.permute.xlu0 %626
    %v629 = vsel %vm126, %v627, 0
    %631 = vmatprep.subr.bf16.mxu0 0
    %632 = vmatpush1.bf16.msra.mxu0 0
    %633 = vmatprep.subr.bf16.mxu0 0
    %634 = vmatpush1.bf16.msra.mxu0 0
    %635 = vmatprep.subr.bf16.mxu0 0
    %636 = vmatpush1.bf16.msra.mxu0 0
    %637 = vmatprep.subr.bf16.mxu0 0
    %638 = vmatpush1.bf16.msra.mxu0 0
    %639 = vmatprep.subr.bf16.mxu0 0
    %640 = vmatpush1.bf16.msra.mxu0 0
    %641 = vmatprep.subr.bf16.mxu0 0
    %642 = vmatpush1.bf16.msra.mxu0 0
    %643 = vmatprep.subr.bf16.mxu0 0
    %644 = vmatpush1.bf16.msra.mxu0 0
    %645 = vmatprep.subr.bf16.mxu0 0
    %646 = vmatpush1.bf16.msra.mxu0 %v226
    %647 = vmatprep.subr.bf16.mxu0 0
    %648 = vmatpush2.bf16.msra.mxu0 0
    %649 = vmatprep.subr.bf16.mxu0 0
    %650 = vmatpush2.bf16.msra.mxu0 0
    %651 = vmatprep.subr.bf16.mxu0 0
    %652 = vmatpush2.bf16.msra.mxu0 0
    %653 = vmatprep.subr.bf16.mxu0 0
    %654 = vmatpush2.bf16.msra.mxu0 0
    %655 = vmatprep.subr.bf16.mxu0 0
    %656 = vmatpush2.bf16.msra.mxu0 0
    %657 = vmatprep.subr.bf16.mxu0 0
    %658 = vmatpush2.bf16.msra.mxu0 0
    %659 = vmatprep.subr.bf16.mxu0 0
    %660 = vmatpush2.bf16.msra.mxu0 0
    %661 = vmatprep.subr.bf16.mxu0 0
    %662 = vmatpush2.bf16.msra.mxu0 0
    %663 = vmatprep.mubr.bf16.mxu0 0
    %664 = vmatmul.mubr.bf16.gmra.mxu0 %v629
    %v665 = vpop.f32.mrf.mxu0
    %v666 = vadd.f32 0.0, %v665
    %v667 = vpop.f32.mrf.mxu0
    %v668 = vpop.f32.mrf.mxu0
    %v669 = vpop.f32.mrf.mxu0
    %670 = vdwg.mxu0
    %v671 = vadd.f32 %v623, %v666
    %v672 = vxor.u32 %v671, 2147483648
    %v673 = vmul.f32 %v672, 1.442695
    %v674 = vpow.pop %v673
    %v675 = vadd.f32 %v674, 1.0
    %v676 = vrcp.pop %v675
    %v677 = vmul.f32 1.0, %v676
    %v678 = vtanh.pop %v671
    %v679 = vmul.f32 %v677, %v609
    %681 = vrot.lane.b32.xlu0 %v678, 96
    %v682 = vpop.permute.xlu0 %681
    %v684 = vmul.f32 %v677, %v682
    %686 = vrot.lane.b32.xlu0 %v684, 16
    %v687 = vpop.permute.xlu0 %686
    %v689 = vadd.f32 %v679, %v687
    %v690 = vtanh.pop %v689
    %692 = vrot.lane.b32.xlu0 %v690, 32
    %v693 = vpop.permute.xlu0 %692
    %v695 = vmul.f32 %v677, %v693
    %697 = vrot.lane.b32.xlu0 %v695, 80
    %v698 = vpop.permute.xlu0 %697
    %s700 = scalar_lea.vmem [#allocation3], 10
    %701 = vst.msk [vmem:[%s700] sm:$0x3] %vm300, %v698
    %s702 = scalar_lea.vmem [#allocation2], 12
    %v703 = vld [vmem:[%s702] sm:$0x3]
    %v704 = vpack.c.bf16 %v695, %v695
    %706 = vrot.lane.b32.xlu0 %v704, 80
    %v707 = vpop.permute.xlu0 %706
    %v709 = vsel %vm126, %v707, 0
    %711 = vmatprep.subr.bf16.mxu0 0
    %712 = vmatpush1.bf16.msra.mxu0 0
    %713 = vmatprep.subr.bf16.mxu0 0
    %714 = vmatpush1.bf16.msra.mxu0 0
    %715 = vmatprep.subr.bf16.mxu0 0
    %716 = vmatpush1.bf16.msra.mxu0 0
    %717 = vmatprep.subr.bf16.mxu0 0
    %718 = vmatpush1.bf16.msra.mxu0 0
    %719 = vmatprep.subr.bf16.mxu0 0
    %720 = vmatpush1.bf16.msra.mxu0 0
    %721 = vmatprep.subr.bf16.mxu0 0
    %722 = vmatpush1.bf16.msra.mxu0 0
    %723 = vmatprep.subr.bf16.mxu0 0
    %724 = vmatpush1.bf16.msra.mxu0 0
    %725 = vmatprep.subr.bf16.mxu0 0
    %726 = vmatpush1.bf16.msra.mxu0 %v226
    %727 = vmatprep.subr.bf16.mxu0 0
    %728 = vmatpush2.bf16.msra.mxu0 0
    %729 = vmatprep.subr.bf16.mxu0 0
    %730 = vmatpush2.bf16.msra.mxu0 0
    %731 = vmatprep.subr.bf16.mxu0 0
    %732 = vmatpush2.bf16.msra.mxu0 0
    %733 = vmatprep.subr.bf16.mxu0 0
    %734 = vmatpush2.bf16.msra.mxu0 0
    %735 = vmatprep.subr.bf16.mxu0 0
    %736 = vmatpush2.bf16.msra.mxu0 0
    %737 = vmatprep.subr.bf16.mxu0 0
    %738 = vmatpush2.bf16.msra.mxu0 0
    %739 = vmatprep.subr.bf16.mxu0 0
    %740 = vmatpush2.bf16.msra.mxu0 0
    %741 = vmatprep.subr.bf16.mxu0 0
    %742 = vmatpush2.bf16.msra.mxu0 0
    %743 = vmatprep.mubr.bf16.mxu0 0
    %744 = vmatmul.mubr.bf16.gmra.mxu0 %v709
    %v745 = vpop.f32.mrf.mxu0
    %v746 = vadd.f32 0.0, %v745
    %v747 = vpop.f32.mrf.mxu0
    %v748 = vpop.f32.mrf.mxu0
    %v749 = vpop.f32.mrf.mxu0
    %750 = vdwg.mxu0
    %v751 = vadd.f32 %v703, %v746
    %v752 = vxor.u32 %v751, 2147483648
    %v753 = vmul.f32 %v752, 1.442695
    %v754 = vpow.pop %v753
    %v755 = vadd.f32 %v754, 1.0
    %v756 = vrcp.pop %v755
    %v757 = vmul.f32 1.0, %v756
    %v758 = vtanh.pop %v751
    %v759 = vmul.f32 %v757, %v689
    %761 = vrot.lane.b32.xlu0 %v758, 96
    %v762 = vpop.permute.xlu0 %761
    %v764 = vmul.f32 %v757, %v762
    %766 = vrot.lane.b32.xlu0 %v764, 16
    %v767 = vpop.permute.xlu0 %766
    %v769 = vadd.f32 %v759, %v767
    %v770 = vtanh.pop %v769
    %772 = vrot.lane.b32.xlu0 %v770, 32
    %v773 = vpop.permute.xlu0 %772
    %v775 = vmul.f32 %v757, %v773
    %777 = vrot.lane.b32.xlu0 %v775, 80
    %v778 = vpop.permute.xlu0 %777
    %s780 = scalar_lea.vmem [#allocation3], 12
    %781 = vst.msk [vmem:[%s780] sm:$0x3] %vm300, %v778
    %s782 = scalar_lea.vmem [#allocation2], 14
    %v783 = vld [vmem:[%s782] sm:$0x3]
    %v784 = vpack.c.bf16 %v775, %v775
    %786 = vrot.lane.b32.xlu0 %v784, 80
    %v787 = vpop.permute.xlu0 %786
    %v789 = vsel %vm126, %v787, 0
    %791 = vmatprep.subr.bf16.mxu0 0
    %792 = vmatpush1.bf16.msra.mxu0 0
    %793 = vmatprep.subr.bf16.mxu0 0
    %794 = vmatpush1.bf16.msra.mxu0 0
    %795 = vmatprep.subr.bf16.mxu0 0
    %796 = vmatpush1.bf16.msra.mxu0 0
    %797 = vmatprep.subr.bf16.mxu0 0
    %798 = vmatpush1.bf16.msra.mxu0 0
    %799 = vmatprep.subr.bf16.mxu0 0
    %800 = vmatpush1.bf16.msra.mxu0 0
    %801 = vmatprep.subr.bf16.mxu0 0
    %802 = vmatpush1.bf16.msra.mxu0 0
    %803 = vmatprep.subr.bf16.mxu0 0
    %804 = vmatpush1.bf16.msra.mxu0 0
    %805 = vmatprep.subr.bf16.mxu0 0
    %806 = vmatpush1.bf16.msra.mxu0 %v226
    %807 = vmatprep.subr.bf16.mxu0 0
    %808 = vmatpush2.bf16.msra.mxu0 0
    %809 = vmatprep.subr.bf16.mxu0 0
    %810 = vmatpush2.bf16.msra.mxu0 0
    %811 = vmatprep.subr.bf16.mxu0 0
    %812 = vmatpush2.bf16.msra.mxu0 0
    %813 = vmatprep.subr.bf16.mxu0 0
    %814 = vmatpush2.bf16.msra.mxu0 0
    %815 = vmatprep.subr.bf16.mxu0 0
    %816 = vmatpush2.bf16.msra.mxu0 0
    %817 = vmatprep.subr.bf16.mxu0 0
    %818 = vmatpush2.bf16.msra.mxu0 0
    %819 = vmatprep.subr.bf16.mxu0 0
    %820 = vmatpush2.bf16.msra.mxu0 0
    %821 = vmatprep.subr.bf16.mxu0 0
    %822 = vmatpush2.bf16.msra.mxu0 0
    %823 = vmatprep.mubr.bf16.mxu0 0
    %824 = vmatmul.mubr.bf16.gmra.mxu0 %v789
    %v825 = vpop.f32.mrf.mxu0
    %v826 = vadd.f32 0.0, %v825
    %v827 = vpop.f32.mrf.mxu0
    %v828 = vpop.f32.mrf.mxu0
    %v829 = vpop.f32.mrf.mxu0
    %830 = vdwg.mxu0
    %v831 = vadd.f32 %v783, %v826
    %v832 = vxor.u32 %v831, 2147483648
    %v833 = vmul.f32 %v832, 1.442695
    %v834 = vpow.pop %v833
    %v835 = vadd.f32 %v834, 1.0
    %v836 = vrcp.pop %v835
    %v837 = vmul.f32 1.0, %v836
    %v838 = vtanh.pop %v831
    %v839 = vmul.f32 %v837, %v769
    %841 = vrot.lane.b32.xlu0 %v838, 96
    %v842 = vpop.permute.xlu0 %841
    %v844 = vmul.f32 %v837, %v842
    %846 = vrot.lane.b32.xlu0 %v844, 16
    %v847 = vpop.permute.xlu0 %846
    %v849 = vadd.f32 %v839, %v847
    %v850 = vtanh.pop %v849
    %852 = vrot.lane.b32.xlu0 %v850, 32
    %v853 = vpop.permute.xlu0 %852
    %v855 = vmul.f32 %v837, %v853
    %857 = vrot.lane.b32.xlu0 %v855, 80
    %v858 = vpop.permute.xlu0 %857
    %s860 = scalar_lea.vmem [#allocation3], 14
    %861 = vst.msk [vmem:[%s860] sm:$0x3] %vm300, %v858
    %v862 = vld [vmem:[#allocation3] sm:$0x3]
    %v863 = vld [vmem:[#allocation3 + $0x2] sm:$0x3]
    %v864 = vld [vmem:[#allocation3 + $0x4] sm:$0x3]
    %v865 = vld [vmem:[#allocation3 + $0x6] sm:$0x3]
    %v866 = vld [vmem:[#allocation3 + $0x8] sm:$0x3]
    %v867 = vld [vmem:[#allocation3 + $0xa] sm:$0x3]
    %v868 = vld [vmem:[#allocation3 + $0xc] sm:$0x3]
    %v869 = vld [vmem:[#allocation3 + $0xe] sm:$0x3]
    %v870 = vcombine.low %v862, %v864
    %v872 = vunpack.c.l.s4 1983009808
    %v873 = vunpack.c.0.s8 %v872
    %v874 = vlaneseq
    %v875 = vshrl.u32 %v874, 7
    %v876 = vsub.s32 %v873, %v875
    %v877 = vrot.slane %v870, %v876
    %v878 = vcombine.low %v863, %v865
    %v880 = vunpack.c.l.s4 1983009808
    %v881 = vunpack.c.0.s8 %v880
    %v882 = vlaneseq
    %v883 = vshrl.u32 %v882, 7
    %v884 = vsub.s32 %v881, %v883
    %v885 = vrot.slane %v878, %v884
    %v886 = vcombine.low %v866, %v868
    %v888 = vunpack.c.l.s4 1983009808
    %v889 = vunpack.c.0.s8 %v888
    %v890 = vlaneseq
    %v891 = vshrl.u32 %v890, 7
    %v892 = vsub.s32 %v889, %v891
    %v893 = vrot.slane %v886, %v892
    %v894 = vcombine.low %v867, %v869
    %v896 = vunpack.c.l.s4 1983009808
    %v897 = vunpack.c.0.s8 %v896
    %v898 = vlaneseq
    %v899 = vshrl.u32 %v898, 7
    %v900 = vsub.s32 %v897, %v899
    %v901 = vrot.slane %v894, %v900
    %v902 = vcombine.low %v877, %v885
    %v904 = vunpack.c.l.s4 1934713408
    %v905 = vunpack.c.0.s8 %v904
    %v906 = vlaneseq
    %v907 = vshrl.u32 %v906, 7
    %v908 = vsub.s32 %v905, %v907
    %v909 = vrot.slane %v902, %v908
    %v910 = vcombine.low %v893, %v901
    %v912 = vunpack.c.l.s4 1934713408
    %v913 = vunpack.c.0.s8 %v912
    %v914 = vlaneseq
    %v915 = vshrl.u32 %v914, 7
    %v916 = vsub.s32 %v913, %v915
    %v917 = vrot.slane %v910, %v916
    %v918 = vcombine.low %v909, %v917
    %v919 = vcombine.high %v909, %v917
    %v920 = vpack.c.bf16 %v919, %v918
    %v921 = vlaneseq
    %v922 = vshrl.u32 %v921, 7
    %v923 = vsub.s32 1, %v922
    %v924 = vrot.slane %v61, %v923
    %v927 = vunpack.c.l.b16 %v59
    %v928 = vunpack.c.l.b16 %v60
    %v929 = vpack.c.b16 %v928, %v927
    %v932 = vsel %vm126, %v920, 0
    %934 = vmatprep.subr.bf16.mxu0 0
    %935 = vmatpush1.bf16.msra.mxu0 0
    %936 = vmatprep.subr.bf16.mxu0 0
    %937 = vmatpush1.bf16.msra.mxu0 0
    %938 = vmatprep.subr.bf16.mxu0 0
    %939 = vmatpush1.bf16.msra.mxu0 0
    %940 = vmatprep.subr.bf16.mxu0 0
    %941 = vmatpush1.bf16.msra.mxu0 0
    %942 = vmatprep.subr.bf16.mxu0 0
    %943 = vmatpush1.bf16.msra.mxu0 0
    %944 = vmatprep.subr.bf16.mxu0 0
    %945 = vmatpush1.bf16.msra.mxu0 0
    %946 = vmatprep.subr.bf16.mxu0 0
    %947 = vmatpush1.bf16.msra.mxu0 0
    %948 = vmatprep.subr.bf16.mxu0 0
    %949 = vmatpush1.bf16.msra.mxu0 %v929
    %950 = vmatprep.subr.bf16.mxu0 0
    %951 = vmatpush2.bf16.msra.mxu0 0
    %952 = vmatprep.subr.bf16.mxu0 0
    %953 = vmatpush2.bf16.msra.mxu0 0
    %954 = vmatprep.subr.bf16.mxu0 0
    %955 = vmatpush2.bf16.msra.mxu0 0
    %956 = vmatprep.subr.bf16.mxu0 0
    %957 = vmatpush2.bf16.msra.mxu0 0
    %958 = vmatprep.subr.bf16.mxu0 0
    %959 = vmatpush2.bf16.msra.mxu0 0
    %960 = vmatprep.subr.bf16.mxu0 0
    %961 = vmatpush2.bf16.msra.mxu0 0
    %962 = vmatprep.subr.bf16.mxu0 0
    %963 = vmatpush2.bf16.msra.mxu0 0
    %964 = vmatprep.subr.bf16.mxu0 0
    %965 = vmatpush2.bf16.msra.mxu0 0
    %966 = vmatprep.mubr.bf16.mxu0 0
    %967 = vmatmul.mubr.bf16.gmra.mxu0 %v932
    %v968 = vpop.f32.mrf.mxu0
    %v969 = vadd.f32 %v924, %v968
    %v970 = vpop.f32.mrf.mxu0
    %v971 = vpop.f32.mrf.mxu0
    %v972 = vadd.f32 %v924, %v971
    %v973 = vpop.f32.mrf.mxu0
    %974 = vdwg.mxu0
    %976 = vrot.lane.b32.xlu0 %v969, 112
    %v977 = vpop.permute.xlu0 %976
    %vm978 = vcmask 31744
    %v979 = vsel %vm978, %v969, 0
    %v981 = vsel %vm978, %v977, 0
    %983 = vmatprep.subr.mxu0 0.0
    %984 = vmatpush1.xpose.msra.mxu0 0.0
    %985 = vmatprep.subr.mxu0 0.0
    %986 = vmatpush1.xpose.msra.mxu0 0.0
    %987 = vmatprep.subr.mxu0 0.0
    %988 = vmatpush1.xpose.msra.mxu0 0.0
    %989 = vmatprep.subr.mxu0 0.0
    %990 = vmatpush1.xpose.msra.mxu0 0.0
    %991 = vmatprep.subr.mxu0 0.0
    %992 = vmatpush1.xpose.msra.mxu0 0.0
    %993 = vmatprep.subr.mxu0 0.0
    %994 = vmatpush1.xpose.msra.mxu0 0.0
    %995 = vmatprep.subr.mxu0 0.0
    %996 = vmatpush1.xpose.msra.mxu0 0.0
    %997 = vmatprep.subr.mxu0 0.0
    %998 = vmatpush1.xpose.msra.mxu0 0.0
    %999 = vmatprep.subr.mxu0 0.0
    %1000 = vmatpush1.xpose.msra.mxu0 0.0
    %1001 = vmatprep.subr.mxu0 0.0
    %1002 = vmatpush1.xpose.msra.mxu0 0.0
    %1003 = vmatprep.subr.mxu0 0.0
    %1004 = vmatpush1.xpose.msra.mxu0 0.0
    %1005 = vmatprep.subr.mxu0 0.0
    %1006 = vmatpush1.xpose.msra.mxu0 0.0
    %1007 = vmatprep.subr.mxu0 0.0
    %1008 = vmatpush1.xpose.msra.mxu0 0.0
    %1009 = vmatprep.subr.mxu0 0.0
    %1010 = vmatpush1.xpose.msra.mxu0 0.0
    %1011 = vmatprep.subr.mxu0 0.0
    %1012 = vmatpush1.xpose.msra.mxu0 0.0
    %1013 = vmatprep.subr.mxu0 0.0
    %1014 = vmatpush1.xpose.msra.mxu0 %v981
    %1015 = vmatprep.subr.mxu0 0.0
    %1016 = vmatpush2.xpose.msra.mxu0 0.0
    %1017 = vmatprep.subr.mxu0 0.0
    %1018 = vmatpush2.xpose.msra.mxu0 0.0
    %1019 = vmatprep.subr.mxu0 0.0
    %1020 = vmatpush2.xpose.msra.mxu0 0.0
    %1021 = vmatprep.subr.mxu0 0.0
    %1022 = vmatpush2.xpose.msra.mxu0 0.0
    %1023 = vmatprep.subr.mxu0 0.0
    %1024 = vmatpush2.xpose.msra.mxu0 0.0
    %1025 = vmatprep.subr.mxu0 0.0
    %1026 = vmatpush2.xpose.msra.mxu0 0.0
    %1027 = vmatprep.subr.mxu0 0.0
    %1028 = vmatpush2.xpose.msra.mxu0 0.0
    %1029 = vmatprep.subr.mxu0 0.0
    %1030 = vmatpush2.xpose.msra.mxu0 0.0
    %1031 = vmatprep.subr.mxu0 0.0
    %1032 = vmatpush2.xpose.msra.mxu0 0.0
    %1033 = vmatprep.subr.mxu0 0.0
    %1034 = vmatpush2.xpose.msra.mxu0 0.0
    %1035 = vmatprep.subr.mxu0 0.0
    %1036 = vmatpush2.xpose.msra.mxu0 0.0
    %1037 = vmatprep.subr.mxu0 0.0
    %1038 = vmatpush2.xpose.msra.mxu0 0.0
    %1039 = vmatprep.subr.mxu0 0.0
    %1040 = vmatpush2.xpose.msra.mxu0 0.0
    %1041 = vmatprep.subr.mxu0 0.0
    %1042 = vmatpush2.xpose.msra.mxu0 0.0
    %1043 = vmatprep.subr.mxu0 0.0
    %1044 = vmatpush2.xpose.msra.mxu0 0.0
    %1045 = vmatprep.subr.mxu0 0.0
    %1046 = vmatpush2.xpose.msra.mxu0 0.0
    %1047 = vmatprep.mubr.f32.mxu0 0.0
    %1048 = vmatmul.mubr.f32.gmra.mxu0 %v979
    %v1049 = vpop.f32.mrf.mxu0
    %v1050 = vadd.f32 0.0, %v1049
    %v1051 = vpop.f32.mrf.mxu0
    %1052 = vdwg.mxu0
    %1054 = vrot.lane.b32.xlu0 %v972, 112
    %v1055 = vpop.permute.xlu0 %1054
    %v1056 = vsel %vm978, %v972, 0
    %v1058 = vsel %vm978, %v1055, 0
    %1060 = vmatprep.subr.mxu0 0.0
    %1061 = vmatpush1.xpose.msra.mxu0 0.0
    %1062 = vmatprep.subr.mxu0 0.0
    %1063 = vmatpush1.xpose.msra.mxu0 0.0
    %1064 = vmatprep.subr.mxu0 0.0
    %1065 = vmatpush1.xpose.msra.mxu0 0.0
    %1066 = vmatprep.subr.mxu0 0.0
    %1067 = vmatpush1.xpose.msra.mxu0 0.0
    %1068 = vmatprep.subr.mxu0 0.0
    %1069 = vmatpush1.xpose.msra.mxu0 0.0
    %1070 = vmatprep.subr.mxu0 0.0
    %1071 = vmatpush1.xpose.msra.mxu0 0.0
    %1072 = vmatprep.subr.mxu0 0.0
    %1073 = vmatpush1.xpose.msra.mxu0 0.0
    %1074 = vmatprep.subr.mxu0 0.0
    %1075 = vmatpush1.xpose.msra.mxu0 0.0
    %1076 = vmatprep.subr.mxu0 0.0
    %1077 = vmatpush1.xpose.msra.mxu0 0.0
    %1078 = vmatprep.subr.mxu0 0.0
    %1079 = vmatpush1.xpose.msra.mxu0 0.0
    %1080 = vmatprep.subr.mxu0 0.0
    %1081 = vmatpush1.xpose.msra.mxu0 0.0
    %1082 = vmatprep.subr.mxu0 0.0
    %1083 = vmatpush1.xpose.msra.mxu0 0.0
    %1084 = vmatprep.subr.mxu0 0.0
    %1085 = vmatpush1.xpose.msra.mxu0 0.0
    %1086 = vmatprep.subr.mxu0 0.0
    %1087 = vmatpush1.xpose.msra.mxu0 0.0
    %1088 = vmatprep.subr.mxu0 0.0
    %1089 = vmatpush1.xpose.msra.mxu0 0.0
    %1090 = vmatprep.subr.mxu0 0.0
    %1091 = vmatpush1.xpose.msra.mxu0 %v1058
    %1092 = vmatprep.subr.mxu0 0.0
    %1093 = vmatpush2.xpose.msra.mxu0 0.0
    %1094 = vmatprep.subr.mxu0 0.0
    %1095 = vmatpush2.xpose.msra.mxu0 0.0
    %1096 = vmatprep.subr.mxu0 0.0
    %1097 = vmatpush2.xpose.msra.mxu0 0.0
    %1098 = vmatprep.subr.mxu0 0.0
    %1099 = vmatpush2.xpose.msra.mxu0 0.0
    %1100 = vmatprep.subr.mxu0 0.0
    %1101 = vmatpush2.xpose.msra.mxu0 0.0
    %1102 = vmatprep.subr.mxu0 0.0
    %1103 = vmatpush2.xpose.msra.mxu0 0.0
    %1104 = vmatprep.subr.mxu0 0.0
    %1105 = vmatpush2.xpose.msra.mxu0 0.0
    %1106 = vmatprep.subr.mxu0 0.0
    %1107 = vmatpush2.xpose.msra.mxu0 0.0
    %1108 = vmatprep.subr.mxu0 0.0
    %1109 = vmatpush2.xpose.msra.mxu0 0.0
    %1110 = vmatprep.subr.mxu0 0.0
    %1111 = vmatpush2.xpose.msra.mxu0 0.0
    %1112 = vmatprep.subr.mxu0 0.0
    %1113 = vmatpush2.xpose.msra.mxu0 0.0
    %1114 = vmatprep.subr.mxu0 0.0
    %1115 = vmatpush2.xpose.msra.mxu0 0.0
    %1116 = vmatprep.subr.mxu0 0.0
    %1117 = vmatpush2.xpose.msra.mxu0 0.0
    %1118 = vmatprep.subr.mxu0 0.0
    %1119 = vmatpush2.xpose.msra.mxu0 0.0
    %1120 = vmatprep.subr.mxu0 0.0
    %1121 = vmatpush2.xpose.msra.mxu0 0.0
    %1122 = vmatprep.subr.mxu0 0.0
    %1123 = vmatpush2.xpose.msra.mxu0 0.0
    %1124 = vmatprep.mubr.f32.mxu0 0.0
    %1125 = vmatmul.mubr.f32.gmra.mxu0 %v1056
    %v1126 = vpop.f32.mrf.mxu0
    %v1127 = vadd.f32 0.0, %v1126
    %v1128 = vpop.f32.mrf.mxu0
    %1129 = vdwg.mxu0
    %1130 = vrot.lane.b32.xlu0 %v969, 124
    %v1131 = vpop.permute.xlu0 %1130
    %1132 = vrot.lane.b32.xlu0 %v969, 108
    %v1133 = vpop.permute.xlu0 %1132
    %v1134 = vsel %vm978, %v1131, 0
    %v1136 = vsel %vm978, %v1133, 0
    %1138 = vmatprep.subr.mxu0 0.0
    %1139 = vmatpush1.xpose.msra.mxu0 0.0
    %1140 = vmatprep.subr.mxu0 0.0
    %1141 = vmatpush1.xpose.msra.mxu0 0.0
    %1142 = vmatprep.subr.mxu0 0.0
    %1143 = vmatpush1.xpose.msra.mxu0 0.0
    %1144 = vmatprep.subr.mxu0 0.0
    %1145 = vmatpush1.xpose.msra.mxu0 0.0
    %1146 = vmatprep.subr.mxu0 0.0
    %1147 = vmatpush1.xpose.msra.mxu0 0.0
    %1148 = vmatprep.subr.mxu0 0.0
    %1149 = vmatpush1.xpose.msra.mxu0 0.0
    %1150 = vmatprep.subr.mxu0 0.0
    %1151 = vmatpush1.xpose.msra.mxu0 0.0
    %1152 = vmatprep.subr.mxu0 0.0
    %1153 = vmatpush1.xpose.msra.mxu0 0.0
    %1154 = vmatprep.subr.mxu0 0.0
    %1155 = vmatpush1.xpose.msra.mxu0 0.0
    %1156 = vmatprep.subr.mxu0 0.0
    %1157 = vmatpush1.xpose.msra.mxu0 0.0
    %1158 = vmatprep.subr.mxu0 0.0
    %1159 = vmatpush1.xpose.msra.mxu0 0.0
    %1160 = vmatprep.subr.mxu0 0.0
    %1161 = vmatpush1.xpose.msra.mxu0 0.0
    %1162 = vmatprep.subr.mxu0 0.0
    %1163 = vmatpush1.xpose.msra.mxu0 0.0
    %1164 = vmatprep.subr.mxu0 0.0
    %1165 = vmatpush1.xpose.msra.mxu0 0.0
    %1166 = vmatprep.subr.mxu0 0.0
    %1167 = vmatpush1.xpose.msra.mxu0 0.0
    %1168 = vmatprep.subr.mxu0 0.0
    %1169 = vmatpush1.xpose.msra.mxu0 %v1136
    %1170 = vmatprep.subr.mxu0 0.0
    %1171 = vmatpush2.xpose.msra.mxu0 0.0
    %1172 = vmatprep.subr.mxu0 0.0
    %1173 = vmatpush2.xpose.msra.mxu0 0.0
    %1174 = vmatprep.subr.mxu0 0.0
    %1175 = vmatpush2.xpose.msra.mxu0 0.0
    %1176 = vmatprep.subr.mxu0 0.0
    %1177 = vmatpush2.xpose.msra.mxu0 0.0
    %1178 = vmatprep.subr.mxu0 0.0
    %1179 = vmatpush2.xpose.msra.mxu0 0.0
    %1180 = vmatprep.subr.mxu0 0.0
    %1181 = vmatpush2.xpose.msra.mxu0 0.0
    %1182 = vmatprep.subr.mxu0 0.0
    %1183 = vmatpush2.xpose.msra.mxu0 0.0
    %1184 = vmatprep.subr.mxu0 0.0
    %1185 = vmatpush2.xpose.msra.mxu0 0.0
    %1186 = vmatprep.subr.mxu0 0.0
    %1187 = vmatpush2.xpose.msra.mxu0 0.0
    %1188 = vmatprep.subr.mxu0 0.0
    %1189 = vmatpush2.xpose.msra.mxu0 0.0
    %1190 = vmatprep.subr.mxu0 0.0
    %1191 = vmatpush2.xpose.msra.mxu0 0.0
    %1192 = vmatprep.subr.mxu0 0.0
    %1193 = vmatpush2.xpose.msra.mxu0 0.0
    %1194 = vmatprep.subr.mxu0 0.0
    %1195 = vmatpush2.xpose.msra.mxu0 0.0
    %1196 = vmatprep.subr.mxu0 0.0
    %1197 = vmatpush2.xpose.msra.mxu0 0.0
    %1198 = vmatprep.subr.mxu0 0.0
    %1199 = vmatpush2.xpose.msra.mxu0 0.0
    %1200 = vmatprep.subr.mxu0 0.0
    %1201 = vmatpush2.xpose.msra.mxu0 0.0
    %1202 = vmatprep.mubr.f32.mxu0 0.0
    %1203 = vmatmul.mubr.f32.gmra.mxu0 %v1134
    %v1204 = vpop.f32.mrf.mxu0
    %v1205 = vadd.f32 0.0, %v1204
    %v1206 = vpop.f32.mrf.mxu0
    %1207 = vdwg.mxu0
    %1208 = vrot.lane.b32.xlu0 %v972, 124
    %v1209 = vpop.permute.xlu0 %1208
    %1210 = vrot.lane.b32.xlu0 %v972, 108
    %v1211 = vpop.permute.xlu0 %1210
    %v1212 = vsel %vm978, %v1209, 0
    %v1214 = vsel %vm978, %v1211, 0
    %1216 = vmatprep.subr.mxu0 0.0
    %1217 = vmatpush1.xpose.msra.mxu0 0.0
    %1218 = vmatprep.subr.mxu0 0.0
    %1219 = vmatpush1.xpose.msra.mxu0 0.0
    %1220 = vmatprep.subr.mxu0 0.0
    %1221 = vmatpush1.xpose.msra.mxu0 0.0
    %1222 = vmatprep.subr.mxu0 0.0
    %1223 = vmatpush1.xpose.msra.mxu0 0.0
    %1224 = vmatprep.subr.mxu0 0.0
    %1225 = vmatpush1.xpose.msra.mxu0 0.0
    %1226 = vmatprep.subr.mxu0 0.0
    %1227 = vmatpush1.xpose.msra.mxu0 0.0
    %1228 = vmatprep.subr.mxu0 0.0
    %1229 = vmatpush1.xpose.msra.mxu0 0.0
    %1230 = vmatprep.subr.mxu0 0.0
    %1231 = vmatpush1.xpose.msra.mxu0 0.0
    %1232 = vmatprep.subr.mxu0 0.0
    %1233 = vmatpush1.xpose.msra.mxu0 0.0
    %1234 = vmatprep.subr.mxu0 0.0
    %1235 = vmatpush1.xpose.msra.mxu0 0.0
    %1236 = vmatprep.subr.mxu0 0.0
    %1237 = vmatpush1.xpose.msra.mxu0 0.0
    %1238 = vmatprep.subr.mxu0 0.0
    %1239 = vmatpush1.xpose.msra.mxu0 0.0
    %1240 = vmatprep.subr.mxu0 0.0
    %1241 = vmatpush1.xpose.msra.mxu0 0.0
    %1242 = vmatprep.subr.mxu0 0.0
    %1243 = vmatpush1.xpose.msra.mxu0 0.0
    %1244 = vmatprep.subr.mxu0 0.0
    %1245 = vmatpush1.xpose.msra.mxu0 0.0
    %1246 = vmatprep.subr.mxu0 0.0
    %1247 = vmatpush1.xpose.msra.mxu0 %v1214
    %1248 = vmatprep.subr.mxu0 0.0
    %1249 = vmatpush2.xpose.msra.mxu0 0.0
    %1250 = vmatprep.subr.mxu0 0.0
    %1251 = vmatpush2.xpose.msra.mxu0 0.0
    %1252 = vmatprep.subr.mxu0 0.0
    %1253 = vmatpush2.xpose.msra.mxu0 0.0
    %1254 = vmatprep.subr.mxu0 0.0
    %1255 = vmatpush2.xpose.msra.mxu0 0.0
    %1256 = vmatprep.subr.mxu0 0.0
    %1257 = vmatpush2.xpose.msra.mxu0 0.0
    %1258 = vmatprep.subr.mxu0 0.0
    %1259 = vmatpush2.xpose.msra.mxu0 0.0
    %1260 = vmatprep.subr.mxu0 0.0
    %1261 = vmatpush2.xpose.msra.mxu0 0.0
    %1262 = vmatprep.subr.mxu0 0.0
    %1263 = vmatpush2.xpose.msra.mxu0 0.0
    %1264 = vmatprep.subr.mxu0 0.0
    %1265 = vmatpush2.xpose.msra.mxu0 0.0
    %1266 = vmatprep.subr.mxu0 0.0
    %1267 = vmatpush2.xpose.msra.mxu0 0.0
    %1268 = vmatprep.subr.mxu0 0.0
    %1269 = vmatpush2.xpose.msra.mxu0 0.0
    %1270 = vmatprep.subr.mxu0 0.0
    %1271 = vmatpush2.xpose.msra.mxu0 0.0
    %1272 = vmatprep.subr.mxu0 0.0
    %1273 = vmatpush2.xpose.msra.mxu0 0.0
    %1274 = vmatprep.subr.mxu0 0.0
    %1275 = vmatpush2.xpose.msra.mxu0 0.0
    %1276 = vmatprep.subr.mxu0 0.0
    %1277 = vmatpush2.xpose.msra.mxu0 0.0
    %1278 = vmatprep.subr.mxu0 0.0
    %1279 = vmatpush2.xpose.msra.mxu0 0.0
    %1280 = vmatprep.mubr.f32.mxu0 0.0
    %1281 = vmatmul.mubr.f32.gmra.mxu0 %v1212
    %v1282 = vpop.f32.mrf.mxu0
    %v1283 = vadd.f32 0.0, %v1282
    %v1284 = vpop.f32.mrf.mxu0
    %1285 = vdwg.mxu0
    %1286 = vrot.lane.b32.xlu0 %v969, 120
    %v1287 = vpop.permute.xlu0 %1286
    %1288 = vrot.lane.b32.xlu0 %v969, 104
    %v1289 = vpop.permute.xlu0 %1288
    %v1290 = vsel %vm978, %v1287, 0
    %v1292 = vsel %vm978, %v1289, 0
    %1294 = vmatprep.subr.mxu0 0.0
    %1295 = vmatpush1.xpose.msra.mxu0 0.0
    %1296 = vmatprep.subr.mxu0 0.0
    %1297 = vmatpush1.xpose.msra.mxu0 0.0
    %1298 = vmatprep.subr.mxu0 0.0
    %1299 = vmatpush1.xpose.msra.mxu0 0.0
    %1300 = vmatprep.subr.mxu0 0.0
    %1301 = vmatpush1.xpose.msra.mxu0 0.0
    %1302 = vmatprep.subr.mxu0 0.0
    %1303 = vmatpush1.xpose.msra.mxu0 0.0
    %1304 = vmatprep.subr.mxu0 0.0
    %1305 = vmatpush1.xpose.msra.mxu0 0.0
    %1306 = vmatprep.subr.mxu0 0.0
    %1307 = vmatpush1.xpose.msra.mxu0 0.0
    %1308 = vmatprep.subr.mxu0 0.0
    %1309 = vmatpush1.xpose.msra.mxu0 0.0
    %1310 = vmatprep.subr.mxu0 0.0
    %1311 = vmatpush1.xpose.msra.mxu0 0.0
    %1312 = vmatprep.subr.mxu0 0.0
    %1313 = vmatpush1.xpose.msra.mxu0 0.0
    %1314 = vmatprep.subr.mxu0 0.0
    %1315 = vmatpush1.xpose.msra.mxu0 0.0
    %1316 = vmatprep.subr.mxu0 0.0
    %1317 = vmatpush1.xpose.msra.mxu0 0.0
    %1318 = vmatprep.subr.mxu0 0.0
    %1319 = vmatpush1.xpose.msra.mxu0 0.0
    %1320 = vmatprep.subr.mxu0 0.0
    %1321 = vmatpush1.xpose.msra.mxu0 0.0
    %1322 = vmatprep.subr.mxu0 0.0
    %1323 = vmatpush1.xpose.msra.mxu0 0.0
    %1324 = vmatprep.subr.mxu0 0.0
    %1325 = vmatpush1.xpose.msra.mxu0 %v1292
    %1326 = vmatprep.subr.mxu0 0.0
    %1327 = vmatpush2.xpose.msra.mxu0 0.0
    %1328 = vmatprep.subr.mxu0 0.0
    %1329 = vmatpush2.xpose.msra.mxu0 0.0
    %1330 = vmatprep.subr.mxu0 0.0
    %1331 = vmatpush2.xpose.msra.mxu0 0.0
    %1332 = vmatprep.subr.mxu0 0.0
    %1333 = vmatpush2.xpose.msra.mxu0 0.0
    %1334 = vmatprep.subr.mxu0 0.0
    %1335 = vmatpush2.xpose.msra.mxu0 0.0
    %1336 = vmatprep.subr.mxu0 0.0
    %1337 = vmatpush2.xpose.msra.mxu0 0.0
    %1338 = vmatprep.subr.mxu0 0.0
    %1339 = vmatpush2.xpose.msra.mxu0 0.0
    %1340 = vmatprep.subr.mxu0 0.0
    %1341 = vmatpush2.xpose.msra.mxu0 0.0
    %1342 = vmatprep.subr.mxu0 0.0
    %1343 = vmatpush2.xpose.msra.mxu0 0.0
    %1344 = vmatprep.subr.mxu0 0.0
    %1345 = vmatpush2.xpose.msra.mxu0 0.0
    %1346 = vmatprep.subr.mxu0 0.0
    %1347 = vmatpush2.xpose.msra.mxu0 0.0
    %1348 = vmatprep.subr.mxu0 0.0
    %1349 = vmatpush2.xpose.msra.mxu0 0.0
    %1350 = vmatprep.subr.mxu0 0.0
    %1351 = vmatpush2.xpose.msra.mxu0 0.0
    %1352 = vmatprep.subr.mxu0 0.0
    %1353 = vmatpush2.xpose.msra.mxu0 0.0
    %1354 = vmatprep.subr.mxu0 0.0
    %1355 = vmatpush2.xpose.msra.mxu0 0.0
    %1356 = vmatprep.subr.mxu0 0.0
    %1357 = vmatpush2.xpose.msra.mxu0 0.0
    %1358 = vmatprep.mubr.f32.mxu0 0.0
    %1359 = vmatmul.mubr.f32.gmra.mxu0 %v1290
    %v1360 = vpop.f32.mrf.mxu0
    %v1361 = vadd.f32 0.0, %v1360
    %v1362 = vpop.f32.mrf.mxu0
    %1363 = vdwg.mxu0
    %1364 = vrot.lane.b32.xlu0 %v972, 120
    %v1365 = vpop.permute.xlu0 %1364
    %1366 = vrot.lane.b32.xlu0 %v972, 104
    %v1367 = vpop.permute.xlu0 %1366
    %v1368 = vsel %vm978, %v1365, 0
    %v1370 = vsel %vm978, %v1367, 0
    %1372 = vmatprep.subr.mxu0 0.0
    %1373 = vmatpush1.xpose.msra.mxu0 0.0
    %1374 = vmatprep.subr.mxu0 0.0
    %1375 = vmatpush1.xpose.msra.mxu0 0.0
    %1376 = vmatprep.subr.mxu0 0.0
    %1377 = vmatpush1.xpose.msra.mxu0 0.0
    %1378 = vmatprep.subr.mxu0 0.0
    %1379 = vmatpush1.xpose.msra.mxu0 0.0
    %1380 = vmatprep.subr.mxu0 0.0
    %1381 = vmatpush1.xpose.msra.mxu0 0.0
    %1382 = vmatprep.subr.mxu0 0.0
    %1383 = vmatpush1.xpose.msra.mxu0 0.0
    %1384 = vmatprep.subr.mxu0 0.0
    %1385 = vmatpush1.xpose.msra.mxu0 0.0
    %1386 = vmatprep.subr.mxu0 0.0
    %1387 = vmatpush1.xpose.msra.mxu0 0.0
    %1388 = vmatprep.subr.mxu0 0.0
    %1389 = vmatpush1.xpose.msra.mxu0 0.0
    %1390 = vmatprep.subr.mxu0 0.0
    %1391 = vmatpush1.xpose.msra.mxu0 0.0
    %1392 = vmatprep.subr.mxu0 0.0
    %1393 = vmatpush1.xpose.msra.mxu0 0.0
    %1394 = vmatprep.subr.mxu0 0.0
    %1395 = vmatpush1.xpose.msra.mxu0 0.0
    %1396 = vmatprep.subr.mxu0 0.0
    %1397 = vmatpush1.xpose.msra.mxu0 0.0
    %1398 = vmatprep.subr.mxu0 0.0
    %1399 = vmatpush1.xpose.msra.mxu0 0.0
    %1400 = vmatprep.subr.mxu0 0.0
    %1401 = vmatpush1.xpose.msra.mxu0 0.0
    %1402 = vmatprep.subr.mxu0 0.0
    %1403 = vmatpush1.xpose.msra.mxu0 %v1370
    %1404 = vmatprep.subr.mxu0 0.0
    %1405 = vmatpush2.xpose.msra.mxu0 0.0
    %1406 = vmatprep.subr.mxu0 0.0
    %1407 = vmatpush2.xpose.msra.mxu0 0.0
    %1408 = vmatprep.subr.mxu0 0.0
    %1409 = vmatpush2.xpose.msra.mxu0 0.0
    %1410 = vmatprep.subr.mxu0 0.0
    %1411 = vmatpush2.xpose.msra.mxu0 0.0
    %1412 = vmatprep.subr.mxu0 0.0
    %1413 = vmatpush2.xpose.msra.mxu0 0.0
    %1414 = vmatprep.subr.mxu0 0.0
    %1415 = vmatpush2.xpose.msra.mxu0 0.0
    %1416 = vmatprep.subr.mxu0 0.0
    %1417 = vmatpush2.xpose.msra.mxu0 0.0
    %1418 = vmatprep.subr.mxu0 0.0
    %1419 = vmatpush2.xpose.msra.mxu0 0.0
    %1420 = vmatprep.subr.mxu0 0.0
    %1421 = vmatpush2.xpose.msra.mxu0 0.0
    %1422 = vmatprep.subr.mxu0 0.0
    %1423 = vmatpush2.xpose.msra.mxu0 0.0
    %1424 = vmatprep.subr.mxu0 0.0
    %1425 = vmatpush2.xpose.msra.mxu0 0.0
    %1426 = vmatprep.subr.mxu0 0.0
    %1427 = vmatpush2.xpose.msra.mxu0 0.0
    %1428 = vmatprep.subr.mxu0 0.0
    %1429 = vmatpush2.xpose.msra.mxu0 0.0
    %1430 = vmatprep.subr.mxu0 0.0
    %1431 = vmatpush2.xpose.msra.mxu0 0.0
    %1432 = vmatprep.subr.mxu0 0.0
    %1433 = vmatpush2.xpose.msra.mxu0 0.0
    %1434 = vmatprep.subr.mxu0 0.0
    %1435 = vmatpush2.xpose.msra.mxu0 0.0
    %1436 = vmatprep.mubr.f32.mxu0 0.0
    %1437 = vmatmul.mubr.f32.gmra.mxu0 %v1368
    %v1438 = vpop.f32.mrf.mxu0
    %v1439 = vadd.f32 0.0, %v1438
    %v1440 = vpop.f32.mrf.mxu0
    %1441 = vdwg.mxu0
    %1442 = vrot.lane.b32.xlu0 %v969, 116
    %v1443 = vpop.permute.xlu0 %1442
    %1444 = vrot.lane.b32.xlu0 %v969, 100
    %v1445 = vpop.permute.xlu0 %1444
    %v1446 = vsel %vm978, %v1443, 0
    %v1448 = vsel %vm978, %v1445, 0
    %1450 = vmatprep.subr.mxu0 0.0
    %1451 = vmatpush1.xpose.msra.mxu0 0.0
    %1452 = vmatprep.subr.mxu0 0.0
    %1453 = vmatpush1.xpose.msra.mxu0 0.0
    %1454 = vmatprep.subr.mxu0 0.0
    %1455 = vmatpush1.xpose.msra.mxu0 0.0
    %1456 = vmatprep.subr.mxu0 0.0
    %1457 = vmatpush1.xpose.msra.mxu0 0.0
    %1458 = vmatprep.subr.mxu0 0.0
    %1459 = vmatpush1.xpose.msra.mxu0 0.0
    %1460 = vmatprep.subr.mxu0 0.0
    %1461 = vmatpush1.xpose.msra.mxu0 0.0
    %1462 = vmatprep.subr.mxu0 0.0
    %1463 = vmatpush1.xpose.msra.mxu0 0.0
    %1464 = vmatprep.subr.mxu0 0.0
    %1465 = vmatpush1.xpose.msra.mxu0 0.0
    %1466 = vmatprep.subr.mxu0 0.0
    %1467 = vmatpush1.xpose.msra.mxu0 0.0
    %1468 = vmatprep.subr.mxu0 0.0
    %1469 = vmatpush1.xpose.msra.mxu0 0.0
    %1470 = vmatprep.subr.mxu0 0.0
    %1471 = vmatpush1.xpose.msra.mxu0 0.0
    %1472 = vmatprep.subr.mxu0 0.0
    %1473 = vmatpush1.xpose.msra.mxu0 0.0
    %1474 = vmatprep.subr.mxu0 0.0
    %1475 = vmatpush1.xpose.msra.mxu0 0.0
    %1476 = vmatprep.subr.mxu0 0.0
    %1477 = vmatpush1.xpose.msra.mxu0 0.0
    %1478 = vmatprep.subr.mxu0 0.0
    %1479 = vmatpush1.xpose.msra.mxu0 0.0
    %1480 = vmatprep.subr.mxu0 0.0
    %1481 = vmatpush1.xpose.msra.mxu0 %v1448
    %1482 = vmatprep.subr.mxu0 0.0
    %1483 = vmatpush2.xpose.msra.mxu0 0.0
    %1484 = vmatprep.subr.mxu0 0.0
    %1485 = vmatpush2.xpose.msra.mxu0 0.0
    %1486 = vmatprep.subr.mxu0 0.0
    %1487 = vmatpush2.xpose.msra.mxu0 0.0
    %1488 = vmatprep.subr.mxu0 0.0
    %1489 = vmatpush2.xpose.msra.mxu0 0.0
    %1490 = vmatprep.subr.mxu0 0.0
    %1491 = vmatpush2.xpose.msra.mxu0 0.0
    %1492 = vmatprep.subr.mxu0 0.0
    %1493 = vmatpush2.xpose.msra.mxu0 0.0
    %1494 = vmatprep.subr.mxu0 0.0
    %1495 = vmatpush2.xpose.msra.mxu0 0.0
    %1496 = vmatprep.subr.mxu0 0.0
    %1497 = vmatpush2.xpose.msra.mxu0 0.0
    %1498 = vmatprep.subr.mxu0 0.0
    %1499 = vmatpush2.xpose.msra.mxu0 0.0
    %1500 = vmatprep.subr.mxu0 0.0
    %1501 = vmatpush2.xpose.msra.mxu0 0.0
    %1502 = vmatprep.subr.mxu0 0.0
    %1503 = vmatpush2.xpose.msra.mxu0 0.0
    %1504 = vmatprep.subr.mxu0 0.0
    %1505 = vmatpush2.xpose.msra.mxu0 0.0
    %1506 = vmatprep.subr.mxu0 0.0
    %1507 = vmatpush2.xpose.msra.mxu0 0.0
    %1508 = vmatprep.subr.mxu0 0.0
    %1509 = vmatpush2.xpose.msra.mxu0 0.0
    %1510 = vmatprep.subr.mxu0 0.0
    %1511 = vmatpush2.xpose.msra.mxu0 0.0
    %1512 = vmatprep.subr.mxu0 0.0
    %1513 = vmatpush2.xpose.msra.mxu0 0.0
    %1514 = vmatprep.mubr.f32.mxu0 0.0
    %1515 = vmatmul.mubr.f32.gmra.mxu0 %v1446
    %v1516 = vpop.f32.mrf.mxu0
    %v1517 = vadd.f32 0.0, %v1516
    %v1518 = vpop.f32.mrf.mxu0
    %1519 = vdwg.mxu0
    %1520 = vrot.lane.b32.xlu0 %v972, 116
    %v1521 = vpop.permute.xlu0 %1520
    %1522 = vrot.lane.b32.xlu0 %v972, 100
    %v1523 = vpop.permute.xlu0 %1522
    %v1524 = vsel %vm978, %v1521, 0
    %v1526 = vsel %vm978, %v1523, 0
    %1528 = vmatprep.subr.mxu0 0.0
    %1529 = vmatpush1.xpose.msra.mxu0 0.0
    %1530 = vmatprep.subr.mxu0 0.0
    %1531 = vmatpush1.xpose.msra.mxu0 0.0
    %1532 = vmatprep.subr.mxu0 0.0
    %1533 = vmatpush1.xpose.msra.mxu0 0.0
    %1534 = vmatprep.subr.mxu0 0.0
    %1535 = vmatpush1.xpose.msra.mxu0 0.0
    %1536 = vmatprep.subr.mxu0 0.0
    %1537 = vmatpush1.xpose.msra.mxu0 0.0
    %1538 = vmatprep.subr.mxu0 0.0
    %1539 = vmatpush1.xpose.msra.mxu0 0.0
    %1540 = vmatprep.subr.mxu0 0.0
    %1541 = vmatpush1.xpose.msra.mxu0 0.0
    %1542 = vmatprep.subr.mxu0 0.0
    %1543 = vmatpush1.xpose.msra.mxu0 0.0
    %1544 = vmatprep.subr.mxu0 0.0
    %1545 = vmatpush1.xpose.msra.mxu0 0.0
    %1546 = vmatprep.subr.mxu0 0.0
    %1547 = vmatpush1.xpose.msra.mxu0 0.0
    %1548 = vmatprep.subr.mxu0 0.0
    %1549 = vmatpush1.xpose.msra.mxu0 0.0
    %1550 = vmatprep.subr.mxu0 0.0
    %1551 = vmatpush1.xpose.msra.mxu0 0.0
    %1552 = vmatprep.subr.mxu0 0.0
    %1553 = vmatpush1.xpose.msra.mxu0 0.0
    %1554 = vmatprep.subr.mxu0 0.0
    %1555 = vmatpush1.xpose.msra.mxu0 0.0
    %1556 = vmatprep.subr.mxu0 0.0
    %1557 = vmatpush1.xpose.msra.mxu0 0.0
    %1558 = vmatprep.subr.mxu0 0.0
    %1559 = vmatpush1.xpose.msra.mxu0 %v1526
    %1560 = vmatprep.subr.mxu0 0.0
    %1561 = vmatpush2.xpose.msra.mxu0 0.0
    %1562 = vmatprep.subr.mxu0 0.0
    %1563 = vmatpush2.xpose.msra.mxu0 0.0
    %1564 = vmatprep.subr.mxu0 0.0
    %1565 = vmatpush2.xpose.msra.mxu0 0.0
    %1566 = vmatprep.subr.mxu0 0.0
    %1567 = vmatpush2.xpose.msra.mxu0 0.0
    %1568 = vmatprep.subr.mxu0 0.0
    %1569 = vmatpush2.xpose.msra.mxu0 0.0
    %1570 = vmatprep.subr.mxu0 0.0
    %1571 = vmatpush2.xpose.msra.mxu0 0.0
    %1572 = vmatprep.subr.mxu0 0.0
    %1573 = vmatpush2.xpose.msra.mxu0 0.0
    %1574 = vmatprep.subr.mxu0 0.0
    %1575 = vmatpush2.xpose.msra.mxu0 0.0
    %1576 = vmatprep.subr.mxu0 0.0
    %1577 = vmatpush2.xpose.msra.mxu0 0.0
    %1578 = vmatprep.subr.mxu0 0.0
    %1579 = vmatpush2.xpose.msra.mxu0 0.0
    %1580 = vmatprep.subr.mxu0 0.0
    %1581 = vmatpush2.xpose.msra.mxu0 0.0
    %1582 = vmatprep.subr.mxu0 0.0
    %1583 = vmatpush2.xpose.msra.mxu0 0.0
    %1584 = vmatprep.subr.mxu0 0.0
    %1585 = vmatpush2.xpose.msra.mxu0 0.0
    %1586 = vmatprep.subr.mxu0 0.0
    %1587 = vmatpush2.xpose.msra.mxu0 0.0
    %1588 = vmatprep.subr.mxu0 0.0
    %1589 = vmatpush2.xpose.msra.mxu0 0.0
    %1590 = vmatprep.subr.mxu0 0.0
    %1591 = vmatpush2.xpose.msra.mxu0 0.0
    %1592 = vmatprep.mubr.f32.mxu0 0.0
    %1593 = vmatmul.mubr.f32.gmra.mxu0 %v1524
    %v1594 = vpop.f32.mrf.mxu0
    %v1595 = vadd.f32 0.0, %v1594
    %v1596 = vpop.f32.mrf.mxu0
    %1597 = vdwg.mxu0
    %v1598 = vmul.f32 %v1050, 0.5
    %v1599 = vmul.f32 %v1205, 0.5
    %v1600 = vmul.f32 %v1361, 0.5
    %v1601 = vmul.f32 %v1517, 0.5
    %v1602 = vmul.f32 %v1127, 0.5
    %v1603 = vmul.f32 %v1283, 0.5
    %v1604 = vmul.f32 %v1439, 0.5
    %v1605 = vmul.f32 %v1595, 0.5
    %vm1606 = vcmask 64512
    %v1607 = vsel %vm1606, %v1598, -inf
    %1608 = vmax.xlane.f32.xlu0 %v1607
    %v1609 = vpop.xlane.xlu0 %1608
    %v1610 = vsel %vm1606, %v1599, -inf
    %1611 = vmax.xlane.f32.xlu0 %v1610
    %v1612 = vpop.xlane.xlu0 %1611
    %v1613 = vsel %vm1606, %v1600, -inf
    %1614 = vmax.xlane.f32.xlu0 %v1613
    %v1615 = vpop.xlane.xlu0 %1614
    %v1616 = vsel %vm1606, %v1601, -inf
    %1617 = vmax.xlane.f32.xlu0 %v1616
    %v1618 = vpop.xlane.xlu0 %1617
    %v1619 = vsel %vm1606, %v1602, -inf
    %1620 = vmax.xlane.f32.xlu0 %v1619
    %v1621 = vpop.xlane.xlu0 %1620
    %v1622 = vsel %vm1606, %v1603, -inf
    %1623 = vmax.xlane.f32.xlu0 %v1622
    %v1624 = vpop.xlane.xlu0 %1623
    %v1625 = vsel %vm1606, %v1604, -inf
    %1626 = vmax.xlane.f32.xlu0 %v1625
    %v1627 = vpop.xlane.xlu0 %1626
    %v1628 = vsel %vm1606, %v1605, -inf
    %1629 = vmax.xlane.f32.xlu0 %v1628
    %v1630 = vpop.xlane.xlu0 %1629
    %v1631 = vsub.f32 %v1598, %v1609
    %v1632 = vsub.f32 %v1599, %v1612
    %v1633 = vsub.f32 %v1600, %v1615
    %v1634 = vsub.f32 %v1601, %v1618
    %v1635 = vsub.f32 %v1602, %v1621
    %v1636 = vsub.f32 %v1603, %v1624
    %v1637 = vsub.f32 %v1604, %v1627
    %v1638 = vsub.f32 %v1605, %v1630
    %v1639 = vmul.f32 %v1631, 1.442695
    %v1640 = vpow.pop %v1639
    %v1641 = vmul.f32 %v1632, 1.442695
    %v1642 = vpow.pop %v1641
    %v1643 = vmul.f32 %v1633, 1.442695
    %v1644 = vpow.pop %v1643
    %v1645 = vmul.f32 %v1634, 1.442695
    %v1646 = vpow.pop %v1645
    %v1647 = vmul.f32 %v1635, 1.442695
    %v1648 = vpow.pop %v1647
    %v1649 = vmul.f32 %v1636, 1.442695
    %v1650 = vpow.pop %v1649
    %v1651 = vmul.f32 %v1637, 1.442695
    %v1652 = vpow.pop %v1651
    %v1653 = vmul.f32 %v1638, 1.442695
    %v1654 = vpow.pop %v1653
    %v1655 = vsel %vm1606, %v1640, 0.0
    %1656 = vadd.xlane.f32.xlu0 %v1655
    %v1657 = vpop.xlane.xlu0 %1656
    %v1658 = vsel %vm1606, %v1642, 0.0
    %1659 = vadd.xlane.f32.xlu0 %v1658
    %v1660 = vpop.xlane.xlu0 %1659
    %v1661 = vsel %vm1606, %v1644, 0.0
    %1662 = vadd.xlane.f32.xlu0 %v1661
    %v1663 = vpop.xlane.xlu0 %1662
    %v1664 = vsel %vm1606, %v1646, 0.0
    %1665 = vadd.xlane.f32.xlu0 %v1664
    %v1666 = vpop.xlane.xlu0 %1665
    %v1667 = vsel %vm1606, %v1648, 0.0
    %1668 = vadd.xlane.f32.xlu0 %v1667
    %v1669 = vpop.xlane.xlu0 %1668
    %v1670 = vsel %vm1606, %v1650, 0.0
    %1671 = vadd.xlane.f32.xlu0 %v1670
    %v1672 = vpop.xlane.xlu0 %1671
    %v1673 = vsel %vm1606, %v1652, 0.0
    %1674 = vadd.xlane.f32.xlu0 %v1673
    %v1675 = vpop.xlane.xlu0 %1674
    %v1676 = vsel %vm1606, %v1654, 0.0
    %1677 = vadd.xlane.f32.xlu0 %v1676
    %v1678 = vpop.xlane.xlu0 %1677
    %v1679 = vrcp.pop %v1657
    %v1680 = vrcp.pop %v1660
    %v1681 = vrcp.pop %v1663
    %v1682 = vrcp.pop %v1666
    %v1683 = vrcp.pop %v1669
    %v1684 = vrcp.pop %v1672
    %v1685 = vrcp.pop %v1675
    %v1686 = vrcp.pop %v1678
    %v1687 = vmul.f32 %v1640, %v1679
    %v1688 = vmul.f32 %v1642, %v1680
    %v1689 = vmul.f32 %v1644, %v1681
    %v1690 = vmul.f32 %v1646, %v1682
    %v1691 = vmul.f32 %v1648, %v1683
    %v1692 = vmul.f32 %v1650, %v1684
    %v1693 = vmul.f32 %v1652, %v1685
    %v1694 = vmul.f32 %v1654, %v1686
    %1695 = vrot.lane.b32.xlu0 %v969, 96
    %v1696 = vpop.permute.xlu0 %1695
    %v1699 = vsel %vm1606, %v1687, 0
    %1701 = vmatprep.subr.mxu0 0.0
    %1702 = vmatpush1.msra.mxu0 0.0
    %1703 = vmatprep.subr.mxu0 0.0
    %1704 = vmatpush1.msra.mxu0 0.0
    %1705 = vmatprep.subr.mxu0 0.0
    %1706 = vmatpush1.msra.mxu0 0.0
    %1707 = vmatprep.subr.mxu0 0.0
    %1708 = vmatpush1.msra.mxu0 0.0
    %1709 = vmatprep.subr.mxu0 0.0
    %1710 = vmatpush1.msra.mxu0 0.0
    %1711 = vmatprep.subr.mxu0 0.0
    %1712 = vmatpush1.msra.mxu0 0.0
    %1713 = vmatprep.subr.mxu0 0.0
    %1714 = vmatpush1.msra.mxu0 0.0
    %1715 = vmatprep.subr.mxu0 0.0
    %1716 = vmatpush1.msra.mxu0 0.0
    %1717 = vmatprep.subr.mxu0 0.0
    %1718 = vmatpush1.msra.mxu0 0.0
    %1719 = vmatprep.subr.mxu0 0.0
    %1720 = vmatpush1.msra.mxu0 0.0
    %1721 = vmatprep.subr.mxu0 0.0
    %1722 = vmatpush1.msra.mxu0 0.0
    %1723 = vmatprep.subr.mxu0 0.0
    %1724 = vmatpush1.msra.mxu0 0.0
    %1725 = vmatprep.subr.mxu0 0.0
    %1726 = vmatpush1.msra.mxu0 0.0
    %1727 = vmatprep.subr.mxu0 0.0
    %1728 = vmatpush1.msra.mxu0 0.0
    %1729 = vmatprep.subr.mxu0 0.0
    %1730 = vmatpush1.msra.mxu0 0.0
    %1731 = vmatprep.subr.mxu0 0.0
    %1732 = vmatpush1.msra.mxu0 %v1696
    %1733 = vmatprep.subr.mxu0 0.0
    %1734 = vmatpush2.msra.mxu0 0.0
    %1735 = vmatprep.subr.mxu0 0.0
    %1736 = vmatpush2.msra.mxu0 0.0
    %1737 = vmatprep.subr.mxu0 0.0
    %1738 = vmatpush2.msra.mxu0 0.0
    %1739 = vmatprep.subr.mxu0 0.0
    %1740 = vmatpush2.msra.mxu0 0.0
    %1741 = vmatprep.subr.mxu0 0.0
    %1742 = vmatpush2.msra.mxu0 0.0
    %1743 = vmatprep.subr.mxu0 0.0
    %1744 = vmatpush2.msra.mxu0 0.0
    %1745 = vmatprep.subr.mxu0 0.0
    %1746 = vmatpush2.msra.mxu0 0.0
    %1747 = vmatprep.subr.mxu0 0.0
    %1748 = vmatpush2.msra.mxu0 0.0
    %1749 = vmatprep.subr.mxu0 0.0
    %1750 = vmatpush2.msra.mxu0 0.0
    %1751 = vmatprep.subr.mxu0 0.0
    %1752 = vmatpush2.msra.mxu0 0.0
    %1753 = vmatprep.subr.mxu0 0.0
    %1754 = vmatpush2.msra.mxu0 0.0
    %1755 = vmatprep.subr.mxu0 0.0
    %1756 = vmatpush2.msra.mxu0 0.0
    %1757 = vmatprep.subr.mxu0 0.0
    %1758 = vmatpush2.msra.mxu0 0.0
    %1759 = vmatprep.subr.mxu0 0.0
    %1760 = vmatpush2.msra.mxu0 0.0
    %1761 = vmatprep.subr.mxu0 0.0
    %1762 = vmatpush2.msra.mxu0 0.0
    %1763 = vmatprep.subr.mxu0 0.0
    %1764 = vmatpush2.msra.mxu0 0.0
    %1765 = vmatprep.mubr.f32.mxu0 0.0
    %1766 = vmatmul.mubr.f32.gmra.mxu0 %v1699
    %v1767 = vpop.f32.mrf.mxu0
    %v1768 = vadd.f32 0.0, %v1767
    %v1769 = vpop.f32.mrf.mxu0
    %1770 = vdwg.mxu0
    %1771 = vrot.lane.b32.xlu0 %v972, 96
    %v1772 = vpop.permute.xlu0 %1771
    %v1775 = vsel %vm1606, %v1691, 0
    %1777 = vmatprep.subr.mxu0 0.0
    %1778 = vmatpush1.msra.mxu0 0.0
    %1779 = vmatprep.subr.mxu0 0.0
    %1780 = vmatpush1.msra.mxu0 0.0
    %1781 = vmatprep.subr.mxu0 0.0
    %1782 = vmatpush1.msra.mxu0 0.0
    %1783 = vmatprep.subr.mxu0 0.0
    %1784 = vmatpush1.msra.mxu0 0.0
    %1785 = vmatprep.subr.mxu0 0.0
    %1786 = vmatpush1.msra.mxu0 0.0
    %1787 = vmatprep.subr.mxu0 0.0
    %1788 = vmatpush1.msra.mxu0 0.0
    %1789 = vmatprep.subr.mxu0 0.0
    %1790 = vmatpush1.msra.mxu0 0.0
    %1791 = vmatprep.subr.mxu0 0.0
    %1792 = vmatpush1.msra.mxu0 0.0
    %1793 = vmatprep.subr.mxu0 0.0
    %1794 = vmatpush1.msra.mxu0 0.0
    %1795 = vmatprep.subr.mxu0 0.0
    %1796 = vmatpush1.msra.mxu0 0.0
    %1797 = vmatprep.subr.mxu0 0.0
    %1798 = vmatpush1.msra.mxu0 0.0
    %1799 = vmatprep.subr.mxu0 0.0
    %1800 = vmatpush1.msra.mxu0 0.0
    %1801 = vmatprep.subr.mxu0 0.0
    %1802 = vmatpush1.msra.mxu0 0.0
    %1803 = vmatprep.subr.mxu0 0.0
    %1804 = vmatpush1.msra.mxu0 0.0
    %1805 = vmatprep.subr.mxu0 0.0
    %1806 = vmatpush1.msra.mxu0 0.0
    %1807 = vmatprep.subr.mxu0 0.0
    %1808 = vmatpush1.msra.mxu0 %v1772
    %1809 = vmatprep.subr.mxu0 0.0
    %1810 = vmatpush2.msra.mxu0 0.0
    %1811 = vmatprep.subr.mxu0 0.0
    %1812 = vmatpush2.msra.mxu0 0.0
    %1813 = vmatprep.subr.mxu0 0.0
    %1814 = vmatpush2.msra.mxu0 0.0
    %1815 = vmatprep.subr.mxu0 0.0
    %1816 = vmatpush2.msra.mxu0 0.0
    %1817 = vmatprep.subr.mxu0 0.0
    %1818 = vmatpush2.msra.mxu0 0.0
    %1819 = vmatprep.subr.mxu0 0.0
    %1820 = vmatpush2.msra.mxu0 0.0
    %1821 = vmatprep.subr.mxu0 0.0
    %1822 = vmatpush2.msra.mxu0 0.0
    %1823 = vmatprep.subr.mxu0 0.0
    %1824 = vmatpush2.msra.mxu0 0.0
    %1825 = vmatprep.subr.mxu0 0.0
    %1826 = vmatpush2.msra.mxu0 0.0
    %1827 = vmatprep.subr.mxu0 0.0
    %1828 = vmatpush2.msra.mxu0 0.0
    %1829 = vmatprep.subr.mxu0 0.0
    %1830 = vmatpush2.msra.mxu0 0.0
    %1831 = vmatprep.subr.mxu0 0.0
    %1832 = vmatpush2.msra.mxu0 0.0
    %1833 = vmatprep.subr.mxu0 0.0
    %1834 = vmatpush2.msra.mxu0 0.0
    %1835 = vmatprep.subr.mxu0 0.0
    %1836 = vmatpush2.msra.mxu0 0.0
    %1837 = vmatprep.subr.mxu0 0.0
    %1838 = vmatpush2.msra.mxu0 0.0
    %1839 = vmatprep.subr.mxu0 0.0
    %1840 = vmatpush2.msra.mxu0 0.0
    %1841 = vmatprep.mubr.f32.mxu0 0.0
    %1842 = vmatmul.mubr.f32.gmra.mxu0 %v1775
    %v1843 = vpop.f32.mrf.mxu0
    %v1844 = vadd.f32 0.0, %v1843
    %v1845 = vpop.f32.mrf.mxu0
    %1846 = vdwg.mxu0
    %1847 = vrot.lane.b32.xlu0 %v969, 92
    %v1848 = vpop.permute.xlu0 %1847
    %v1851 = vsel %vm1606, %v1688, 0
    %1853 = vmatprep.subr.mxu0 0.0
    %1854 = vmatpush1.msra.mxu0 0.0
    %1855 = vmatprep.subr.mxu0 0.0
    %1856 = vmatpush1.msra.mxu0 0.0
    %1857 = vmatprep.subr.mxu0 0.0
    %1858 = vmatpush1.msra.mxu0 0.0
    %1859 = vmatprep.subr.mxu0 0.0
    %1860 = vmatpush1.msra.mxu0 0.0
    %1861 = vmatprep.subr.mxu0 0.0
    %1862 = vmatpush1.msra.mxu0 0.0
    %1863 = vmatprep.subr.mxu0 0.0
    %1864 = vmatpush1.msra.mxu0 0.0
    %1865 = vmatprep.subr.mxu0 0.0
    %1866 = vmatpush1.msra.mxu0 0.0
    %1867 = vmatprep.subr.mxu0 0.0
    %1868 = vmatpush1.msra.mxu0 0.0
    %1869 = vmatprep.subr.mxu0 0.0
    %1870 = vmatpush1.msra.mxu0 0.0
    %1871 = vmatprep.subr.mxu0 0.0
    %1872 = vmatpush1.msra.mxu0 0.0
    %1873 = vmatprep.subr.mxu0 0.0
    %1874 = vmatpush1.msra.mxu0 0.0
    %1875 = vmatprep.subr.mxu0 0.0
    %1876 = vmatpush1.msra.mxu0 0.0
    %1877 = vmatprep.subr.mxu0 0.0
    %1878 = vmatpush1.msra.mxu0 0.0
    %1879 = vmatprep.subr.mxu0 0.0
    %1880 = vmatpush1.msra.mxu0 0.0
    %1881 = vmatprep.subr.mxu0 0.0
    %1882 = vmatpush1.msra.mxu0 0.0
    %1883 = vmatprep.subr.mxu0 0.0
    %1884 = vmatpush1.msra.mxu0 %v1848
    %1885 = vmatprep.subr.mxu0 0.0
    %1886 = vmatpush2.msra.mxu0 0.0
    %1887 = vmatprep.subr.mxu0 0.0
    %1888 = vmatpush2.msra.mxu0 0.0
    %1889 = vmatprep.subr.mxu0 0.0
    %1890 = vmatpush2.msra.mxu0 0.0
    %1891 = vmatprep.subr.mxu0 0.0
    %1892 = vmatpush2.msra.mxu0 0.0
    %1893 = vmatprep.subr.mxu0 0.0
    %1894 = vmatpush2.msra.mxu0 0.0
    %1895 = vmatprep.subr.mxu0 0.0
    %1896 = vmatpush2.msra.mxu0 0.0
    %1897 = vmatprep.subr.mxu0 0.0
    %1898 = vmatpush2.msra.mxu0 0.0
    %1899 = vmatprep.subr.mxu0 0.0
    %1900 = vmatpush2.msra.mxu0 0.0
    %1901 = vmatprep.subr.mxu0 0.0
    %1902 = vmatpush2.msra.mxu0 0.0
    %1903 = vmatprep.subr.mxu0 0.0
    %1904 = vmatpush2.msra.mxu0 0.0
    %1905 = vmatprep.subr.mxu0 0.0
    %1906 = vmatpush2.msra.mxu0 0.0
    %1907 = vmatprep.subr.mxu0 0.0
    %1908 = vmatpush2.msra.mxu0 0.0
    %1909 = vmatprep.subr.mxu0 0.0
    %1910 = vmatpush2.msra.mxu0 0.0
    %1911 = vmatprep.subr.mxu0 0.0
    %1912 = vmatpush2.msra.mxu0 0.0
    %1913 = vmatprep.subr.mxu0 0.0
    %1914 = vmatpush2.msra.mxu0 0.0
    %1915 = vmatprep.subr.mxu0 0.0
    %1916 = vmatpush2.msra.mxu0 0.0
    %1917 = vmatprep.mubr.f32.mxu0 0.0
    %1918 = vmatmul.mubr.f32.gmra.mxu0 %v1851
    %v1919 = vpop.f32.mrf.mxu0
    %v1920 = vadd.f32 0.0, %v1919
    %v1921 = vpop.f32.mrf.mxu0
    %1922 = vdwg.mxu0
    %1923 = vrot.lane.b32.xlu0 %v972, 92
    %v1924 = vpop.permute.xlu0 %1923
    %v1927 = vsel %vm1606, %v1692, 0
    %1929 = vmatprep.subr.mxu0 0.0
    %1930 = vmatpush1.msra.mxu0 0.0
    %1931 = vmatprep.subr.mxu0 0.0
    %1932 = vmatpush1.msra.mxu0 0.0
    %1933 = vmatprep.subr.mxu0 0.0
    %1934 = vmatpush1.msra.mxu0 0.0
    %1935 = vmatprep.subr.mxu0 0.0
    %1936 = vmatpush1.msra.mxu0 0.0
    %1937 = vmatprep.subr.mxu0 0.0
    %1938 = vmatpush1.msra.mxu0 0.0
    %1939 = vmatprep.subr.mxu0 0.0
    %1940 = vmatpush1.msra.mxu0 0.0
    %1941 = vmatprep.subr.mxu0 0.0
    %1942 = vmatpush1.msra.mxu0 0.0
    %1943 = vmatprep.subr.mxu0 0.0
    %1944 = vmatpush1.msra.mxu0 0.0
    %1945 = vmatprep.subr.mxu0 0.0
    %1946 = vmatpush1.msra.mxu0 0.0
    %1947 = vmatprep.subr.mxu0 0.0
    %1948 = vmatpush1.msra.mxu0 0.0
    %1949 = vmatprep.subr.mxu0 0.0
    %1950 = vmatpush1.msra.mxu0 0.0
    %1951 = vmatprep.subr.mxu0 0.0
    %1952 = vmatpush1.msra.mxu0 0.0
    %1953 = vmatprep.subr.mxu0 0.0
    %1954 = vmatpush1.msra.mxu0 0.0
    %1955 = vmatprep.subr.mxu0 0.0
    %1956 = vmatpush1.msra.mxu0 0.0
    %1957 = vmatprep.subr.mxu0 0.0
    %1958 = vmatpush1.msra.mxu0 0.0
    %1959 = vmatprep.subr.mxu0 0.0
    %1960 = vmatpush1.msra.mxu0 %v1924
    %1961 = vmatprep.subr.mxu0 0.0
    %1962 = vmatpush2.msra.mxu0 0.0
    %1963 = vmatprep.subr.mxu0 0.0
    %1964 = vmatpush2.msra.mxu0 0.0
    %1965 = vmatprep.subr.mxu0 0.0
    %1966 = vmatpush2.msra.mxu0 0.0
    %1967 = vmatprep.subr.mxu0 0.0
    %1968 = vmatpush2.msra.mxu0 0.0
    %1969 = vmatprep.subr.mxu0 0.0
    %1970 = vmatpush2.msra.mxu0 0.0
    %1971 = vmatprep.subr.mxu0 0.0
    %1972 = vmatpush2.msra.mxu0 0.0
    %1973 = vmatprep.subr.mxu0 0.0
    %1974 = vmatpush2.msra.mxu0 0.0
    %1975 = vmatprep.subr.mxu0 0.0
    %1976 = vmatpush2.msra.mxu0 0.0
    %1977 = vmatprep.subr.mxu0 0.0
    %1978 = vmatpush2.msra.mxu0 0.0
    %1979 = vmatprep.subr.mxu0 0.0
    %1980 = vmatpush2.msra.mxu0 0.0
    %1981 = vmatprep.subr.mxu0 0.0
    %1982 = vmatpush2.msra.mxu0 0.0
    %1983 = vmatprep.subr.mxu0 0.0
    %1984 = vmatpush2.msra.mxu0 0.0
    %1985 = vmatprep.subr.mxu0 0.0
    %1986 = vmatpush2.msra.mxu0 0.0
    %1987 = vmatprep.subr.mxu0 0.0
    %1988 = vmatpush2.msra.mxu0 0.0
    %1989 = vmatprep.subr.mxu0 0.0
    %1990 = vmatpush2.msra.mxu0 0.0
    %1991 = vmatprep.subr.mxu0 0.0
    %1992 = vmatpush2.msra.mxu0 0.0
    %1993 = vmatprep.mubr.f32.mxu0 0.0
    %1994 = vmatmul.mubr.f32.gmra.mxu0 %v1927
    %v1995 = vpop.f32.mrf.mxu0
    %v1996 = vadd.f32 0.0, %v1995
    %v1997 = vpop.f32.mrf.mxu0
    %1998 = vdwg.mxu0
    %1999 = vrot.lane.b32.xlu0 %v969, 88
    %v2000 = vpop.permute.xlu0 %1999
    %v2003 = vsel %vm1606, %v1689, 0
    %2005 = vmatprep.subr.mxu0 0.0
    %2006 = vmatpush1.msra.mxu0 0.0
    %2007 = vmatprep.subr.mxu0 0.0
    %2008 = vmatpush1.msra.mxu0 0.0
    %2009 = vmatprep.subr.mxu0 0.0
    %2010 = vmatpush1.msra.mxu0 0.0
    %2011 = vmatprep.subr.mxu0 0.0
    %2012 = vmatpush1.msra.mxu0 0.0
    %2013 = vmatprep.subr.mxu0 0.0
    %2014 = vmatpush1.msra.mxu0 0.0
    %2015 = vmatprep.subr.mxu0 0.0
    %2016 = vmatpush1.msra.mxu0 0.0
    %2017 = vmatprep.subr.mxu0 0.0
    %2018 = vmatpush1.msra.mxu0 0.0
    %2019 = vmatprep.subr.mxu0 0.0
    %2020 = vmatpush1.msra.mxu0 0.0
    %2021 = vmatprep.subr.mxu0 0.0
    %2022 = vmatpush1.msra.mxu0 0.0
    %2023 = vmatprep.subr.mxu0 0.0
    %2024 = vmatpush1.msra.mxu0 0.0
    %2025 = vmatprep.subr.mxu0 0.0
    %2026 = vmatpush1.msra.mxu0 0.0
    %2027 = vmatprep.subr.mxu0 0.0
    %2028 = vmatpush1.msra.mxu0 0.0
    %2029 = vmatprep.subr.mxu0 0.0
    %2030 = vmatpush1.msra.mxu0 0.0
    %2031 = vmatprep.subr.mxu0 0.0
    %2032 = vmatpush1.msra.mxu0 0.0
    %2033 = vmatprep.subr.mxu0 0.0
    %2034 = vmatpush1.msra.mxu0 0.0
    %2035 = vmatprep.subr.mxu0 0.0
    %2036 = vmatpush1.msra.mxu0 %v2000
    %2037 = vmatprep.subr.mxu0 0.0
    %2038 = vmatpush2.msra.mxu0 0.0
    %2039 = vmatprep.subr.mxu0 0.0
    %2040 = vmatpush2.msra.mxu0 0.0
    %2041 = vmatprep.subr.mxu0 0.0
    %2042 = vmatpush2.msra.mxu0 0.0
    %2043 = vmatprep.subr.mxu0 0.0
    %2044 = vmatpush2.msra.mxu0 0.0
    %2045 = vmatprep.subr.mxu0 0.0
    %2046 = vmatpush2.msra.mxu0 0.0
    %2047 = vmatprep.subr.mxu0 0.0
    %2048 = vmatpush2.msra.mxu0 0.0
    %2049 = vmatprep.subr.mxu0 0.0
    %2050 = vmatpush2.msra.mxu0 0.0
    %2051 = vmatprep.subr.mxu0 0.0
    %2052 = vmatpush2.msra.mxu0 0.0
    %2053 = vmatprep.subr.mxu0 0.0
    %2054 = vmatpush2.msra.mxu0 0.0
    %2055 = vmatprep.subr.mxu0 0.0
    %2056 = vmatpush2.msra.mxu0 0.0
    %2057 = vmatprep.subr.mxu0 0.0
    %2058 = vmatpush2.msra.mxu0 0.0
    %2059 = vmatprep.subr.mxu0 0.0
    %2060 = vmatpush2.msra.mxu0 0.0
    %2061 = vmatprep.subr.mxu0 0.0
    %2062 = vmatpush2.msra.mxu0 0.0
    %2063 = vmatprep.subr.mxu0 0.0
    %2064 = vmatpush2.msra.mxu0 0.0
    %2065 = vmatprep.subr.mxu0 0.0
    %2066 = vmatpush2.msra.mxu0 0.0
    %2067 = vmatprep.subr.mxu0 0.0
    %2068 = vmatpush2.msra.mxu0 0.0
    %2069 = vmatprep.mubr.f32.mxu0 0.0
    %2070 = vmatmul.mubr.f32.gmra.mxu0 %v2003
    %v2071 = vpop.f32.mrf.mxu0
    %v2072 = vadd.f32 0.0, %v2071
    %v2073 = vpop.f32.mrf.mxu0
    %2074 = vdwg.mxu0
    %2075 = vrot.lane.b32.xlu0 %v972, 88
    %v2076 = vpop.permute.xlu0 %2075
    %v2079 = vsel %vm1606, %v1693, 0
    %2081 = vmatprep.subr.mxu0 0.0
    %2082 = vmatpush1.msra.mxu0 0.0
    %2083 = vmatprep.subr.mxu0 0.0
    %2084 = vmatpush1.msra.mxu0 0.0
    %2085 = vmatprep.subr.mxu0 0.0
    %2086 = vmatpush1.msra.mxu0 0.0
    %2087 = vmatprep.subr.mxu0 0.0
    %2088 = vmatpush1.msra.mxu0 0.0
    %2089 = vmatprep.subr.mxu0 0.0
    %2090 = vmatpush1.msra.mxu0 0.0
    %2091 = vmatprep.subr.mxu0 0.0
    %2092 = vmatpush1.msra.mxu0 0.0
    %2093 = vmatprep.subr.mxu0 0.0
    %2094 = vmatpush1.msra.mxu0 0.0
    %2095 = vmatprep.subr.mxu0 0.0
    %2096 = vmatpush1.msra.mxu0 0.0
    %2097 = vmatprep.subr.mxu0 0.0
    %2098 = vmatpush1.msra.mxu0 0.0
    %2099 = vmatprep.subr.mxu0 0.0
    %2100 = vmatpush1.msra.mxu0 0.0
    %2101 = vmatprep.subr.mxu0 0.0
    %2102 = vmatpush1.msra.mxu0 0.0
    %2103 = vmatprep.subr.mxu0 0.0
    %2104 = vmatpush1.msra.mxu0 0.0
    %2105 = vmatprep.subr.mxu0 0.0
    %2106 = vmatpush1.msra.mxu0 0.0
    %2107 = vmatprep.subr.mxu0 0.0
    %2108 = vmatpush1.msra.mxu0 0.0
    %2109 = vmatprep.subr.mxu0 0.0
    %2110 = vmatpush1.msra.mxu0 0.0
    %2111 = vmatprep.subr.mxu0 0.0
    %2112 = vmatpush1.msra.mxu0 %v2076
    %2113 = vmatprep.subr.mxu0 0.0
    %2114 = vmatpush2.msra.mxu0 0.0
    %2115 = vmatprep.subr.mxu0 0.0
    %2116 = vmatpush2.msra.mxu0 0.0
    %2117 = vmatprep.subr.mxu0 0.0
    %2118 = vmatpush2.msra.mxu0 0.0
    %2119 = vmatprep.subr.mxu0 0.0
    %2120 = vmatpush2.msra.mxu0 0.0
    %2121 = vmatprep.subr.mxu0 0.0
    %2122 = vmatpush2.msra.mxu0 0.0
    %2123 = vmatprep.subr.mxu0 0.0
    %2124 = vmatpush2.msra.mxu0 0.0
    %2125 = vmatprep.subr.mxu0 0.0
    %2126 = vmatpush2.msra.mxu0 0.0
    %2127 = vmatprep.subr.mxu0 0.0
    %2128 = vmatpush2.msra.mxu0 0.0
    %2129 = vmatprep.subr.mxu0 0.0
    %2130 = vmatpush2.msra.mxu0 0.0
    %2131 = vmatprep.subr.mxu0 0.0
    %2132 = vmatpush2.msra.mxu0 0.0
    %2133 = vmatprep.subr.mxu0 0.0
    %2134 = vmatpush2.msra.mxu0 0.0
    %2135 = vmatprep.subr.mxu0 0.0
    %2136 = vmatpush2.msra.mxu0 0.0
    %2137 = vmatprep.subr.mxu0 0.0
    %2138 = vmatpush2.msra.mxu0 0.0
    %2139 = vmatprep.subr.mxu0 0.0
    %2140 = vmatpush2.msra.mxu0 0.0
    %2141 = vmatprep.subr.mxu0 0.0
    %2142 = vmatpush2.msra.mxu0 0.0
    %2143 = vmatprep.subr.mxu0 0.0
    %2144 = vmatpush2.msra.mxu0 0.0
    %2145 = vmatprep.mubr.f32.mxu0 0.0
    %2146 = vmatmul.mubr.f32.gmra.mxu0 %v2079
    %v2147 = vpop.f32.mrf.mxu0
    %v2148 = vadd.f32 0.0, %v2147
    %v2149 = vpop.f32.mrf.mxu0
    %2150 = vdwg.mxu0
    %2151 = vrot.lane.b32.xlu0 %v969, 84
    %v2152 = vpop.permute.xlu0 %2151
    %v2155 = vsel %vm1606, %v1690, 0
    %2157 = vmatprep.subr.mxu0 0.0
    %2158 = vmatpush1.msra.mxu0 0.0
    %2159 = vmatprep.subr.mxu0 0.0
    %2160 = vmatpush1.msra.mxu0 0.0
    %2161 = vmatprep.subr.mxu0 0.0
    %2162 = vmatpush1.msra.mxu0 0.0
    %2163 = vmatprep.subr.mxu0 0.0
    %2164 = vmatpush1.msra.mxu0 0.0
    %2165 = vmatprep.subr.mxu0 0.0
    %2166 = vmatpush1.msra.mxu0 0.0
    %2167 = vmatprep.subr.mxu0 0.0
    %2168 = vmatpush1.msra.mxu0 0.0
    %2169 = vmatprep.subr.mxu0 0.0
    %2170 = vmatpush1.msra.mxu0 0.0
    %2171 = vmatprep.subr.mxu0 0.0
    %2172 = vmatpush1.msra.mxu0 0.0
    %2173 = vmatprep.subr.mxu0 0.0
    %2174 = vmatpush1.msra.mxu0 0.0
    %2175 = vmatprep.subr.mxu0 0.0
    %2176 = vmatpush1.msra.mxu0 0.0
    %2177 = vmatprep.subr.mxu0 0.0
    %2178 = vmatpush1.msra.mxu0 0.0
    %2179 = vmatprep.subr.mxu0 0.0
    %2180 = vmatpush1.msra.mxu0 0.0
    %2181 = vmatprep.subr.mxu0 0.0
    %2182 = vmatpush1.msra.mxu0 0.0
    %2183 = vmatprep.subr.mxu0 0.0
    %2184 = vmatpush1.msra.mxu0 0.0
    %2185 = vmatprep.subr.mxu0 0.0
    %2186 = vmatpush1.msra.mxu0 0.0
    %2187 = vmatprep.subr.mxu0 0.0
    %2188 = vmatpush1.msra.mxu0 %v2152
    %2189 = vmatprep.subr.mxu0 0.0
    %2190 = vmatpush2.msra.mxu0 0.0
    %2191 = vmatprep.subr.mxu0 0.0
    %2192 = vmatpush2.msra.mxu0 0.0
    %2193 = vmatprep.subr.mxu0 0.0
    %2194 = vmatpush2.msra.mxu0 0.0
    %2195 = vmatprep.subr.mxu0 0.0
    %2196 = vmatpush2.msra.mxu0 0.0
    %2197 = vmatprep.subr.mxu0 0.0
    %2198 = vmatpush2.msra.mxu0 0.0
    %2199 = vmatprep.subr.mxu0 0.0
    %2200 = vmatpush2.msra.mxu0 0.0
    %2201 = vmatprep.subr.mxu0 0.0
    %2202 = vmatpush2.msra.mxu0 0.0
    %2203 = vmatprep.subr.mxu0 0.0
    %2204 = vmatpush2.msra.mxu0 0.0
    %2205 = vmatprep.subr.mxu0 0.0
    %2206 = vmatpush2.msra.mxu0 0.0
    %2207 = vmatprep.subr.mxu0 0.0
    %2208 = vmatpush2.msra.mxu0 0.0
    %2209 = vmatprep.subr.mxu0 0.0
    %2210 = vmatpush2.msra.mxu0 0.0
    %2211 = vmatprep.subr.mxu0 0.0
    %2212 = vmatpush2.msra.mxu0 0.0
    %2213 = vmatprep.subr.mxu0 0.0
    %2214 = vmatpush2.msra.mxu0 0.0
    %2215 = vmatprep.subr.mxu0 0.0
    %2216 = vmatpush2.msra.mxu0 0.0
    %2217 = vmatprep.subr.mxu0 0.0
    %2218 = vmatpush2.msra.mxu0 0.0
    %2219 = vmatprep.subr.mxu0 0.0
    %2220 = vmatpush2.msra.mxu0 0.0
    %2221 = vmatprep.mubr.f32.mxu0 0.0
    %2222 = vmatmul.mubr.f32.gmra.mxu0 %v2155
    %v2223 = vpop.f32.mrf.mxu0
    %v2224 = vadd.f32 0.0, %v2223
    %v2225 = vpop.f32.mrf.mxu0
    %2226 = vdwg.mxu0
    %2227 = vrot.lane.b32.xlu0 %v972, 84
    %v2228 = vpop.permute.xlu0 %2227
    %v2231 = vsel %vm1606, %v1694, 0
    %2233 = vmatprep.subr.mxu0 0.0
    %2234 = vmatpush1.msra.mxu0 0.0
    %2235 = vmatprep.subr.mxu0 0.0
    %2236 = vmatpush1.msra.mxu0 0.0
    %2237 = vmatprep.subr.mxu0 0.0
    %2238 = vmatpush1.msra.mxu0 0.0
    %2239 = vmatprep.subr.mxu0 0.0
    %2240 = vmatpush1.msra.mxu0 0.0
    %2241 = vmatprep.subr.mxu0 0.0
    %2242 = vmatpush1.msra.mxu0 0.0
    %2243 = vmatprep.subr.mxu0 0.0
    %2244 = vmatpush1.msra.mxu0 0.0
    %2245 = vmatprep.subr.mxu0 0.0
    %2246 = vmatpush1.msra.mxu0 0.0
    %2247 = vmatprep.subr.mxu0 0.0
    %2248 = vmatpush1.msra.mxu0 0.0
    %2249 = vmatprep.subr.mxu0 0.0
    %2250 = vmatpush1.msra.mxu0 0.0
    %2251 = vmatprep.subr.mxu0 0.0
    %2252 = vmatpush1.msra.mxu0 0.0
    %2253 = vmatprep.subr.mxu0 0.0
    %2254 = vmatpush1.msra.mxu0 0.0
    %2255 = vmatprep.subr.mxu0 0.0
    %2256 = vmatpush1.msra.mxu0 0.0
    %2257 = vmatprep.subr.mxu0 0.0
    %2258 = vmatpush1.msra.mxu0 0.0
    %2259 = vmatprep.subr.mxu0 0.0
    %2260 = vmatpush1.msra.mxu0 0.0
    %2261 = vmatprep.subr.mxu0 0.0
    %2262 = vmatpush1.msra.mxu0 0.0
    %2263 = vmatprep.subr.mxu0 0.0
    %2264 = vmatpush1.msra.mxu0 %v2228
    %2265 = vmatprep.subr.mxu0 0.0
    %2266 = vmatpush2.msra.mxu0 0.0
    %2267 = vmatprep.subr.mxu0 0.0
    %2268 = vmatpush2.msra.mxu0 0.0
    %2269 = vmatprep.subr.mxu0 0.0
    %2270 = vmatpush2.msra.mxu0 0.0
    %2271 = vmatprep.subr.mxu0 0.0
    %2272 = vmatpush2.msra.mxu0 0.0
    %2273 = vmatprep.subr.mxu0 0.0
    %2274 = vmatpush2.msra.mxu0 0.0
    %2275 = vmatprep.subr.mxu0 0.0
    %2276 = vmatpush2.msra.mxu0 0.0
    %2277 = vmatprep.subr.mxu0 0.0
    %2278 = vmatpush2.msra.mxu0 0.0
    %2279 = vmatprep.subr.mxu0 0.0
    %2280 = vmatpush2.msra.mxu0 0.0
    %2281 = vmatprep.subr.mxu0 0.0
    %2282 = vmatpush2.msra.mxu0 0.0
    %2283 = vmatprep.subr.mxu0 0.0
    %2284 = vmatpush2.msra.mxu0 0.0
    %2285 = vmatprep.subr.mxu0 0.0
    %2286 = vmatpush2.msra.mxu0 0.0
    %2287 = vmatprep.subr.mxu0 0.0
    %2288 = vmatpush2.msra.mxu0 0.0
    %2289 = vmatprep.subr.mxu0 0.0
    %2290 = vmatpush2.msra.mxu0 0.0
    %2291 = vmatprep.subr.mxu0 0.0
    %2292 = vmatpush2.msra.mxu0 0.0
    %2293 = vmatprep.subr.mxu0 0.0
    %2294 = vmatpush2.msra.mxu0 0.0
    %2295 = vmatprep.subr.mxu0 0.0
    %2296 = vmatpush2.msra.mxu0 0.0
    %2297 = vmatprep.mubr.f32.mxu0 0.0
    %2298 = vmatmul.mubr.f32.gmra.mxu0 %v2231
    %v2299 = vpop.f32.mrf.mxu0
    %v2300 = vadd.f32 0.0, %v2299
    %v2301 = vpop.f32.mrf.mxu0
    %2302 = vdwg.mxu0
    %2305 = vrot.lane.b32.xlu0 %v1920, 4
    %v2306 = vpop.permute.xlu0 %2305
    %2307 = vrot.lane.b32.xlu0 %v1996, 4
    %v2308 = vpop.permute.xlu0 %2307
    %2313 = vrot.lane.b32.xlu0 %v2072, 8
    %v2314 = vpop.permute.xlu0 %2313
    %2315 = vrot.lane.b32.xlu0 %v2148, 8
    %v2316 = vpop.permute.xlu0 %2315
    %2321 = vrot.lane.b32.xlu0 %v2224, 12
    %v2322 = vpop.permute.xlu0 %2321
    %2323 = vrot.lane.b32.xlu0 %v2300, 12
    %v2324 = vpop.permute.xlu0 %2323
    %v2327 = vsel %vm978, %v1768, %v2306
    %v2328 = vsel %vm978, %v1844, %v2308
    %v2329 = vsel %vm1606, %v2327, %v2314
    %v2330 = vsel %vm1606, %v2328, %v2316
    %vm2331 = vcmask 97280
    %v2332 = vsel %vm2331, %v2329, %v2322
    %v2333 = vsel %vm2331, %v2330, %v2324
    %v2334 = vpack.c.bf16 %v2333, %v2332
    %v2335 = vlaneseq
    %v2336 = vshrl.u32 %v2335, 7
    %v2337 = vsub.s32 2, %v2336
    %v2338 = vrot.slane %v61, %v2337
    %2339 = vrot.lane.b32.xlu0 %v929, 80
    %v2340 = vpop.permute.xlu0 %2339
    %v2343 = vsel %vm126, %v2334, 0
    %2345 = vmatprep.subr.bf16.mxu0 0
    %2346 = vmatpush1.bf16.msra.mxu0 0
    %2347 = vmatprep.subr.bf16.mxu0 0
    %2348 = vmatpush1.bf16.msra.mxu0 0
    %2349 = vmatprep.subr.bf16.mxu0 0
    %2350 = vmatpush1.bf16.msra.mxu0 0
    %2351 = vmatprep.subr.bf16.mxu0 0
    %2352 = vmatpush1.bf16.msra.mxu0 0
    %2353 = vmatprep.subr.bf16.mxu0 0
    %2354 = vmatpush1.bf16.msra.mxu0 0
    %2355 = vmatprep.subr.bf16.mxu0 0
    %2356 = vmatpush1.bf16.msra.mxu0 0
    %2357 = vmatprep.subr.bf16.mxu0 0
    %2358 = vmatpush1.bf16.msra.mxu0 0
    %2359 = vmatprep.subr.bf16.mxu0 0
    %2360 = vmatpush1.bf16.msra.mxu0 %v2340
    %2361 = vmatprep.subr.bf16.mxu0 0
    %2362 = vmatpush2.bf16.msra.mxu0 0
    %2363 = vmatprep.subr.bf16.mxu0 0
    %2364 = vmatpush2.bf16.msra.mxu0 0
    %2365 = vmatprep.subr.bf16.mxu0 0
    %2366 = vmatpush2.bf16.msra.mxu0 0
    %2367 = vmatprep.subr.bf16.mxu0 0
    %2368 = vmatpush2.bf16.msra.mxu0 0
    %2369 = vmatprep.subr.bf16.mxu0 0
    %2370 = vmatpush2.bf16.msra.mxu0 0
    %2371 = vmatprep.subr.bf16.mxu0 0
    %2372 = vmatpush2.bf16.msra.mxu0 0
    %2373 = vmatprep.subr.bf16.mxu0 0
    %2374 = vmatpush2.bf16.msra.mxu0 0
    %2375 = vmatprep.subr.bf16.mxu0 0
    %2376 = vmatpush2.bf16.msra.mxu0 0
    %2377 = vmatprep.mubr.bf16.mxu0 0
    %2378 = vmatmul.mubr.bf16.gmra.mxu0 %v2343
    %v2379 = vpop.f32.mrf.mxu0
    %v2380 = vadd.f32 %v2338, %v2379
    %v2381 = vpop.f32.mrf.mxu0
    %v2382 = vpop.f32.mrf.mxu0
    %v2383 = vadd.f32 %v2338, %v2382
    %v2384 = vpop.f32.mrf.mxu0
    %2385 = vdwg.mxu0
    %v2386 = vadd.f32 %v918, %v2380
    %v2387 = vadd.f32 %v919, %v2383
    %v2388 = vsel %vm126, %v2386, 0.0
    %2389 = vadd.xlane.f32.xlu0 %v2388
    %v2390 = vpop.xlane.xlu0 %2389
    %v2391 = vsel %vm126, %v2387, 0.0
    %2392 = vadd.xlane.f32.xlu0 %v2391
    %v2393 = vpop.xlane.xlu0 %2392
    %v2394 = vrcp.pop 16.0
    %v2395 = vmul.f32 %v2390, %v2394
    %v2396 = vmul.f32 %v2393, %v2394
    %v2397 = vsub.f32 %v2386, %v2395
    %v2398 = vsub.f32 %v2387, %v2396
    %v2399 = vmul.f32 %v2397, %v2397
    %v2400 = vmul.f32 %v2398, %v2398
    %v2401 = vsel %vm126, %v2399, 0.0
    %2402 = vadd.xlane.f32.xlu0 %v2401
    %v2403 = vpop.xlane.xlu0 %2402
    %v2404 = vsel %vm126, %v2400, 0.0
    %2405 = vadd.xlane.f32.xlu0 %v2404
    %v2406 = vpop.xlane.xlu0 %2405
    %v2407 = vmul.f32 %v2403, %v2394
    %v2408 = vmul.f32 %v2406, %v2394
    %v2409 = vadd.f32 %v2407, 1e-05
    %v2410 = vadd.f32 %v2408, 1e-05
    %v2411 = vrsqrt.pop %v2409
    %v2412 = vrsqrt.pop %v2410
    %v2413 = vmul.f32 %v2397, %v2411
    %v2414 = vmul.f32 %v2398, %v2412
    %v2415 = vlaneseq
    %v2416 = vshrl.u32 %v2415, 7
    %v2417 = vsub.s32 3, %v2416
    %v2418 = vrot.slane %v61, %v2417
    %v2419 = vmul.f32 %v2413, %v2418
    %v2420 = vmul.f32 %v2414, %v2418
    %v2421 = vlaneseq
    %v2422 = vshrl.u32 %v2421, 7
    %v2423 = vsub.s32 4, %v2422
    %v2424 = vrot.slane %v61, %v2423
    %v2425 = vadd.f32 %v2419, %v2424
    %v2426 = vadd.f32 %v2420, %v2424
    %v2427 = vpack.c.bf16 %v2426, %v2425
    %v2428 = vlaneseq
    %v2429 = vshrl.u32 %v2428, 7
    %v2430 = vsub.s32 5, %v2429
    %v2431 = vrot.slane %v61, %v2430
    %2432 = vrot.lane.b32.xlu0 %v929, 64
    %v2433 = vpop.permute.xlu0 %2432
    %v2436 = vsel %vm126, %v2427, 0
    %2438 = vmatprep.subr.bf16.mxu0 0
    %2439 = vmatpush1.bf16.msra.mxu0 0
    %2440 = vmatprep.subr.bf16.mxu0 0
    %2441 = vmatpush1.bf16.msra.mxu0 0
    %2442 = vmatprep.subr.bf16.mxu0 0
    %2443 = vmatpush1.bf16.msra.mxu0 0
    %2444 = vmatprep.subr.bf16.mxu0 0
    %2445 = vmatpush1.bf16.msra.mxu0 0
    %2446 = vmatprep.subr.bf16.mxu0 0
    %2447 = vmatpush1.bf16.msra.mxu0 0
    %2448 = vmatprep.subr.bf16.mxu0 0
    %2449 = vmatpush1.bf16.msra.mxu0 0
    %2450 = vmatprep.subr.bf16.mxu0 0
    %2451 = vmatpush1.bf16.msra.mxu0 0
    %2452 = vmatprep.subr.bf16.mxu0 0
    %2453 = vmatpush1.bf16.msra.mxu0 %v2433
    %2454 = vmatprep.subr.bf16.mxu0 0
    %2455 = vmatpush2.bf16.msra.mxu0 0
    %2456 = vmatprep.subr.bf16.mxu0 0
    %2457 = vmatpush2.bf16.msra.mxu0 0
    %2458 = vmatprep.subr.bf16.mxu0 0
    %2459 = vmatpush2.bf16.msra.mxu0 0
    %2460 = vmatprep.subr.bf16.mxu0 0
    %2461 = vmatpush2.bf16.msra.mxu0 0
    %2462 = vmatprep.subr.bf16.mxu0 0
    %2463 = vmatpush2.bf16.msra.mxu0 0
    %2464 = vmatprep.subr.bf16.mxu0 0
    %2465 = vmatpush2.bf16.msra.mxu0 0
    %2466 = vmatprep.subr.bf16.mxu0 0
    %2467 = vmatpush2.bf16.msra.mxu0 0
    %2468 = vmatprep.subr.bf16.mxu0 0
    %2469 = vmatpush2.bf16.msra.mxu0 0
    %2470 = vmatprep.mubr.bf16.mxu0 0
    %2471 = vmatmul.mubr.bf16.gmra.mxu0 %v2436
    %v2472 = vpop.f32.mrf.mxu0
    %v2473 = vadd.f32 %v2431, %v2472
    %v2474 = vpop.f32.mrf.mxu0
    %v2475 = vpop.f32.mrf.mxu0
    %v2476 = vadd.f32 %v2431, %v2475
    %v2477 = vpop.f32.mrf.mxu0
    %2478 = vdwg.mxu0
    %v2479 = vmax.f32 %v2473, 0.0
    %v2480 = vmax.f32 %v2476, 0.0
    %v2481 = vpack.c.bf16 %v2480, %v2479
    %v2482 = vlaneseq
    %v2483 = vshrl.u32 %v2482, 7
    %v2484 = vsub.s32 6, %v2483
    %v2485 = vrot.slane %v61, %v2484
    %v2486 = vpack.c.b16 %v927, %v927
    %2487 = vrot.lane.b32.xlu0 %v2486, 56
    %v2488 = vpop.permute.xlu0 %2487
    %v2490 = vsel %vm1606, %v2481, 0
    %vm2492 = vcmask 1043456
    %v2494 = vsel %vm2492, %v2488, 0
    %2496 = vmatprep.subr.bf16.mxu0 0
    %2497 = vmatpush1.bf16.msra.mxu0 0
    %2498 = vmatprep.subr.bf16.mxu0 0
    %2499 = vmatpush1.bf16.msra.mxu0 0
    %2500 = vmatprep.subr.bf16.mxu0 0
    %2501 = vmatpush1.bf16.msra.mxu0 0
    %2502 = vmatprep.subr.bf16.mxu0 0
    %2503 = vmatpush1.bf16.msra.mxu0 0
    %2504 = vmatprep.subr.bf16.mxu0 0
    %2505 = vmatpush1.bf16.msra.mxu0 0
    %2506 = vmatprep.subr.bf16.mxu0 0
    %2507 = vmatpush1.bf16.msra.mxu0 0
    %2508 = vmatprep.subr.bf16.mxu0 0
    %2509 = vmatpush1.bf16.msra.mxu0 0
    %2510 = vmatprep.subr.bf16.mxu0 0
    %2511 = vmatpush1.bf16.msra.mxu0 %v2494
    %2512 = vmatprep.subr.bf16.mxu0 0
    %2513 = vmatpush2.bf16.msra.mxu0 0
    %2514 = vmatprep.subr.bf16.mxu0 0
    %2515 = vmatpush2.bf16.msra.mxu0 0
    %2516 = vmatprep.subr.bf16.mxu0 0
    %2517 = vmatpush2.bf16.msra.mxu0 0
    %2518 = vmatprep.subr.bf16.mxu0 0
    %2519 = vmatpush2.bf16.msra.mxu0 0
    %2520 = vmatprep.subr.bf16.mxu0 0
    %2521 = vmatpush2.bf16.msra.mxu0 0
    %2522 = vmatprep.subr.bf16.mxu0 0
    %2523 = vmatpush2.bf16.msra.mxu0 0
    %2524 = vmatprep.subr.bf16.mxu0 0
    %2525 = vmatpush2.bf16.msra.mxu0 0
    %2526 = vmatprep.subr.bf16.mxu0 0
    %2527 = vmatpush2.bf16.msra.mxu0 0
    %2528 = vmatprep.mubr.bf16.mxu0 0
    %2529 = vmatmul.mubr.bf16.gmra.mxu0 %v2490
    %v2530 = vpop.f32.mrf.mxu0
    %v2531 = vadd.f32 %v2485, %v2530
    %v2532 = vpop.f32.mrf.mxu0
    %v2533 = vpop.f32.mrf.mxu0
    %v2534 = vadd.f32 %v2485, %v2533
    %v2535 = vpop.f32.mrf.mxu0
    %2536 = vdwg.mxu0
    %v2537 = vadd.f32 %v2425, %v2531
    %v2538 = vadd.f32 %v2426, %v2534
    %v2539 = vsel %vm126, %v2537, 0.0
    %2540 = vadd.xlane.f32.xlu0 %v2539
    %v2541 = vpop.xlane.xlu0 %2540
    %v2542 = vsel %vm126, %v2538, 0.0
    %2543 = vadd.xlane.f32.xlu0 %v2542
    %v2544 = vpop.xlane.xlu0 %2543
    %v2545 = vmul.f32 %v2541, %v2394
    %v2546 = vmul.f32 %v2544, %v2394
    %v2547 = vsub.f32 %v2537, %v2545
    %v2548 = vsub.f32 %v2538, %v2546
    %v2549 = vmul.f32 %v2547, %v2547
    %v2550 = vmul.f32 %v2548, %v2548
    %v2551 = vsel %vm126, %v2549, 0.0
    %2552 = vadd.xlane.f32.xlu0 %v2551
    %v2553 = vpop.xlane.xlu0 %2552
    %v2554 = vsel %vm126, %v2550, 0.0
    %2555 = vadd.xlane.f32.xlu0 %v2554
    %v2556 = vpop.xlane.xlu0 %2555
    %v2557 = vmul.f32 %v2553, %v2394
    %v2558 = vmul.f32 %v2556, %v2394
    %v2559 = vadd.f32 %v2557, 1e-05
    %v2560 = vadd.f32 %v2558, 1e-05
    %v2561 = vrsqrt.pop %v2559
    %v2562 = vrsqrt.pop %v2560
    %v2563 = vmul.f32 %v2547, %v2561
    %v2564 = vmul.f32 %v2548, %v2562
    %v2565 = vlaneseq
    %v2566 = vshrl.u32 %v2565, 7
    %v2567 = vsub.s32 7, %v2566
    %v2568 = vrot.slane %v61, %v2567
    %v2569 = vmul.f32 %v2563, %v2568
    %v2570 = vmul.f32 %v2564, %v2568
    %v2571 = vlaneseq
    %v2572 = vshrl.u32 %v2571, 7
    %v2573 = vsub.s32 0, %v2572
    %v2574 = vrot.slane %v62, %v2573
    %v2575 = vadd.f32 %v2569, %v2574
    %v2576 = vadd.f32 %v2570, %v2574
    %v2577 = vsel %vm126, %v2575, 0.0
    %v2578 = vrot.slane %v2577, 4
    %v2579 = vadd.f32 %v2577, %v2578
    %v2580 = vrot.slane %v2579, 2
    %v2581 = vadd.f32 %v2579, %v2580
    %v2582 = vrot.slane %v2581, 1
    %v2583 = vadd.f32 %v2581, %v2582
    %v2584 = vsel %vm126, %v2576, 0.0
    %v2585 = vrot.slane %v2584, 4
    %v2586 = vadd.f32 %v2584, %v2585
    %v2587 = vrot.slane %v2586, 2
    %v2588 = vadd.f32 %v2586, %v2587
    %v2589 = vrot.slane %v2588, 1
    %v2590 = vadd.f32 %v2588, %v2589
    %v2591 = vrcp.pop 8.0
    %v2592 = vmul.f32 %v2583, %v2591
    %v2593 = vmul.f32 %v2590, %v2591
    %v2594 = vpack.c.bf16 %v2592, %v2592
    %v2595 = vpack.c.bf16 %v2593, %v2593
    %v2596 = vlaneseq
    %v2597 = vshrl.u32 %v2596, 7
    %v2598 = vsub.s32 1, %v2597
    %v2599 = vrot.slane %v62, %v2598
    %v2602 = vunpack.c.l.b16 %v2594
    %v2603 = vunpack.c.l.b16 %v2595
    %vm2604 = vcmask 1041409
    %v2605 = vsel %vm2604, %v2603, %v2602
    %v2606 = vpack.c.b16 %v2605, %v2605
    %2607 = vrot.lane.b32.xlu0 %v929, 40
    %v2608 = vpop.permute.xlu0 %2607
    %v2611 = vsel %vm126, %v2606, 0
    %2613 = vmatprep.subr.bf16.mxu0 0
    %2614 = vmatpush1.bf16.msra.mxu0 0
    %2615 = vmatprep.subr.bf16.mxu0 0
    %2616 = vmatpush1.bf16.msra.mxu0 0
    %2617 = vmatprep.subr.bf16.mxu0 0
    %2618 = vmatpush1.bf16.msra.mxu0 0
    %2619 = vmatprep.subr.bf16.mxu0 0
    %2620 = vmatpush1.bf16.msra.mxu0 0
    %2621 = vmatprep.subr.bf16.mxu0 0
    %2622 = vmatpush1.bf16.msra.mxu0 0
    %2623 = vmatprep.subr.bf16.mxu0 0
    %2624 = vmatpush1.bf16.msra.mxu0 0
    %2625 = vmatprep.subr.bf16.mxu0 0
    %2626 = vmatpush1.bf16.msra.mxu0 0
    %2627 = vmatprep.subr.bf16.mxu0 0
    %2628 = vmatpush1.bf16.msra.mxu0 %v2608
    %2629 = vmatprep.subr.bf16.mxu0 0
    %2630 = vmatpush2.bf16.msra.mxu0 0
    %2631 = vmatprep.subr.bf16.mxu0 0
    %2632 = vmatpush2.bf16.msra.mxu0 0
    %2633 = vmatprep.subr.bf16.mxu0 0
    %2634 = vmatpush2.bf16.msra.mxu0 0
    %2635 = vmatprep.subr.bf16.mxu0 0
    %2636 = vmatpush2.bf16.msra.mxu0 0
    %2637 = vmatprep.subr.bf16.mxu0 0
    %2638 = vmatpush2.bf16.msra.mxu0 0
    %2639 = vmatprep.subr.bf16.mxu0 0
    %2640 = vmatpush2.bf16.msra.mxu0 0
    %2641 = vmatprep.subr.bf16.mxu0 0
    %2642 = vmatpush2.bf16.msra.mxu0 0
    %2643 = vmatprep.subr.bf16.mxu0 0
    %2644 = vmatpush2.bf16.msra.mxu0 0
    %2645 = vmatprep.mubr.bf16.mxu0 0
    %2646 = vmatmul.mubr.bf16.gmra.mxu0 %v2611
    %v2647 = vpop.f32.mrf.mxu0
    %v2648 = vadd.f32 %v2599, %v2647
    %v2649 = vpop.f32.mrf.mxu0
    %v2650 = vpop.f32.mrf.mxu0
    %v2651 = vpop.f32.mrf.mxu0
    %2652 = vdwg.mxu0
    %v2653 = vxor.u32 %v2648, 2147483648
    %v2654 = vmul.f32 %v2653, 1.442695
    %v2655 = vpow.pop %v2654
    %v2656 = vadd.f32 %v2655, 1.0
    %v2657 = vrcp.pop %v2656
    %v2658 = vmul.f32 1.0, %v2657
    %vm2659 = vcmask 58368
    %2660 = vst.msk [vmem:[#allocation10] sm:$0x3] %vm2659, %v2658
    // Predicated region
    $region26: #{tpu_custom_call.1} parent=1 // pred_check
      _
    $region27: #{tpu_custom_call.1} parent=1 // pred_check_branch
      %2662 = sbr.rel (0) target = $region29
    $region28: #{tpu_custom_call.1} parent=1 // pred_region
      %s2664 = ssub.s32 32, 32
      %2665 = vsyncadd [#allocation6], %s2664
      %s2667 = sshll.u32 [#allocation10], 4
      %s2668 = int_to_ptr.vmem [resolvable:$true] %s2667
      %2670 = dma.vmem_to_hbm [thread:$0]  %s2668, 32, %s3, [#allocation6]
    $region29: #{tpu_custom_call.1} parent=1 // pred_fallthru
      _
    // Predicated region
    $region30: #{tpu_custom_call.1} parent=1 // pred_check
      _
    $region31: #{tpu_custom_call.1} parent=1 // pred_check_branch
      %2672 = sbr.rel (0) target = $region33
    $region32: #{tpu_custom_call.1} parent=1 // pred_region
      %2673 = dma.done [#allocation6], 32
    $region33: #{tpu_custom_call.1} parent=1 // pred_fallthru
      _
    %2674 = vsyncpa [#allocation5], 1
    %2675 = vsyncpa [#allocation8], 1
    %2676 = vsyncpa [#allocation6], 1

</llo_original>
